<compile_context>
chip_gen: v6e
topology: v6e:2x2x1
jax: 0.10.0
libtpu: 0.0.40
codegen_flags: <defaults>
</compile_context>

<pallas_src>
import functools

import jax
import jax.numpy as jnp
from jax.experimental import pallas as pl
from jax.experimental.pallas import tpu as pltpu


_SQRT_HALF = 0.7071067811865476
_NEG_INF = -1e30


# ----------------------------------------------------------------------------
# The fused kernel: one grid step processes `imgs_per_block` images end-to-end
# (patch embed -> all encoder layers -> final LN on CLS -> classifier).
# ----------------------------------------------------------------------------
def _vit_kernel(patch_ref, seqadd_ref, embw_ref, wqkv_ref, wo_ref,
                m1w_ref, m2w_ref, vecd_ref, m1b_ref, flngb_ref,
                clsw_ref, clsb_ref, out_ref, *,
                num_layers, num_heads, imgs_per_block, seq_pad, seq_len, ln_eps):
    f32 = jnp.float32
    bb, S = imgs_per_block, seq_pad
    M = bb * S                                   # flattened (imgs * seq) row axis
    D = embw_ref.shape[-1]
    dk = D // num_heads

    def matmul(a, w):
        return jnp.dot(a, w, preferred_element_type=f32)

    def layernorm(x, g, b):
        mu = jnp.mean(x, axis=-1, keepdims=True)
        var = jnp.mean((x - mu) ** 2, axis=-1, keepdims=True)   # biased (torch)
        return (x - mu) * jax.lax.rsqrt(var + ln_eps) * g + b

    # Patch embedding (Conv2d k=s=P as a matmul).  cls token, positional
    # embedding and the conv bias are pre-folded into the additive seqadd term.
    z = matmul(patch_ref[...], embw_ref[...]) + seqadd_ref[...]          # [M, D]

    # Additive key-padding mask built in-kernel: 0 for valid key positions
    # (< seq_len), -1e30 for padded slots.  Padded keys get exactly 0 weight.
    kidx = jax.lax.broadcasted_iota(jnp.int32, (1, 1, S), 2)
    kmask = jnp.where(kidx < seq_len, 0.0, _NEG_INF).astype(f32)

    for l in range(num_layers):                  # static unroll (num_layers small)
        vec = vecd_ref[l]                        # [6, D]: ln1_g, ln1_b, wo_b,
                                                 #         ln2_g, ln2_b, mlp2_b
        # ---------------- multi-head self-attention (pre-LN) ----------------
        zn = layernorm(z, vec[0:1], vec[1:2])
        # ONE fused QKV projection per layer (scale folded into the Q columns).
        qkv = matmul(zn, wqkv_ref[l]).reshape(bb, S, 3 * D)     # [bb, S, 3D]
        heads = []
        for h in range(num_heads):               # unrolled; scores are per-head
            q = qkv[:, :, h * dk:(h + 1) * dk]                       # [bb, S, dk]
            k = qkv[:, :, D + h * dk:D + (h + 1) * dk]
            v = qkv[:, :, 2 * D + h * dk:2 * D + (h + 1) * dk]
            # Per-image batched scores: no cross-batch FLOPs, no [M,M] mask.
            s = jnp.einsum('bqd,bkd->bqk', q, k, preferred_element_type=f32)
            s = s + kmask
            s = s - jnp.max(s, axis=-1, keepdims=True)
            p = jnp.exp(s)
            p = p / jnp.sum(p, axis=-1, keepdims=True)   # exact (fp32 parity)
            heads.append(jnp.einsum('bqk,bkd->bqd', p, v,
                                    preferred_element_type=f32))     # [bb, S, dk]
        # Head merge: lane-concat + ONE output projection (single K=D matmul).
        hcat = jnp.concatenate(heads, axis=-1).reshape(M, D)
        z = z + (matmul(hcat, wo_ref[l]) + vec[2:3])                 # residual 1

        # ---------------- MLP (pre-LN) ----------------
        zn = layernorm(z, vec[3:4], vec[4:5])
        hmid = matmul(zn, m1w_ref[l]) + m1b_ref[l]
        hmid = 0.5 * hmid * (1.0 + jax.lax.erf(hmid * _SQRT_HALF))   # exact GELU
        z = z + (matmul(hmid, m2w_ref[l]) + vec[5:6])                # residual 2

    # -------- CLS rows via in-kernel 0/1 selection matmul, final LN, head ----
    rows = jax.lax.broadcasted_iota(jnp.int32, (bb, M), 0)
    cols = jax.lax.broadcasted_iota(jnp.int32, (bb, M), 1)
    sel = (cols == rows * S).astype(f32)         # sel[i, m] = (m == i*S)
    cls = matmul(sel, z)                         # [bb, D] — row-exact extraction
    flngb = flngb_ref[...]
    cls = layernorm(cls, flngb[0:1], flngb[1:2])           # final LN (row-wise)
    logits = matmul(cls, clsw_ref[...]) + clsb_ref[...]    # [bb, C_pad] lane-dense
    out_ref[...] = logits[None].astype(out_ref.dtype)      # [1, bb, C_pad]


# ----------------------------------------------------------------------------
# Host-side wrapper
# ----------------------------------------------------------------------------
def _extract_patches(x, patch_size, seq_pad):
    """NCHW image -> [B*seq_pad, C*P*P]; row 0 of each image is the (zero) CLS
    slot, rows 1..num_patches hold the flattened patches, the rest is padding."""
    B, C, H, W = x.shape
    P = patch_size
    hp, wp = H // P, W // P
    n = hp * wp
    xp = (x.reshape(B, C, hp, P, wp, P)
           .transpose(0, 2, 4, 1, 3, 5)
           .reshape(B, n, C * P * P))
    out = jnp.zeros((B, seq_pad, C * P * P), x.dtype)
    out = out.at[:, 1:1 + n, :].set(xp)
    return out.reshape(B * seq_pad, C * P * P)


def _grid_blocks_for_device(batch):
    """2 batch blocks on 2-TensorCore chips (v7x) so the 'parallel' grid axis
    gives each core half the images; 1 fully fused block on 1-TC v5e/v6e
    (an extra grid step would only add fixed per-matmul issue overhead)."""
    try:
        kind = jax.devices()[0].device_kind.lower()
    except Exception:
        return 1
    if "v7" in kind and batch >= 2 and batch % 2 == 0:
        return 2
    return 1


@functools.partial(jax.jit, static_argnames=("patch_size", "num_heads", "seq_len",
                                              "num_classes", "num_blocks"))
def vit_forward(x, packed, *, patch_size, num_heads, seq_len, num_classes,
                num_blocks=1):
    B = x.shape[0]
    assert B % num_blocks == 0
    bb = B // num_blocks                          # images per grid block
    seq_pad, D = packed["seq_add"].shape
    cpp = packed["embed_w"].shape[0]
    num_layers = int(packed["wqkv"].shape[0])
    cpad = packed["cls_w"].shape[-1]

    patches = _extract_patches(x, patch_size, seq_pad)        # [B*seq_pad, cpp]
    seq_add = jnp.tile(packed["seq_add"], (bb, 1))            # [bb*seq_pad, D]

    kernel = functools.partial(
        _vit_kernel, num_layers=num_layers, num_heads=num_heads,
        imgs_per_block=bb, seq_pad=seq_pad, seq_len=seq_len, ln_eps=1e-5)

    def whole(a):   # untiled, VMEM-resident across the whole grid (constant index)
        return pl.BlockSpec(a.shape, lambda g, _n=a.ndim: (0,) * _n)

    weights = (packed["embed_w"], packed["wqkv"], packed["wo"],
               packed["mlp1_w"], packed["mlp2_w"], packed["vec_d"],
               packed["mlp1_b"], packed["fln_gb"], packed["cls_w"],
               packed["cls_b"])

    out = pl.pallas_call(
        kernel,
        out_shape=jax.ShapeDtypeStruct((num_blocks, bb, cpad), jnp.float32),
        grid=(num_blocks,),
        in_specs=[pl.BlockSpec((bb * seq_pad, cpp), lambda g: (g, 0)),
                  whole(seq_add)] + [whole(w) for w in weights],
        out_specs=pl.BlockSpec((1, bb, cpad), lambda g: (g, 0, 0)),
        compiler_params=pltpu.CompilerParams(
            dimension_semantics=("parallel",)),
    )(patches, seq_add, *weights)

    return out.reshape(B, cpad)[:, :num_classes]   # strip the lane padding


# ----------------------------------------------------------------------------
# Parameters: deterministic init (torch-like layout) + packing for the kernel
# ----------------------------------------------------------------------------
def init_params(key, *, num_channels, patch_size, embedding_dim, num_layers,
                mlp_hidden, num_patches, num_classes):
    D, Hm = embedding_dim, mlp_hidden
    keys = iter(jax.random.split(key, 8 + 8 * num_layers))

    def w(k, shape, scale=0.02):
        return jax.random.normal(k, shape, jnp.float32) * scale

    params = {
        "embed_w": w(next(keys), (num_channels * patch_size * patch_size, D)),
        "embed_b": w(next(keys), (1, D)),
        "cls_token": w(next(keys), (1, 1, D)),
        "pos_embed": w(next(keys), (1, num_patches + 1, D)),
        "fln_g": jnp.ones((1, D), jnp.float32),
        "fln_b": jnp.zeros((1, D), jnp.float32),
        "cls_w": w(next(keys), (D, num_classes)),
        "cls_b": jnp.zeros((1, num_classes), jnp.float32),
        "blocks": [],
    }
    for _ in range(num_layers):
        params["blocks"].append({
            "ln1_g": jnp.ones((1, D), jnp.float32),
            "ln1_b": jnp.zeros((1, D), jnp.float32),
            "wq": w(next(keys), (D, D)),
            "wk": w(next(keys), (D, D)),
            "wv": w(next(keys), (D, D)),
            "wh_w": w(next(keys), (D, D)),
            "wh_b": jnp.zeros((1, D), jnp.float32),
            "ln2_g": jnp.ones((1, D), jnp.float32),
            "ln2_b": jnp.zeros((1, D), jnp.float32),
            "mlp1_w": w(next(keys), (D, Hm)),
            "mlp1_b": jnp.zeros((1, Hm), jnp.float32),
            "mlp2_w": w(next(keys), (Hm, D)),
            "mlp2_b": jnp.zeros((1, D), jnp.float32),
        })
    return params


def pack_params(params, *, num_heads, seq_pad):
    """One-time restructuring into the packed layout the fused kernel consumes:
    QKV slab (with scale folded), per-layer bias/LN slab, padded classifier."""
    D = params["pos_embed"].shape[-1]
    S = params["pos_embed"].shape[1]                 # num_patches + 1
    dk = D // num_heads
    scale = dk ** -0.5
    blocks = params["blocks"]
    nc = params["cls_w"].shape[-1]
    cpad = ((nc + 127) // 128) * 128                 # lane-dense classifier

    # Fused QKV weight slab [L, D, 3D]; 1/sqrt(dk) folded into the Q columns.
    wqkv = jnp.stack([jnp.concatenate([b["wq"] * scale, b["wk"], b["wv"]], axis=1)
                      for b in blocks])
    wo = jnp.stack([b["wh_w"] for b in blocks])                          # [L, D, D]
    mlp1_w = jnp.stack([b["mlp1_w"] for b in blocks])                    # [L, D, Hm]
    mlp2_w = jnp.stack([b["mlp2_w"] for b in blocks])                    # [L, Hm, D]
    mlp1_b = jnp.stack([b["mlp1_b"] for b in blocks])                    # [L, 1, Hm]
    # Per-layer [1, D] vectors packed into one slab: fewer kernel operands/DMAs.
    vec_d = jnp.stack([jnp.concatenate([b["ln1_g"], b["ln1_b"], b["wh_b"],
                                        b["ln2_g"], b["ln2_b"], b["mlp2_b"]],
                                       axis=0) for b in blocks])         # [L, 6, D]

    # Fold cls token, positional embedding and the conv (embed) bias into one
    # additive [seq_pad, D] term (row 0 = cls slot, rows 1..S-1 = patch slots).
    seq_add = jnp.zeros((seq_pad, D), jnp.float32)
    seq_add = seq_add.at[0].set(params["cls_token"][0, 0] + params["pos_embed"][0, 0])
    seq_add = seq_add.at[1:S].set(params["pos_embed"][0, 1:] + params["embed_b"][0])

    cls_w = jnp.zeros((D, cpad), jnp.float32).at[:, :nc].set(params["cls_w"])
    cls_b = jnp.zeros((1, cpad), jnp.float32).at[:, :nc].set(params["cls_b"])
    fln_gb = jnp.concatenate([params["fln_g"], params["fln_b"]], axis=0)  # [2, D]

    return {"embed_w": params["embed_w"], "seq_add": seq_add, "wqkv": wqkv,
            "wo": wo, "mlp1_w": mlp1_w, "mlp2_w": mlp2_w, "mlp1_b": mlp1_b,
            "vec_d": vec_d, "fln_gb": fln_gb, "cls_w": cls_w, "cls_b": cls_b}


# ----------------------------------------------------------------------------
if __name__ == "__main__":
    # Small config consistent with the module's constructor (block width ==
    # embedding_dim so the residual adds are valid):
    batch = 2
    img_size, num_channels = 16, 4
    patch_size = 8
    embedding_dim = 32
    num_layers = 2
    num_heads = 4
    mlp_hidden = 64
    num_classes = 10
    num_patches = (img_size // patch_size) ** 2      # 4
    seq_len = num_patches + 1                        # 5 (cls + patches)
    seq_pad = max(8, ((seq_len + 7) // 8) * 8)       # pad to sublane multiple

    key = jax.random.PRNGKey(0)
    kx, kp = jax.random.split(key)
    x = jax.random.normal(kx, (batch, num_channels, img_size, img_size),
                          jnp.float32)
    params = init_params(
        kp, num_channels=num_channels, patch_size=patch_size,
        embedding_dim=embedding_dim, num_layers=num_layers,
        mlp_hidden=mlp_hidden, num_patches=num_patches,
        num_classes=num_classes)
    packed = pack_params(params, num_heads=num_heads, seq_pad=seq_pad)

    num_blocks = _grid_blocks_for_device(batch)      # 2 on v7x, else 1

    # TODO(synk): dropout layers are identity (drop_rate=0.0 / eval mode);
    # stochastic dropout is not implemented.
    logits = vit_forward(x, packed, patch_size=patch_size, num_heads=num_heads,
                         seq_len=seq_len, num_classes=num_classes,
                         num_blocks=num_blocks)
    logits = jax.block_until_ready(logits)
    assert logits.shape == (batch, num_classes)
    assert bool(jnp.all(jnp.isfinite(logits)))
    print("KERNEL_OK")
</pallas_src>

<mosaic_0001>
module attributes {stable_mosaic.version = 11 : i64} {
  func.func @_vit_kernel(%arg0: i32, %arg1: memref<16x256xf32, #tpu.memory_space<vmem>>, %arg2: memref<16x32xf32, #tpu.memory_space<vmem>>, %arg3: memref<256x32xf32, #tpu.memory_space<vmem>>, %arg4: memref<2x32x96xf32, #tpu.memory_space<vmem>>, %arg5: memref<2x32x32xf32, #tpu.memory_space<vmem>>, %arg6: memref<2x32x64xf32, #tpu.memory_space<vmem>>, %arg7: memref<2x64x32xf32, #tpu.memory_space<vmem>>, %arg8: memref<2x6x32xf32, #tpu.memory_space<vmem>>, %arg9: memref<2x1x64xf32, #tpu.memory_space<vmem>>, %arg10: memref<2x32xf32, #tpu.memory_space<vmem>>, %arg11: memref<32x128xf32, #tpu.memory_space<vmem>>, %arg12: memref<1x128xf32, #tpu.memory_space<vmem>>, %arg13: memref<1x2x128xf32, #tpu.memory_space<vmem>>) attributes {dimension_semantics = [#tpu.dimension_semantics<parallel>], iteration_bounds = array<i64: 1>, scalar_prefetch = 0 : i64, scratch_operands = 0 : i64, tpu.core_type = #tpu.core_type<tc>, window_params = [{transform_indices = @transform_0, window_bounds = array<i64: 16, 256>}, {pipeline_mode = #tpu.pipeline_mode<synchronous>, transform_indices = @transform_1, window_bounds = array<i64: 16, 32>}, {pipeline_mode = #tpu.pipeline_mode<synchronous>, transform_indices = @transform_2, window_bounds = array<i64: 256, 32>}, {pipeline_mode = #tpu.pipeline_mode<synchronous>, transform_indices = @transform_3, window_bounds = array<i64: 2, 32, 96>}, {pipeline_mode = #tpu.pipeline_mode<synchronous>, transform_indices = @transform_4, window_bounds = array<i64: 2, 32, 32>}, {pipeline_mode = #tpu.pipeline_mode<synchronous>, transform_indices = @transform_5, window_bounds = array<i64: 2, 32, 64>}, {pipeline_mode = #tpu.pipeline_mode<synchronous>, transform_indices = @transform_6, window_bounds = array<i64: 2, 64, 32>}, {pipeline_mode = #tpu.pipeline_mode<synchronous>, transform_indices = @transform_7, window_bounds = array<i64: 2, 6, 32>}, {pipeline_mode = #tpu.pipeline_mode<synchronous>, transform_indices = @transform_8, window_bounds = array<i64: 2, 1, 64>}, {pipeline_mode = #tpu.pipeline_mode<synchronous>, transform_indices = @transform_9, window_bounds = array<i64: 2, 32>}, {pipeline_mode = #tpu.pipeline_mode<synchronous>, transform_indices = @transform_10, window_bounds = array<i64: 32, 128>}, {pipeline_mode = #tpu.pipeline_mode<synchronous>, transform_indices = @transform_11, window_bounds = array<i64: 1, 128>}, {transform_indices = @transform_12, window_bounds = array<i64: 1, 2, 128>}]} {
    %c0 = arith.constant 0 : index
    %c0_0 = arith.constant 0 : index
    %0 = vector.load %arg1[%c0, %c0_0] : memref<16x256xf32, #tpu.memory_space<vmem>>, vector<16x256xf32>
    %c0_1 = arith.constant 0 : index
    %c0_2 = arith.constant 0 : index
    %1 = vector.load %arg3[%c0_1, %c0_2] : memref<256x32xf32, #tpu.memory_space<vmem>>, vector<256x32xf32>
    %cst = arith.constant dense<0.000000e+00> : vector<16x32xf32>
    %2 = tpu.matmul %0, %1, %cst {dimension_numbers = #tpu.dot_dimension_numbers<[1], [0], [0], [1], [0, 0, 1, 1], [], []>} : vector<16x256xf32>, vector<256x32xf32>, vector<16x32xf32> -> vector<16x32xf32>
    %c0_3 = arith.constant 0 : index
    %c0_4 = arith.constant 0 : index
    %3 = vector.load %arg2[%c0_3, %c0_4] : memref<16x32xf32, #tpu.memory_space<vmem>>, vector<16x32xf32>
    %4 = arith.addf %2, %3 : vector<16x32xf32>
    %5 = tpu.iota {dimensions = array<i32: 2>} : vector<1x1x8xi32>
    %c5_i32 = arith.constant 5 : i32
    %6 = vector.broadcast %c5_i32 : i32 to vector<1x1x8xi32>
    %7 = arith.cmpi slt, %5, %6 : vector<1x1x8xi32>
    %cst_5 = arith.constant 0.000000e+00 : f32
    %cst_6 = arith.constant -1.000000e+30 : f32
    %8 = vector.broadcast %cst_5 : f32 to vector<1x1x8xf32>
    %9 = vector.broadcast %cst_6 : f32 to vector<1x1x8xf32>
    %10 = arith.select %7, %8, %9 : vector<1x1x8xi1>, vector<1x1x8xf32>
    %c0_7 = arith.constant 0 : index
    %c0_8 = arith.constant 0 : index
    %c0_9 = arith.constant 0 : index
    %11 = vector.load %arg8[%c0_7, %c0_8, %c0_9] : memref<2x6x32xf32, #tpu.memory_space<vmem>>, vector<1x6x32xf32>
    %12 = vector.shape_cast %11 : vector<1x6x32xf32> to vector<6x32xf32>
    %13 = vector.extract_strided_slice %12 {offsets = [0, 0], sizes = [1, 32], strides = [1, 1]} : vector<6x32xf32> to vector<1x32xf32>
    %14 = vector.extract_strided_slice %12 {offsets = [1, 0], sizes = [1, 32], strides = [1, 1]} : vector<6x32xf32> to vector<1x32xf32>
    %cst_10 = arith.constant dense<0.000000e+00> : vector<16xf32>
    %15 = vector.multi_reduction <add>, %4, %cst_10 [1] : vector<16x32xf32> to vector<16xf32>
    %16 = vector.shape_cast %15 : vector<16xf32> to vector<16x1xf32>
    %cst_11 = arith.constant 3.200000e+01 : f32
    %17 = vector.broadcast %cst_11 : f32 to vector<16x1xf32>
    %18 = arith.divf %16, %17 : vector<16x1xf32>
    %19 = vector.broadcast %18 : vector<16x1xf32> to vector<16x32xf32>
    %20 = arith.subf %4, %19 : vector<16x32xf32>
    %21 = arith.mulf %20, %20 : vector<16x32xf32>
    %cst_12 = arith.constant dense<0.000000e+00> : vector<16xf32>
    %22 = vector.multi_reduction <add>, %21, %cst_12 [1] : vector<16x32xf32> to vector<16xf32>
    %23 = vector.shape_cast %22 : vector<16xf32> to vector<16x1xf32>
    %cst_13 = arith.constant 3.200000e+01 : f32
    %24 = vector.broadcast %cst_13 : f32 to vector<16x1xf32>
    %25 = arith.divf %23, %24 : vector<16x1xf32>
    %26 = vector.broadcast %18 : vector<16x1xf32> to vector<16x32xf32>
    %27 = arith.subf %4, %26 : vector<16x32xf32>
    %cst_14 = arith.constant 9.99999974E-6 : f32
    %28 = vector.broadcast %cst_14 : f32 to vector<16x1xf32>
    %29 = arith.addf %25, %28 : vector<16x1xf32>
    %30 = math.rsqrt %29 : vector<16x1xf32>
    %31 = vector.broadcast %30 : vector<16x1xf32> to vector<16x32xf32>
    %32 = arith.mulf %27, %31 : vector<16x32xf32>
    %33 = vector.broadcast %13 : vector<1x32xf32> to vector<16x32xf32>
    %34 = arith.mulf %32, %33 : vector<16x32xf32>
    %35 = vector.broadcast %14 : vector<1x32xf32> to vector<16x32xf32>
    %36 = arith.addf %34, %35 : vector<16x32xf32>
    %c0_15 = arith.constant 0 : index
    %c0_16 = arith.constant 0 : index
    %c0_17 = arith.constant 0 : index
    %37 = vector.load %arg4[%c0_15, %c0_16, %c0_17] : memref<2x32x96xf32, #tpu.memory_space<vmem>>, vector<1x32x96xf32>
    %38 = vector.shape_cast %37 : vector<1x32x96xf32> to vector<32x96xf32>
    %cst_18 = arith.constant dense<0.000000e+00> : vector<16x96xf32>
    %39 = tpu.matmul %36, %38, %cst_18 {dimension_numbers = #tpu.dot_dimension_numbers<[1], [0], [0], [1], [0, 0, 1, 1], [], []>} : vector<16x32xf32>, vector<32x96xf32>, vector<16x96xf32> -> vector<16x96xf32>
    %40 = vector.shape_cast %39 : vector<16x96xf32> to vector<2x8x96xf32>
    %41 = vector.extract_strided_slice %40 {offsets = [0, 0, 0], sizes = [2, 8, 8], strides = [1, 1, 1]} : vector<2x8x96xf32> to vector<2x8x8xf32>
    %42 = vector.extract_strided_slice %40 {offsets = [0, 0, 32], sizes = [2, 8, 8], strides = [1, 1, 1]} : vector<2x8x96xf32> to vector<2x8x8xf32>
    %43 = vector.extract_strided_slice %40 {offsets = [0, 0, 64], sizes = [2, 8, 8], strides = [1, 1, 1]} : vector<2x8x96xf32> to vector<2x8x8xf32>
    "tpu.trace_start"() <{level = 10 : i32, message = "bqd,bkd->bqk"}> : () -> ()
    %cst_19 = arith.constant dense<0.000000e+00> : vector<2x8x8xf32>
    %44 = tpu.matmul %41, %42, %cst_19 {dimension_numbers = #tpu.dot_dimension_numbers<[2], [2], [1], [1], [0, 0, 0, 1, 1, 1], [0], [0]>} : vector<2x8x8xf32>, vector<2x8x8xf32>, vector<2x8x8xf32> -> vector<2x8x8xf32>
    "tpu.trace_stop"() : () -> ()
    %45 = vector.broadcast %10 : vector<1x1x8xf32> to vector<2x8x8xf32>
    %46 = arith.addf %44, %45 : vector<2x8x8xf32>
    %cst_20 = arith.constant dense<0xFF800000> : vector<2x8xf32>
    %47 = vector.multi_reduction <maximumf>, %46, %cst_20 [2] : vector<2x8x8xf32> to vector<2x8xf32>
    %48 = vector.shape_cast %47 : vector<2x8xf32> to vector<2x8x1xf32>
    %49 = vector.broadcast %48 : vector<2x8x1xf32> to vector<2x8x8xf32>
    %50 = arith.subf %46, %49 : vector<2x8x8xf32>
    %51 = math.exp %50 : vector<2x8x8xf32>
    %cst_21 = arith.constant dense<0.000000e+00> : vector<2x8xf32>
    %52 = vector.multi_reduction <add>, %51, %cst_21 [2] : vector<2x8x8xf32> to vector<2x8xf32>
    %53 = vector.shape_cast %52 : vector<2x8xf32> to vector<2x8x1xf32>
    %54 = vector.broadcast %53 : vector<2x8x1xf32> to vector<2x8x8xf32>
    %55 = arith.divf %51, %54 : vector<2x8x8xf32>
    "tpu.trace_start"() <{level = 10 : i32, message = "bqk,bkd->bqd"}> : () -> ()
    %cst_22 = arith.constant dense<0.000000e+00> : vector<2x8x8xf32>
    %56 = tpu.matmul %55, %43, %cst_22 {dimension_numbers = #tpu.dot_dimension_numbers<[2], [1], [1], [2], [0, 0, 0, 1, 1, 2], [0], [0]>} : vector<2x8x8xf32>, vector<2x8x8xf32>, vector<2x8x8xf32> -> vector<2x8x8xf32>
    "tpu.trace_stop"() : () -> ()
    %57 = vector.extract_strided_slice %40 {offsets = [0, 0, 8], sizes = [2, 8, 8], strides = [1, 1, 1]} : vector<2x8x96xf32> to vector<2x8x8xf32>
    %58 = vector.extract_strided_slice %40 {offsets = [0, 0, 40], sizes = [2, 8, 8], strides = [1, 1, 1]} : vector<2x8x96xf32> to vector<2x8x8xf32>
    %59 = vector.extract_strided_slice %40 {offsets = [0, 0, 72], sizes = [2, 8, 8], strides = [1, 1, 1]} : vector<2x8x96xf32> to vector<2x8x8xf32>
    "tpu.trace_start"() <{level = 10 : i32, message = "bqd,bkd->bqk"}> : () -> ()
    %cst_23 = arith.constant dense<0.000000e+00> : vector<2x8x8xf32>
    %60 = tpu.matmul %57, %58, %cst_23 {dimension_numbers = #tpu.dot_dimension_numbers<[2], [2], [1], [1], [0, 0, 0, 1, 1, 1], [0], [0]>} : vector<2x8x8xf32>, vector<2x8x8xf32>, vector<2x8x8xf32> -> vector<2x8x8xf32>
    "tpu.trace_stop"() : () -> ()
    %61 = vector.broadcast %10 : vector<1x1x8xf32> to vector<2x8x8xf32>
    %62 = arith.addf %60, %61 : vector<2x8x8xf32>
    %cst_24 = arith.constant dense<0xFF800000> : vector<2x8xf32>
    %63 = vector.multi_reduction <maximumf>, %62, %cst_24 [2] : vector<2x8x8xf32> to vector<2x8xf32>
    %64 = vector.shape_cast %63 : vector<2x8xf32> to vector<2x8x1xf32>
    %65 = vector.broadcast %64 : vector<2x8x1xf32> to vector<2x8x8xf32>
    %66 = arith.subf %62, %65 : vector<2x8x8xf32>
    %67 = math.exp %66 : vector<2x8x8xf32>
    %cst_25 = arith.constant dense<0.000000e+00> : vector<2x8xf32>
    %68 = vector.multi_reduction <add>, %67, %cst_25 [2] : vector<2x8x8xf32> to vector<2x8xf32>
    %69 = vector.shape_cast %68 : vector<2x8xf32> to vector<2x8x1xf32>
    %70 = vector.broadcast %69 : vector<2x8x1xf32> to vector<2x8x8xf32>
    %71 = arith.divf %67, %70 : vector<2x8x8xf32>
    "tpu.trace_start"() <{level = 10 : i32, message = "bqk,bkd->bqd"}> : () -> ()
    %cst_26 = arith.constant dense<0.000000e+00> : vector<2x8x8xf32>
    %72 = tpu.matmul %71, %59, %cst_26 {dimension_numbers = #tpu.dot_dimension_numbers<[2], [1], [1], [2], [0, 0, 0, 1, 1, 2], [0], [0]>} : vector<2x8x8xf32>, vector<2x8x8xf32>, vector<2x8x8xf32> -> vector<2x8x8xf32>
    "tpu.trace_stop"() : () -> ()
    %73 = vector.extract_strided_slice %40 {offsets = [0, 0, 16], sizes = [2, 8, 8], strides = [1, 1, 1]} : vector<2x8x96xf32> to vector<2x8x8xf32>
    %74 = vector.extract_strided_slice %40 {offsets = [0, 0, 48], sizes = [2, 8, 8], strides = [1, 1, 1]} : vector<2x8x96xf32> to vector<2x8x8xf32>
    %75 = vector.extract_strided_slice %40 {offsets = [0, 0, 80], sizes = [2, 8, 8], strides = [1, 1, 1]} : vector<2x8x96xf32> to vector<2x8x8xf32>
    "tpu.trace_start"() <{level = 10 : i32, message = "bqd,bkd->bqk"}> : () -> ()
    %cst_27 = arith.constant dense<0.000000e+00> : vector<2x8x8xf32>
    %76 = tpu.matmul %73, %74, %cst_27 {dimension_numbers = #tpu.dot_dimension_numbers<[2], [2], [1], [1], [0, 0, 0, 1, 1, 1], [0], [0]>} : vector<2x8x8xf32>, vector<2x8x8xf32>, vector<2x8x8xf32> -> vector<2x8x8xf32>
    "tpu.trace_stop"() : () -> ()
    %77 = vector.broadcast %10 : vector<1x1x8xf32> to vector<2x8x8xf32>
    %78 = arith.addf %76, %77 : vector<2x8x8xf32>
    %cst_28 = arith.constant dense<0xFF800000> : vector<2x8xf32>
    %79 = vector.multi_reduction <maximumf>, %78, %cst_28 [2] : vector<2x8x8xf32> to vector<2x8xf32>
    %80 = vector.shape_cast %79 : vector<2x8xf32> to vector<2x8x1xf32>
    %81 = vector.broadcast %80 : vector<2x8x1xf32> to vector<2x8x8xf32>
    %82 = arith.subf %78, %81 : vector<2x8x8xf32>
    %83 = math.exp %82 : vector<2x8x8xf32>
    %cst_29 = arith.constant dense<0.000000e+00> : vector<2x8xf32>
    %84 = vector.multi_reduction <add>, %83, %cst_29 [2] : vector<2x8x8xf32> to vector<2x8xf32>
    %85 = vector.shape_cast %84 : vector<2x8xf32> to vector<2x8x1xf32>
    %86 = vector.broadcast %85 : vector<2x8x1xf32> to vector<2x8x8xf32>
    %87 = arith.divf %83, %86 : vector<2x8x8xf32>
    "tpu.trace_start"() <{level = 10 : i32, message = "bqk,bkd->bqd"}> : () -> ()
    %cst_30 = arith.constant dense<0.000000e+00> : vector<2x8x8xf32>
    %88 = tpu.matmul %87, %75, %cst_30 {dimension_numbers = #tpu.dot_dimension_numbers<[2], [1], [1], [2], [0, 0, 0, 1, 1, 2], [0], [0]>} : vector<2x8x8xf32>, vector<2x8x8xf32>, vector<2x8x8xf32> -> vector<2x8x8xf32>
    "tpu.trace_stop"() : () -> ()
    %89 = vector.extract_strided_slice %40 {offsets = [0, 0, 24], sizes = [2, 8, 8], strides = [1, 1, 1]} : vector<2x8x96xf32> to vector<2x8x8xf32>
    %90 = vector.extract_strided_slice %40 {offsets = [0, 0, 56], sizes = [2, 8, 8], strides = [1, 1, 1]} : vector<2x8x96xf32> to vector<2x8x8xf32>
    %91 = vector.extract_strided_slice %40 {offsets = [0, 0, 88], sizes = [2, 8, 8], strides = [1, 1, 1]} : vector<2x8x96xf32> to vector<2x8x8xf32>
    "tpu.trace_start"() <{level = 10 : i32, message = "bqd,bkd->bqk"}> : () -> ()
    %cst_31 = arith.constant dense<0.000000e+00> : vector<2x8x8xf32>
    %92 = tpu.matmul %89, %90, %cst_31 {dimension_numbers = #tpu.dot_dimension_numbers<[2], [2], [1], [1], [0, 0, 0, 1, 1, 1], [0], [0]>} : vector<2x8x8xf32>, vector<2x8x8xf32>, vector<2x8x8xf32> -> vector<2x8x8xf32>
    "tpu.trace_stop"() : () -> ()
    %93 = vector.broadcast %10 : vector<1x1x8xf32> to vector<2x8x8xf32>
    %94 = arith.addf %92, %93 : vector<2x8x8xf32>
    %cst_32 = arith.constant dense<0xFF800000> : vector<2x8xf32>
    %95 = vector.multi_reduction <maximumf>, %94, %cst_32 [2] : vector<2x8x8xf32> to vector<2x8xf32>
    %96 = vector.shape_cast %95 : vector<2x8xf32> to vector<2x8x1xf32>
    %97 = vector.broadcast %96 : vector<2x8x1xf32> to vector<2x8x8xf32>
    %98 = arith.subf %94, %97 : vector<2x8x8xf32>
    %99 = math.exp %98 : vector<2x8x8xf32>
    %cst_33 = arith.constant dense<0.000000e+00> : vector<2x8xf32>
    %100 = vector.multi_reduction <add>, %99, %cst_33 [2] : vector<2x8x8xf32> to vector<2x8xf32>
    %101 = vector.shape_cast %100 : vector<2x8xf32> to vector<2x8x1xf32>
    %102 = vector.broadcast %101 : vector<2x8x1xf32> to vector<2x8x8xf32>
    %103 = arith.divf %99, %102 : vector<2x8x8xf32>
    "tpu.trace_start"() <{level = 10 : i32, message = "bqk,bkd->bqd"}> : () -> ()
    %cst_34 = arith.constant dense<0.000000e+00> : vector<2x8x8xf32>
    %104 = tpu.matmul %103, %91, %cst_34 {dimension_numbers = #tpu.dot_dimension_numbers<[2], [1], [1], [2], [0, 0, 0, 1, 1, 2], [0], [0]>} : vector<2x8x8xf32>, vector<2x8x8xf32>, vector<2x8x8xf32> -> vector<2x8x8xf32>
    "tpu.trace_stop"() : () -> ()
    %105 = tpu.concatenate %56, %72, %88, %104 in 2 : vector<2x8x8xf32>, vector<2x8x8xf32>, vector<2x8x8xf32>, vector<2x8x8xf32> -> vector<2x8x32xf32>
    %106 = vector.shape_cast %105 : vector<2x8x32xf32> to vector<16x32xf32>
    %c0_35 = arith.constant 0 : index
    %c0_36 = arith.constant 0 : index
    %c0_37 = arith.constant 0 : index
    %107 = vector.load %arg5[%c0_35, %c0_36, %c0_37] : memref<2x32x32xf32, #tpu.memory_space<vmem>>, vector<1x32x32xf32>
    %108 = vector.shape_cast %107 : vector<1x32x32xf32> to vector<32x32xf32>
    %cst_38 = arith.constant dense<0.000000e+00> : vector<16x32xf32>
    %109 = tpu.matmul %106, %108, %cst_38 {dimension_numbers = #tpu.dot_dimension_numbers<[1], [0], [0], [1], [0, 0, 1, 1], [], []>} : vector<16x32xf32>, vector<32x32xf32>, vector<16x32xf32> -> vector<16x32xf32>
    %110 = vector.extract_strided_slice %12 {offsets = [2, 0], sizes = [1, 32], strides = [1, 1]} : vector<6x32xf32> to vector<1x32xf32>
    %111 = vector.broadcast %110 : vector<1x32xf32> to vector<16x32xf32>
    %112 = arith.addf %109, %111 : vector<16x32xf32>
    %113 = arith.addf %4, %112 : vector<16x32xf32>
    %114 = vector.extract_strided_slice %12 {offsets = [3, 0], sizes = [1, 32], strides = [1, 1]} : vector<6x32xf32> to vector<1x32xf32>
    %115 = vector.extract_strided_slice %12 {offsets = [4, 0], sizes = [1, 32], strides = [1, 1]} : vector<6x32xf32> to vector<1x32xf32>
    %cst_39 = arith.constant dense<0.000000e+00> : vector<16xf32>
    %116 = vector.multi_reduction <add>, %113, %cst_39 [1] : vector<16x32xf32> to vector<16xf32>
    %117 = vector.shape_cast %116 : vector<16xf32> to vector<16x1xf32>
    %cst_40 = arith.constant 3.200000e+01 : f32
    %118 = vector.broadcast %cst_40 : f32 to vector<16x1xf32>
    %119 = arith.divf %117, %118 : vector<16x1xf32>
    %120 = vector.broadcast %119 : vector<16x1xf32> to vector<16x32xf32>
    %121 = arith.subf %113, %120 : vector<16x32xf32>
    %122 = arith.mulf %121, %121 : vector<16x32xf32>
    %cst_41 = arith.constant dense<0.000000e+00> : vector<16xf32>
    %123 = vector.multi_reduction <add>, %122, %cst_41 [1] : vector<16x32xf32> to vector<16xf32>
    %124 = vector.shape_cast %123 : vector<16xf32> to vector<16x1xf32>
    %cst_42 = arith.constant 3.200000e+01 : f32
    %125 = vector.broadcast %cst_42 : f32 to vector<16x1xf32>
    %126 = arith.divf %124, %125 : vector<16x1xf32>
    %127 = vector.broadcast %119 : vector<16x1xf32> to vector<16x32xf32>
    %128 = arith.subf %113, %127 : vector<16x32xf32>
    %cst_43 = arith.constant 9.99999974E-6 : f32
    %129 = vector.broadcast %cst_43 : f32 to vector<16x1xf32>
    %130 = arith.addf %126, %129 : vector<16x1xf32>
    %131 = math.rsqrt %130 : vector<16x1xf32>
    %132 = vector.broadcast %131 : vector<16x1xf32> to vector<16x32xf32>
    %133 = arith.mulf %128, %132 : vector<16x32xf32>
    %134 = vector.broadcast %114 : vector<1x32xf32> to vector<16x32xf32>
    %135 = arith.mulf %133, %134 : vector<16x32xf32>
    %136 = vector.broadcast %115 : vector<1x32xf32> to vector<16x32xf32>
    %137 = arith.addf %135, %136 : vector<16x32xf32>
    %c0_44 = arith.constant 0 : index
    %c0_45 = arith.constant 0 : index
    %c0_46 = arith.constant 0 : index
    %138 = vector.load %arg6[%c0_44, %c0_45, %c0_46] : memref<2x32x64xf32, #tpu.memory_space<vmem>>, vector<1x32x64xf32>
    %139 = vector.shape_cast %138 : vector<1x32x64xf32> to vector<32x64xf32>
    %cst_47 = arith.constant dense<0.000000e+00> : vector<16x64xf32>
    %140 = tpu.matmul %137, %139, %cst_47 {dimension_numbers = #tpu.dot_dimension_numbers<[1], [0], [0], [1], [0, 0, 1, 1], [], []>} : vector<16x32xf32>, vector<32x64xf32>, vector<16x64xf32> -> vector<16x64xf32>
    %c0_48 = arith.constant 0 : index
    %c0_49 = arith.constant 0 : index
    %c0_50 = arith.constant 0 : index
    %141 = vector.load %arg9[%c0_48, %c0_49, %c0_50] : memref<2x1x64xf32, #tpu.memory_space<vmem>>, vector<1x1x64xf32>
    %142 = vector.shape_cast %141 : vector<1x1x64xf32> to vector<1x64xf32>
    %143 = vector.broadcast %142 : vector<1x64xf32> to vector<16x64xf32>
    %144 = arith.addf %140, %143 : vector<16x64xf32>
    %cst_51 = arith.constant 5.000000e-01 : f32
    %145 = vector.broadcast %cst_51 : f32 to vector<16x64xf32>
    %146 = arith.mulf %145, %144 : vector<16x64xf32>
    %cst_52 = arith.constant 0.707106769 : f32
    %147 = vector.broadcast %cst_52 : f32 to vector<16x64xf32>
    %148 = arith.mulf %144, %147 : vector<16x64xf32>
    %149 = math.erf %148 : vector<16x64xf32>
    %cst_53 = arith.constant 1.000000e+00 : f32
    %150 = vector.broadcast %cst_53 : f32 to vector<16x64xf32>
    %151 = arith.addf %150, %149 : vector<16x64xf32>
    %152 = arith.mulf %146, %151 : vector<16x64xf32>
    %c0_54 = arith.constant 0 : index
    %c0_55 = arith.constant 0 : index
    %c0_56 = arith.constant 0 : index
    %153 = vector.load %arg7[%c0_54, %c0_55, %c0_56] : memref<2x64x32xf32, #tpu.memory_space<vmem>>, vector<1x64x32xf32>
    %154 = vector.shape_cast %153 : vector<1x64x32xf32> to vector<64x32xf32>
    %cst_57 = arith.constant dense<0.000000e+00> : vector<16x32xf32>
    %155 = tpu.matmul %152, %154, %cst_57 {dimension_numbers = #tpu.dot_dimension_numbers<[1], [0], [0], [1], [0, 0, 1, 1], [], []>} : vector<16x64xf32>, vector<64x32xf32>, vector<16x32xf32> -> vector<16x32xf32>
    %156 = vector.extract_strided_slice %12 {offsets = [5, 0], sizes = [1, 32], strides = [1, 1]} : vector<6x32xf32> to vector<1x32xf32>
    %157 = vector.broadcast %156 : vector<1x32xf32> to vector<16x32xf32>
    %158 = arith.addf %155, %157 : vector<16x32xf32>
    %159 = arith.addf %113, %158 : vector<16x32xf32>
    %c1 = arith.constant 1 : index
    %c0_58 = arith.constant 0 : index
    %c0_59 = arith.constant 0 : index
    %160 = vector.load %arg8[%c1, %c0_58, %c0_59] : memref<2x6x32xf32, #tpu.memory_space<vmem>>, vector<1x6x32xf32>
    %161 = vector.shape_cast %160 : vector<1x6x32xf32> to vector<6x32xf32>
    %162 = vector.extract_strided_slice %161 {offsets = [0, 0], sizes = [1, 32], strides = [1, 1]} : vector<6x32xf32> to vector<1x32xf32>
    %163 = vector.extract_strided_slice %161 {offsets = [1, 0], sizes = [1, 32], strides = [1, 1]} : vector<6x32xf32> to vector<1x32xf32>
    %cst_60 = arith.constant dense<0.000000e+00> : vector<16xf32>
    %164 = vector.multi_reduction <add>, %159, %cst_60 [1] : vector<16x32xf32> to vector<16xf32>
    %165 = vector.shape_cast %164 : vector<16xf32> to vector<16x1xf32>
    %cst_61 = arith.constant 3.200000e+01 : f32
    %166 = vector.broadcast %cst_61 : f32 to vector<16x1xf32>
    %167 = arith.divf %165, %166 : vector<16x1xf32>
    %168 = vector.broadcast %167 : vector<16x1xf32> to vector<16x32xf32>
    %169 = arith.subf %159, %168 : vector<16x32xf32>
    %170 = arith.mulf %169, %169 : vector<16x32xf32>
    %cst_62 = arith.constant dense<0.000000e+00> : vector<16xf32>
    %171 = vector.multi_reduction <add>, %170, %cst_62 [1] : vector<16x32xf32> to vector<16xf32>
    %172 = vector.shape_cast %171 : vector<16xf32> to vector<16x1xf32>
    %cst_63 = arith.constant 3.200000e+01 : f32
    %173 = vector.broadcast %cst_63 : f32 to vector<16x1xf32>
    %174 = arith.divf %172, %173 : vector<16x1xf32>
    %175 = vector.broadcast %167 : vector<16x1xf32> to vector<16x32xf32>
    %176 = arith.subf %159, %175 : vector<16x32xf32>
    %cst_64 = arith.constant 9.99999974E-6 : f32
    %177 = vector.broadcast %cst_64 : f32 to vector<16x1xf32>
    %178 = arith.addf %174, %177 : vector<16x1xf32>
    %179 = math.rsqrt %178 : vector<16x1xf32>
    %180 = vector.broadcast %179 : vector<16x1xf32> to vector<16x32xf32>
    %181 = arith.mulf %176, %180 : vector<16x32xf32>
    %182 = vector.broadcast %162 : vector<1x32xf32> to vector<16x32xf32>
    %183 = arith.mulf %181, %182 : vector<16x32xf32>
    %184 = vector.broadcast %163 : vector<1x32xf32> to vector<16x32xf32>
    %185 = arith.addf %183, %184 : vector<16x32xf32>
    %c1_65 = arith.constant 1 : index
    %c0_66 = arith.constant 0 : index
    %c0_67 = arith.constant 0 : index
    %186 = vector.load %arg4[%c1_65, %c0_66, %c0_67] : memref<2x32x96xf32, #tpu.memory_space<vmem>>, vector<1x32x96xf32>
    %187 = vector.shape_cast %186 : vector<1x32x96xf32> to vector<32x96xf32>
    %cst_68 = arith.constant dense<0.000000e+00> : vector<16x96xf32>
    %188 = tpu.matmul %185, %187, %cst_68 {dimension_numbers = #tpu.dot_dimension_numbers<[1], [0], [0], [1], [0, 0, 1, 1], [], []>} : vector<16x32xf32>, vector<32x96xf32>, vector<16x96xf32> -> vector<16x96xf32>
    %189 = vector.shape_cast %188 : vector<16x96xf32> to vector<2x8x96xf32>
    %190 = vector.extract_strided_slice %189 {offsets = [0, 0, 0], sizes = [2, 8, 8], strides = [1, 1, 1]} : vector<2x8x96xf32> to vector<2x8x8xf32>
    %191 = vector.extract_strided_slice %189 {offsets = [0, 0, 32], sizes = [2, 8, 8], strides = [1, 1, 1]} : vector<2x8x96xf32> to vector<2x8x8xf32>
    %192 = vector.extract_strided_slice %189 {offsets = [0, 0, 64], sizes = [2, 8, 8], strides = [1, 1, 1]} : vector<2x8x96xf32> to vector<2x8x8xf32>
    "tpu.trace_start"() <{level = 10 : i32, message = "bqd,bkd->bqk"}> : () -> ()
    %cst_69 = arith.constant dense<0.000000e+00> : vector<2x8x8xf32>
    %193 = tpu.matmul %190, %191, %cst_69 {dimension_numbers = #tpu.dot_dimension_numbers<[2], [2], [1], [1], [0, 0, 0, 1, 1, 1], [0], [0]>} : vector<2x8x8xf32>, vector<2x8x8xf32>, vector<2x8x8xf32> -> vector<2x8x8xf32>
    "tpu.trace_stop"() : () -> ()
    %194 = vector.broadcast %10 : vector<1x1x8xf32> to vector<2x8x8xf32>
    %195 = arith.addf %193, %194 : vector<2x8x8xf32>
    %cst_70 = arith.constant dense<0xFF800000> : vector<2x8xf32>
    %196 = vector.multi_reduction <maximumf>, %195, %cst_70 [2] : vector<2x8x8xf32> to vector<2x8xf32>
    %197 = vector.shape_cast %196 : vector<2x8xf32> to vector<2x8x1xf32>
    %198 = vector.broadcast %197 : vector<2x8x1xf32> to vector<2x8x8xf32>
    %199 = arith.subf %195, %198 : vector<2x8x8xf32>
    %200 = math.exp %199 : vector<2x8x8xf32>
    %cst_71 = arith.constant dense<0.000000e+00> : vector<2x8xf32>
    %201 = vector.multi_reduction <add>, %200, %cst_71 [2] : vector<2x8x8xf32> to vector<2x8xf32>
    %202 = vector.shape_cast %201 : vector<2x8xf32> to vector<2x8x1xf32>
    %203 = vector.broadcast %202 : vector<2x8x1xf32> to vector<2x8x8xf32>
    %204 = arith.divf %200, %203 : vector<2x8x8xf32>
    "tpu.trace_start"() <{level = 10 : i32, message = "bqk,bkd->bqd"}> : () -> ()
    %cst_72 = arith.constant dense<0.000000e+00> : vector<2x8x8xf32>
    %205 = tpu.matmul %204, %192, %cst_72 {dimension_numbers = #tpu.dot_dimension_numbers<[2], [1], [1], [2], [0, 0, 0, 1, 1, 2], [0], [0]>} : vector<2x8x8xf32>, vector<2x8x8xf32>, vector<2x8x8xf32> -> vector<2x8x8xf32>
    "tpu.trace_stop"() : () -> ()
    %206 = vector.extract_strided_slice %189 {offsets = [0, 0, 8], sizes = [2, 8, 8], strides = [1, 1, 1]} : vector<2x8x96xf32> to vector<2x8x8xf32>
    %207 = vector.extract_strided_slice %189 {offsets = [0, 0, 40], sizes = [2, 8, 8], strides = [1, 1, 1]} : vector<2x8x96xf32> to vector<2x8x8xf32>
    %208 = vector.extract_strided_slice %189 {offsets = [0, 0, 72], sizes = [2, 8, 8], strides = [1, 1, 1]} : vector<2x8x96xf32> to vector<2x8x8xf32>
    "tpu.trace_start"() <{level = 10 : i32, message = "bqd,bkd->bqk"}> : () -> ()
    %cst_73 = arith.constant dense<0.000000e+00> : vector<2x8x8xf32>
    %209 = tpu.matmul %206, %207, %cst_73 {dimension_numbers = #tpu.dot_dimension_numbers<[2], [2], [1], [1], [0, 0, 0, 1, 1, 1], [0], [0]>} : vector<2x8x8xf32>, vector<2x8x8xf32>, vector<2x8x8xf32> -> vector<2x8x8xf32>
    "tpu.trace_stop"() : () -> ()
    %210 = vector.broadcast %10 : vector<1x1x8xf32> to vector<2x8x8xf32>
    %211 = arith.addf %209, %210 : vector<2x8x8xf32>
    %cst_74 = arith.constant dense<0xFF800000> : vector<2x8xf32>
    %212 = vector.multi_reduction <maximumf>, %211, %cst_74 [2] : vector<2x8x8xf32> to vector<2x8xf32>
    %213 = vector.shape_cast %212 : vector<2x8xf32> to vector<2x8x1xf32>
    %214 = vector.broadcast %213 : vector<2x8x1xf32> to vector<2x8x8xf32>
    %215 = arith.subf %211, %214 : vector<2x8x8xf32>
    %216 = math.exp %215 : vector<2x8x8xf32>
    %cst_75 = arith.constant dense<0.000000e+00> : vector<2x8xf32>
    %217 = vector.multi_reduction <add>, %216, %cst_75 [2] : vector<2x8x8xf32> to vector<2x8xf32>
    %218 = vector.shape_cast %217 : vector<2x8xf32> to vector<2x8x1xf32>
    %219 = vector.broadcast %218 : vector<2x8x1xf32> to vector<2x8x8xf32>
    %220 = arith.divf %216, %219 : vector<2x8x8xf32>
    "tpu.trace_start"() <{level = 10 : i32, message = "bqk,bkd->bqd"}> : () -> ()
    %cst_76 = arith.constant dense<0.000000e+00> : vector<2x8x8xf32>
    %221 = tpu.matmul %220, %208, %cst_76 {dimension_numbers = #tpu.dot_dimension_numbers<[2], [1], [1], [2], [0, 0, 0, 1, 1, 2], [0], [0]>} : vector<2x8x8xf32>, vector<2x8x8xf32>, vector<2x8x8xf32> -> vector<2x8x8xf32>
    "tpu.trace_stop"() : () -> ()
    %222 = vector.extract_strided_slice %189 {offsets = [0, 0, 16], sizes = [2, 8, 8], strides = [1, 1, 1]} : vector<2x8x96xf32> to vector<2x8x8xf32>
    %223 = vector.extract_strided_slice %189 {offsets = [0, 0, 48], sizes = [2, 8, 8], strides = [1, 1, 1]} : vector<2x8x96xf32> to vector<2x8x8xf32>
    %224 = vector.extract_strided_slice %189 {offsets = [0, 0, 80], sizes = [2, 8, 8], strides = [1, 1, 1]} : vector<2x8x96xf32> to vector<2x8x8xf32>
    "tpu.trace_start"() <{level = 10 : i32, message = "bqd,bkd->bqk"}> : () -> ()
    %cst_77 = arith.constant dense<0.000000e+00> : vector<2x8x8xf32>
    %225 = tpu.matmul %222, %223, %cst_77 {dimension_numbers = #tpu.dot_dimension_numbers<[2], [2], [1], [1], [0, 0, 0, 1, 1, 1], [0], [0]>} : vector<2x8x8xf32>, vector<2x8x8xf32>, vector<2x8x8xf32> -> vector<2x8x8xf32>
    "tpu.trace_stop"() : () -> ()
    %226 = vector.broadcast %10 : vector<1x1x8xf32> to vector<2x8x8xf32>
    %227 = arith.addf %225, %226 : vector<2x8x8xf32>
    %cst_78 = arith.constant dense<0xFF800000> : vector<2x8xf32>
    %228 = vector.multi_reduction <maximumf>, %227, %cst_78 [2] : vector<2x8x8xf32> to vector<2x8xf32>
    %229 = vector.shape_cast %228 : vector<2x8xf32> to vector<2x8x1xf32>
    %230 = vector.broadcast %229 : vector<2x8x1xf32> to vector<2x8x8xf32>
    %231 = arith.subf %227, %230 : vector<2x8x8xf32>
    %232 = math.exp %231 : vector<2x8x8xf32>
    %cst_79 = arith.constant dense<0.000000e+00> : vector<2x8xf32>
    %233 = vector.multi_reduction <add>, %232, %cst_79 [2] : vector<2x8x8xf32> to vector<2x8xf32>
    %234 = vector.shape_cast %233 : vector<2x8xf32> to vector<2x8x1xf32>
    %235 = vector.broadcast %234 : vector<2x8x1xf32> to vector<2x8x8xf32>
    %236 = arith.divf %232, %235 : vector<2x8x8xf32>
    "tpu.trace_start"() <{level = 10 : i32, message = "bqk,bkd->bqd"}> : () -> ()
    %cst_80 = arith.constant dense<0.000000e+00> : vector<2x8x8xf32>
    %237 = tpu.matmul %236, %224, %cst_80 {dimension_numbers = #tpu.dot_dimension_numbers<[2], [1], [1], [2], [0, 0, 0, 1, 1, 2], [0], [0]>} : vector<2x8x8xf32>, vector<2x8x8xf32>, vector<2x8x8xf32> -> vector<2x8x8xf32>
    "tpu.trace_stop"() : () -> ()
    %238 = vector.extract_strided_slice %189 {offsets = [0, 0, 24], sizes = [2, 8, 8], strides = [1, 1, 1]} : vector<2x8x96xf32> to vector<2x8x8xf32>
    %239 = vector.extract_strided_slice %189 {offsets = [0, 0, 56], sizes = [2, 8, 8], strides = [1, 1, 1]} : vector<2x8x96xf32> to vector<2x8x8xf32>
    %240 = vector.extract_strided_slice %189 {offsets = [0, 0, 88], sizes = [2, 8, 8], strides = [1, 1, 1]} : vector<2x8x96xf32> to vector<2x8x8xf32>
    "tpu.trace_start"() <{level = 10 : i32, message = "bqd,bkd->bqk"}> : () -> ()
    %cst_81 = arith.constant dense<0.000000e+00> : vector<2x8x8xf32>
    %241 = tpu.matmul %238, %239, %cst_81 {dimension_numbers = #tpu.dot_dimension_numbers<[2], [2], [1], [1], [0, 0, 0, 1, 1, 1], [0], [0]>} : vector<2x8x8xf32>, vector<2x8x8xf32>, vector<2x8x8xf32> -> vector<2x8x8xf32>
    "tpu.trace_stop"() : () -> ()
    %242 = vector.broadcast %10 : vector<1x1x8xf32> to vector<2x8x8xf32>
    %243 = arith.addf %241, %242 : vector<2x8x8xf32>
    %cst_82 = arith.constant dense<0xFF800000> : vector<2x8xf32>
    %244 = vector.multi_reduction <maximumf>, %243, %cst_82 [2] : vector<2x8x8xf32> to vector<2x8xf32>
    %245 = vector.shape_cast %244 : vector<2x8xf32> to vector<2x8x1xf32>
    %246 = vector.broadcast %245 : vector<2x8x1xf32> to vector<2x8x8xf32>
    %247 = arith.subf %243, %246 : vector<2x8x8xf32>
    %248 = math.exp %247 : vector<2x8x8xf32>
    %cst_83 = arith.constant dense<0.000000e+00> : vector<2x8xf32>
    %249 = vector.multi_reduction <add>, %248, %cst_83 [2] : vector<2x8x8xf32> to vector<2x8xf32>
    %250 = vector.shape_cast %249 : vector<2x8xf32> to vector<2x8x1xf32>
    %251 = vector.broadcast %250 : vector<2x8x1xf32> to vector<2x8x8xf32>
    %252 = arith.divf %248, %251 : vector<2x8x8xf32>
    "tpu.trace_start"() <{level = 10 : i32, message = "bqk,bkd->bqd"}> : () -> ()
    %cst_84 = arith.constant dense<0.000000e+00> : vector<2x8x8xf32>
    %253 = tpu.matmul %252, %240, %cst_84 {dimension_numbers = #tpu.dot_dimension_numbers<[2], [1], [1], [2], [0, 0, 0, 1, 1, 2], [0], [0]>} : vector<2x8x8xf32>, vector<2x8x8xf32>, vector<2x8x8xf32> -> vector<2x8x8xf32>
    "tpu.trace_stop"() : () -> ()
    %254 = tpu.concatenate %205, %221, %237, %253 in 2 : vector<2x8x8xf32>, vector<2x8x8xf32>, vector<2x8x8xf32>, vector<2x8x8xf32> -> vector<2x8x32xf32>
    %255 = vector.shape_cast %254 : vector<2x8x32xf32> to vector<16x32xf32>
    %c1_85 = arith.constant 1 : index
    %c0_86 = arith.constant 0 : index
    %c0_87 = arith.constant 0 : index
    %256 = vector.load %arg5[%c1_85, %c0_86, %c0_87] : memref<2x32x32xf32, #tpu.memory_space<vmem>>, vector<1x32x32xf32>
    %257 = vector.shape_cast %256 : vector<1x32x32xf32> to vector<32x32xf32>
    %cst_88 = arith.constant dense<0.000000e+00> : vector<16x32xf32>
    %258 = tpu.matmul %255, %257, %cst_88 {dimension_numbers = #tpu.dot_dimension_numbers<[1], [0], [0], [1], [0, 0, 1, 1], [], []>} : vector<16x32xf32>, vector<32x32xf32>, vector<16x32xf32> -> vector<16x32xf32>
    %259 = vector.extract_strided_slice %161 {offsets = [2, 0], sizes = [1, 32], strides = [1, 1]} : vector<6x32xf32> to vector<1x32xf32>
    %260 = vector.broadcast %259 : vector<1x32xf32> to vector<16x32xf32>
    %261 = arith.addf %258, %260 : vector<16x32xf32>
    %262 = arith.addf %159, %261 : vector<16x32xf32>
    %263 = vector.extract_strided_slice %161 {offsets = [3, 0], sizes = [1, 32], strides = [1, 1]} : vector<6x32xf32> to vector<1x32xf32>
    %264 = vector.extract_strided_slice %161 {offsets = [4, 0], sizes = [1, 32], strides = [1, 1]} : vector<6x32xf32> to vector<1x32xf32>
    %cst_89 = arith.constant dense<0.000000e+00> : vector<16xf32>
    %265 = vector.multi_reduction <add>, %262, %cst_89 [1] : vector<16x32xf32> to vector<16xf32>
    %266 = vector.shape_cast %265 : vector<16xf32> to vector<16x1xf32>
    %cst_90 = arith.constant 3.200000e+01 : f32
    %267 = vector.broadcast %cst_90 : f32 to vector<16x1xf32>
    %268 = arith.divf %266, %267 : vector<16x1xf32>
    %269 = vector.broadcast %268 : vector<16x1xf32> to vector<16x32xf32>
    %270 = arith.subf %262, %269 : vector<16x32xf32>
    %271 = arith.mulf %270, %270 : vector<16x32xf32>
    %cst_91 = arith.constant dense<0.000000e+00> : vector<16xf32>
    %272 = vector.multi_reduction <add>, %271, %cst_91 [1] : vector<16x32xf32> to vector<16xf32>
    %273 = vector.shape_cast %272 : vector<16xf32> to vector<16x1xf32>
    %cst_92 = arith.constant 3.200000e+01 : f32
    %274 = vector.broadcast %cst_92 : f32 to vector<16x1xf32>
    %275 = arith.divf %273, %274 : vector<16x1xf32>
    %276 = vector.broadcast %268 : vector<16x1xf32> to vector<16x32xf32>
    %277 = arith.subf %262, %276 : vector<16x32xf32>
    %cst_93 = arith.constant 9.99999974E-6 : f32
    %278 = vector.broadcast %cst_93 : f32 to vector<16x1xf32>
    %279 = arith.addf %275, %278 : vector<16x1xf32>
    %280 = math.rsqrt %279 : vector<16x1xf32>
    %281 = vector.broadcast %280 : vector<16x1xf32> to vector<16x32xf32>
    %282 = arith.mulf %277, %281 : vector<16x32xf32>
    %283 = vector.broadcast %263 : vector<1x32xf32> to vector<16x32xf32>
    %284 = arith.mulf %282, %283 : vector<16x32xf32>
    %285 = vector.broadcast %264 : vector<1x32xf32> to vector<16x32xf32>
    %286 = arith.addf %284, %285 : vector<16x32xf32>
    %c1_94 = arith.constant 1 : index
    %c0_95 = arith.constant 0 : index
    %c0_96 = arith.constant 0 : index
    %287 = vector.load %arg6[%c1_94, %c0_95, %c0_96] : memref<2x32x64xf32, #tpu.memory_space<vmem>>, vector<1x32x64xf32>
    %288 = vector.shape_cast %287 : vector<1x32x64xf32> to vector<32x64xf32>
    %cst_97 = arith.constant dense<0.000000e+00> : vector<16x64xf32>
    %289 = tpu.matmul %286, %288, %cst_97 {dimension_numbers = #tpu.dot_dimension_numbers<[1], [0], [0], [1], [0, 0, 1, 1], [], []>} : vector<16x32xf32>, vector<32x64xf32>, vector<16x64xf32> -> vector<16x64xf32>
    %c1_98 = arith.constant 1 : index
    %c0_99 = arith.constant 0 : index
    %c0_100 = arith.constant 0 : index
    %290 = vector.load %arg9[%c1_98, %c0_99, %c0_100] : memref<2x1x64xf32, #tpu.memory_space<vmem>>, vector<1x1x64xf32>
    %291 = vector.shape_cast %290 : vector<1x1x64xf32> to vector<1x64xf32>
    %292 = vector.broadcast %291 : vector<1x64xf32> to vector<16x64xf32>
    %293 = arith.addf %289, %292 : vector<16x64xf32>
    %cst_101 = arith.constant 5.000000e-01 : f32
    %294 = vector.broadcast %cst_101 : f32 to vector<16x64xf32>
    %295 = arith.mulf %294, %293 : vector<16x64xf32>
    %cst_102 = arith.constant 0.707106769 : f32
    %296 = vector.broadcast %cst_102 : f32 to vector<16x64xf32>
    %297 = arith.mulf %293, %296 : vector<16x64xf32>
    %298 = math.erf %297 : vector<16x64xf32>
    %cst_103 = arith.constant 1.000000e+00 : f32
    %299 = vector.broadcast %cst_103 : f32 to vector<16x64xf32>
    %300 = arith.addf %299, %298 : vector<16x64xf32>
    %301 = arith.mulf %295, %300 : vector<16x64xf32>
    %c1_104 = arith.constant 1 : index
    %c0_105 = arith.constant 0 : index
    %c0_106 = arith.constant 0 : index
    %302 = vector.load %arg7[%c1_104, %c0_105, %c0_106] : memref<2x64x32xf32, #tpu.memory_space<vmem>>, vector<1x64x32xf32>
    %303 = vector.shape_cast %302 : vector<1x64x32xf32> to vector<64x32xf32>
    %cst_107 = arith.constant dense<0.000000e+00> : vector<16x32xf32>
    %304 = tpu.matmul %301, %303, %cst_107 {dimension_numbers = #tpu.dot_dimension_numbers<[1], [0], [0], [1], [0, 0, 1, 1], [], []>} : vector<16x64xf32>, vector<64x32xf32>, vector<16x32xf32> -> vector<16x32xf32>
    %305 = vector.extract_strided_slice %161 {offsets = [5, 0], sizes = [1, 32], strides = [1, 1]} : vector<6x32xf32> to vector<1x32xf32>
    %306 = vector.broadcast %305 : vector<1x32xf32> to vector<16x32xf32>
    %307 = arith.addf %304, %306 : vector<16x32xf32>
    %308 = arith.addf %262, %307 : vector<16x32xf32>
    %309 = tpu.iota {dimensions = array<i32: 0>} : vector<2x16xi32>
    %310 = tpu.iota {dimensions = array<i32: 1>} : vector<2x16xi32>
    %c8_i32 = arith.constant 8 : i32
    %311 = vector.broadcast %c8_i32 : i32 to vector<2x16xi32>
    %312 = arith.muli %309, %311 : vector<2x16xi32>
    %313 = arith.cmpi eq, %310, %312 : vector<2x16xi32>
    %314 = arith.extui %313 : vector<2x16xi1> to vector<2x16xi32>
    %315 = arith.sitofp %314 : vector<2x16xi32> to vector<2x16xf32>
    %cst_108 = arith.constant dense<0.000000e+00> : vector<2x32xf32>
    %316 = tpu.matmul %315, %308, %cst_108 {dimension_numbers = #tpu.dot_dimension_numbers<[1], [0], [0], [1], [0, 0, 1, 1], [], []>} : vector<2x16xf32>, vector<16x32xf32>, vector<2x32xf32> -> vector<2x32xf32>
    %c0_109 = arith.constant 0 : index
    %c0_110 = arith.constant 0 : index
    %317 = vector.load %arg10[%c0_109, %c0_110] : memref<2x32xf32, #tpu.memory_space<vmem>>, vector<2x32xf32>
    %318 = vector.extract_strided_slice %317 {offsets = [0, 0], sizes = [1, 32], strides = [1, 1]} : vector<2x32xf32> to vector<1x32xf32>
    %319 = vector.extract_strided_slice %317 {offsets = [1, 0], sizes = [1, 32], strides = [1, 1]} : vector<2x32xf32> to vector<1x32xf32>
    %cst_111 = arith.constant dense<0.000000e+00> : vector<2xf32>
    %320 = vector.multi_reduction <add>, %316, %cst_111 [1] : vector<2x32xf32> to vector<2xf32>
    %321 = vector.shape_cast %320 : vector<2xf32> to vector<2x1xf32>
    %cst_112 = arith.constant 3.200000e+01 : f32
    %322 = vector.broadcast %cst_112 : f32 to vector<2x1xf32>
    %323 = arith.divf %321, %322 : vector<2x1xf32>
    %324 = vector.broadcast %323 : vector<2x1xf32> to vector<2x32xf32>
    %325 = arith.subf %316, %324 : vector<2x32xf32>
    %326 = arith.mulf %325, %325 : vector<2x32xf32>
    %cst_113 = arith.constant dense<0.000000e+00> : vector<2xf32>
    %327 = vector.multi_reduction <add>, %326, %cst_113 [1] : vector<2x32xf32> to vector<2xf32>
    %328 = vector.shape_cast %327 : vector<2xf32> to vector<2x1xf32>
    %cst_114 = arith.constant 3.200000e+01 : f32
    %329 = vector.broadcast %cst_114 : f32 to vector<2x1xf32>
    %330 = arith.divf %328, %329 : vector<2x1xf32>
    %331 = vector.broadcast %323 : vector<2x1xf32> to vector<2x32xf32>
    %332 = arith.subf %316, %331 : vector<2x32xf32>
    %cst_115 = arith.constant 9.99999974E-6 : f32
    %333 = vector.broadcast %cst_115 : f32 to vector<2x1xf32>
    %334 = arith.addf %330, %333 : vector<2x1xf32>
    %335 = math.rsqrt %334 : vector<2x1xf32>
    %336 = vector.broadcast %335 : vector<2x1xf32> to vector<2x32xf32>
    %337 = arith.mulf %332, %336 : vector<2x32xf32>
    %338 = vector.broadcast %318 : vector<1x32xf32> to vector<2x32xf32>
    %339 = arith.mulf %337, %338 : vector<2x32xf32>
    %340 = vector.broadcast %319 : vector<1x32xf32> to vector<2x32xf32>
    %341 = arith.addf %339, %340 : vector<2x32xf32>
    %c0_116 = arith.constant 0 : index
    %c0_117 = arith.constant 0 : index
    %342 = vector.load %arg11[%c0_116, %c0_117] : memref<32x128xf32, #tpu.memory_space<vmem>>, vector<32x128xf32>
    %cst_118 = arith.constant dense<0.000000e+00> : vector<2x128xf32>
    %343 = tpu.matmul %341, %342, %cst_118 {dimension_numbers = #tpu.dot_dimension_numbers<[1], [0], [0], [1], [0, 0, 1, 1], [], []>} : vector<2x32xf32>, vector<32x128xf32>, vector<2x128xf32> -> vector<2x128xf32>
    %c0_119 = arith.constant 0 : index
    %c0_120 = arith.constant 0 : index
    %344 = vector.load %arg12[%c0_119, %c0_120] : memref<1x128xf32, #tpu.memory_space<vmem>>, vector<1x128xf32>
    %345 = vector.broadcast %344 : vector<1x128xf32> to vector<2x128xf32>
    %346 = arith.addf %343, %345 : vector<2x128xf32>
    %347 = vector.shape_cast %346 : vector<2x128xf32> to vector<1x2x128xf32>
    %c0_121 = arith.constant 0 : index
    %c0_122 = arith.constant 0 : index
    %c0_123 = arith.constant 0 : index
    %348 = vector.load %arg13[%c0_121, %c0_122, %c0_123] : memref<1x2x128xf32, #tpu.memory_space<vmem>>, vector<1x2x128xf32>
    tpu.vector_store %arg13[%c0_121, %c0_122, %c0_123], %347 {strides = array<i32>} : memref<1x2x128xf32, #tpu.memory_space<vmem>>, vector<1x2x128xf32>,
    return
  }
  func.func @transform_0(%arg0: i32) -> (i32, i32) {
    %c0_i32 = arith.constant 0 : i32
    %c0_i32_0 = arith.constant 0 : i32
    return %arg0, %c0_i32 : i32, i32
  }
  func.func @transform_1(%arg0: i32) -> (i32, i32) {
    %c0_i32 = arith.constant 0 : i32
    %c0_i32_0 = arith.constant 0 : i32
    %c0_i32_1 = arith.constant 0 : i32
    return %c0_i32, %c0_i32_0 : i32, i32
  }
  func.func @transform_2(%arg0: i32) -> (i32, i32) {
    %c0_i32 = arith.constant 0 : i32
    %c0_i32_0 = arith.constant 0 : i32
    %c0_i32_1 = arith.constant 0 : i32
    return %c0_i32, %c0_i32_0 : i32, i32
  }
  func.func @transform_3(%arg0: i32) -> (i32, i32, i32) {
    %c0_i32 = arith.constant 0 : i32
    %c0_i32_0 = arith.constant 0 : i32
    %c0_i32_1 = arith.constant 0 : i32
    %c0_i32_2 = arith.constant 0 : i32
    return %c0_i32, %c0_i32_0, %c0_i32_1 : i32, i32, i32
  }
  func.func @transform_4(%arg0: i32) -> (i32, i32, i32) {
    %c0_i32 = arith.constant 0 : i32
    %c0_i32_0 = arith.constant 0 : i32
    %c0_i32_1 = arith.constant 0 : i32
    %c0_i32_2 = arith.constant 0 : i32
    return %c0_i32, %c0_i32_0, %c0_i32_1 : i32, i32, i32
  }
  func.func @transform_5(%arg0: i32) -> (i32, i32, i32) {
    %c0_i32 = arith.constant 0 : i32
    %c0_i32_0 = arith.constant 0 : i32
    %c0_i32_1 = arith.constant 0 : i32
    %c0_i32_2 = arith.constant 0 : i32
    return %c0_i32, %c0_i32_0, %c0_i32_1 : i32, i32, i32
  }
  func.func @transform_6(%arg0: i32) -> (i32, i32, i32) {
    %c0_i32 = arith.constant 0 : i32
    %c0_i32_0 = arith.constant 0 : i32
    %c0_i32_1 = arith.constant 0 : i32
    %c0_i32_2 = arith.constant 0 : i32
    return %c0_i32, %c0_i32_0, %c0_i32_1 : i32, i32, i32
  }
  func.func @transform_7(%arg0: i32) -> (i32, i32, i32) {
    %c0_i32 = arith.constant 0 : i32
    %c0_i32_0 = arith.constant 0 : i32
    %c0_i32_1 = arith.constant 0 : i32
    %c0_i32_2 = arith.constant 0 : i32
    return %c0_i32, %c0_i32_0, %c0_i32_1 : i32, i32, i32
  }
  func.func @transform_8(%arg0: i32) -> (i32, i32, i32) {
    %c0_i32 = arith.constant 0 : i32
    %c0_i32_0 = arith.constant 0 : i32
    %c0_i32_1 = arith.constant 0 : i32
    %c0_i32_2 = arith.constant 0 : i32
    return %c0_i32, %c0_i32_0, %c0_i32_1 : i32, i32, i32
  }
  func.func @transform_9(%arg0: i32) -> (i32, i32) {
    %c0_i32 = arith.constant 0 : i32
    %c0_i32_0 = arith.constant 0 : i32
    %c0_i32_1 = arith.constant 0 : i32
    return %c0_i32, %c0_i32_0 : i32, i32
  }
  func.func @transform_10(%arg0: i32) -> (i32, i32) {
    %c0_i32 = arith.constant 0 : i32
    %c0_i32_0 = arith.constant 0 : i32
    %c0_i32_1 = arith.constant 0 : i32
    return %c0_i32, %c0_i32_0 : i32, i32
  }
  func.func @transform_11(%arg0: i32) -> (i32, i32) {
    %c0_i32 = arith.constant 0 : i32
    %c0_i32_0 = arith.constant 0 : i32
    %c0_i32_1 = arith.constant 0 : i32
    return %c0_i32, %c0_i32_0 : i32, i32
  }
  func.func @transform_12(%arg0: i32) -> (i32, i32, i32) {
    %c0_i32 = arith.constant 0 : i32
    %c0_i32_0 = arith.constant 0 : i32
    %c0_i32_1 = arith.constant 0 : i32
    return %arg0, %c0_i32, %c0_i32_0 : i32, i32, i32
  }
}

</mosaic_0001>

<llo_original>
// kernel: vit_forward.1
$region0: #{vit_forward.1}
  #allocation0 [shape = 'u32[]', space=smem, size = 0x4, offset = 0x4, fixed_abs, tag = 'smem constant byte address 0x4 - core index']
  #allocation1 [shape = 'u32[144,128]{1,0:T(1,128)}', space=vmem, size = 0x12000, scoped, tag = 'internal scratch']
  %s0 = inlined_call_operand.vmem [shape: f32[16,256], index: 0, kind: input, shape index: {}]
  %s1 = inlined_call_operand.vmem [shape: f32[16,32], index: 1, kind: input, shape index: {}]
  %s2 = inlined_call_operand.vmem [shape: f32[256,32], index: 2, kind: input, shape index: {}]
  %s3 = inlined_call_operand.vmem [shape: f32[2,32,96], index: 3, kind: input, shape index: {}]
  %s4 = inlined_call_operand.vmem [shape: f32[2,32,32], index: 4, kind: input, shape index: {}]
  %s5 = inlined_call_operand.vmem [shape: f32[2,32,64], index: 5, kind: input, shape index: {}]
  %s6 = inlined_call_operand.vmem [shape: f32[2,64,32], index: 6, kind: input, shape index: {}]
  %s7 = inlined_call_operand.vmem [shape: f32[2,6,32], index: 7, kind: input, shape index: {}]
  %s8 = inlined_call_operand.vmem [shape: f32[2,1,64], index: 8, kind: input, shape index: {}]
  %s9 = inlined_call_operand.vmem [shape: f32[2,32], index: 9, kind: input, shape index: {}]
  %s10 = inlined_call_operand.vmem [shape: f32[32,128], index: 10, kind: input, shape index: {}]
  %s11 = inlined_call_operand.vmem [shape: f32[1,128], index: 11, kind: input, shape index: {}]
  %s12 = inlined_call_operand.hbm [shape: f32[1,2,128], index: 12, kind: output, shape index: {}]
  %s13 = sld [smem:[#allocation0]]
  $region58: #{vit_forward.1} parent=0
    _
  %s15 = ssub.s32 1, %s13
  %s16 = scalar_select 0, %s15, %s13
  $region1: #{vit_forward.1} parent=0
    #allocation2 [shape = 'u8[1024]{0}', space=vmem, size = 0x400, scoped, tag = 'output window, operand 0, single buffered']
    #allocation3 [shape = 's32[1]{0}', space=sflag, size = 0x4, scoped, tag = 'scoped memory for vit_forward.1']
    %17 = vsyncpa [#allocation3], 0
    // Predicated region
    $region2: #{vit_forward.1} parent=1 // pred_check
      _
    $region3: #{vit_forward.1} parent=1 // pred_check_branch
      %19 = sbr.rel (0) target = $region5
    $region4: #{vit_forward.1} parent=1 // pred_region
      _
    $region5: #{vit_forward.1} parent=1 // pred_fallthru
      _
    // Predicated region
    $region6: #{vit_forward.1} parent=1 // pred_check
      _
    $region7: #{vit_forward.1} parent=1 // pred_check_branch
      %21 = sbr.rel (0) target = $region9
    $region8: #{vit_forward.1} parent=1 // pred_region
      _
    $region9: #{vit_forward.1} parent=1 // pred_fallthru
      _
    // Predicated region
    $region10: #{vit_forward.1} parent=1 // pred_check
      _
    $region11: #{vit_forward.1} parent=1 // pred_check_branch
      %23 = sbr.rel (0) target = $region13
    $region12: #{vit_forward.1} parent=1 // pred_region
      _
    $region13: #{vit_forward.1} parent=1 // pred_fallthru
      _
    // Predicated region
    $region14: #{vit_forward.1} parent=1 // pred_check
      _
    $region15: #{vit_forward.1} parent=1 // pred_check_branch
      %25 = sbr.rel (0) target = $region17
    $region16: #{vit_forward.1} parent=1 // pred_region
      _
    $region17: #{vit_forward.1} parent=1 // pred_fallthru
      _
    // Predicated region
    $region18: #{vit_forward.1} parent=1 // pred_check
      _
    $region19: #{vit_forward.1} parent=1 // pred_check_branch
      %27 = sbr.rel (0) target = $region21
    $region20: #{vit_forward.1} parent=1 // pred_region
      _
    $region21: #{vit_forward.1} parent=1 // pred_fallthru
      _
    // Predicated region
    $region22: #{vit_forward.1} parent=1 // pred_check
      _
    $region23: #{vit_forward.1} parent=1 // pred_check_branch
      %29 = sbr.rel (0) target = $region25
    $region24: #{vit_forward.1} parent=1 // pred_region
      _
    $region25: #{vit_forward.1} parent=1 // pred_fallthru
      _
    // Predicated region
    $region26: #{vit_forward.1} parent=1 // pred_check
      _
    $region27: #{vit_forward.1} parent=1 // pred_check_branch
      %31 = sbr.rel (0) target = $region29
    $region28: #{vit_forward.1} parent=1 // pred_region
      _
    $region29: #{vit_forward.1} parent=1 // pred_fallthru
      _
    // Predicated region
    $region30: #{vit_forward.1} parent=1 // pred_check
      _
    $region31: #{vit_forward.1} parent=1 // pred_check_branch
      %33 = sbr.rel (0) target = $region33
    $region32: #{vit_forward.1} parent=1 // pred_region
      _
    $region33: #{vit_forward.1} parent=1 // pred_fallthru
      _
    // Predicated region
    $region34: #{vit_forward.1} parent=1 // pred_check
      _
    $region35: #{vit_forward.1} parent=1 // pred_check_branch
      %35 = sbr.rel (0) target = $region37
    $region36: #{vit_forward.1} parent=1 // pred_region
      _
    $region37: #{vit_forward.1} parent=1 // pred_fallthru
      _
    // Predicated region
    $region38: #{vit_forward.1} parent=1 // pred_check
      _
    $region39: #{vit_forward.1} parent=1 // pred_check_branch
      %37 = sbr.rel (0) target = $region41
    $region40: #{vit_forward.1} parent=1 // pred_region
      _
    $region41: #{vit_forward.1} parent=1 // pred_fallthru
      _
    // Predicated region
    $region42: #{vit_forward.1} parent=1 // pred_check
      _
    $region43: #{vit_forward.1} parent=1 // pred_check_branch
      %39 = sbr.rel (0) target = $region45
    $region44: #{vit_forward.1} parent=1 // pred_region
      _
    $region45: #{vit_forward.1} parent=1 // pred_fallthru
      _
    // Predicated region
    $region46: #{vit_forward.1} parent=1 // pred_check
      _
    $region47: #{vit_forward.1} parent=1 // pred_check_branch
      %41 = sbr.rel (0) target = $region49
    $region48: #{vit_forward.1} parent=1 // pred_region
      _
    $region49: #{vit_forward.1} parent=1 // pred_fallthru
      _
    %v42 = vld [vmem:[%s0] sm:$0xff]
    %v43 = vld [vmem:[%s0 + $0x8] sm:$0xff]
    %v44 = vld [vmem:[%s0 + $0x10] sm:$0xff]
    %v45 = vld [vmem:[%s0 + $0x18] sm:$0xff]
    %v46 = vld [vmem:[%s2] sm:$0xff]
    %v47 = vld [vmem:[%s2 + $0x8] sm:$0xff]
    %v48 = vld [vmem:[%s2 + $0x10] sm:$0xff]
    %v49 = vld [vmem:[%s2 + $0x18] sm:$0xff]
    %v50 = vld [vmem:[%s2 + $0x20] sm:$0xff]
    %v51 = vld [vmem:[%s2 + $0x28] sm:$0xff]
    %v52 = vld [vmem:[%s2 + $0x30] sm:$0xff]
    %v53 = vld [vmem:[%s2 + $0x38] sm:$0xff]
    %v54 = vld [vmem:[%s2 + $0x40] sm:$0xff]
    %v55 = vld [vmem:[%s2 + $0x48] sm:$0xff]
    %v56 = vld [vmem:[%s2 + $0x50] sm:$0xff]
    %v57 = vld [vmem:[%s2 + $0x58] sm:$0xff]
    %v58 = vld [vmem:[%s2 + $0x60] sm:$0xff]
    %v59 = vld [vmem:[%s2 + $0x68] sm:$0xff]
    %v60 = vld [vmem:[%s2 + $0x70] sm:$0xff]
    %v61 = vld [vmem:[%s2 + $0x78] sm:$0xff]
    %v62 = vld [vmem:[%s2 + $0x80] sm:$0xff]
    %v63 = vld [vmem:[%s2 + $0x88] sm:$0xff]
    %v64 = vld [vmem:[%s2 + $0x90] sm:$0xff]
    %v65 = vld [vmem:[%s2 + $0x98] sm:$0xff]
    %v66 = vld [vmem:[%s2 + $0xa0] sm:$0xff]
    %v67 = vld [vmem:[%s2 + $0xa8] sm:$0xff]
    %v68 = vld [vmem:[%s2 + $0xb0] sm:$0xff]
    %v69 = vld [vmem:[%s2 + $0xb8] sm:$0xff]
    %v70 = vld [vmem:[%s2 + $0xc0] sm:$0xff]
    %v71 = vld [vmem:[%s2 + $0xc8] sm:$0xff]
    %v72 = vld [vmem:[%s2 + $0xd0] sm:$0xff]
    %v73 = vld [vmem:[%s2 + $0xd8] sm:$0xff]
    %v74 = vld [vmem:[%s2 + $0xe0] sm:$0xff]
    %v75 = vld [vmem:[%s2 + $0xe8] sm:$0xff]
    %v76 = vld [vmem:[%s2 + $0xf0] sm:$0xff]
    %v77 = vld [vmem:[%s2 + $0xf8] sm:$0xff]
    %v78 = vld [vmem:[%s1] sm:$0xff]
    %v79 = vld [vmem:[%s1 + $0x8] sm:$0xff]
    %80 = vmatprep.subr.mxu0 0.0
    %81 = vmatpush1.msra.mxu0 %v61
    %82 = vmatprep.subr.mxu0 0.0
    %83 = vmatpush1.msra.mxu0 %v60
    %84 = vmatprep.subr.mxu0 0.0
    %85 = vmatpush1.msra.mxu0 %v59
    %86 = vmatprep.subr.mxu0 0.0
    %87 = vmatpush1.msra.mxu0 %v58
    %88 = vmatprep.subr.mxu0 0.0
    %89 = vmatpush1.msra.mxu0 %v57
    %90 = vmatprep.subr.mxu0 0.0
    %91 = vmatpush1.msra.mxu0 %v56
    %92 = vmatprep.subr.mxu0 0.0
    %93 = vmatpush1.msra.mxu0 %v55
    %94 = vmatprep.subr.mxu0 0.0
    %95 = vmatpush1.msra.mxu0 %v54
    %96 = vmatprep.subr.mxu0 0.0
    %97 = vmatpush1.msra.mxu0 %v53
    %98 = vmatprep.subr.mxu0 0.0
    %99 = vmatpush1.msra.mxu0 %v52
    %100 = vmatprep.subr.mxu0 0.0
    %101 = vmatpush1.msra.mxu0 %v51
    %102 = vmatprep.subr.mxu0 0.0
    %103 = vmatpush1.msra.mxu0 %v50
    %104 = vmatprep.subr.mxu0 0.0
    %105 = vmatpush1.msra.mxu0 %v49
    %106 = vmatprep.subr.mxu0 0.0
    %107 = vmatpush1.msra.mxu0 %v48
    %108 = vmatprep.subr.mxu0 0.0
    %109 = vmatpush1.msra.mxu0 %v47
    %110 = vmatprep.subr.mxu0 0.0
    %111 = vmatpush1.msra.mxu0 %v46
    %112 = vmatprep.subr.mxu0 0.0
    %113 = vmatpush2.msra.mxu0 %v77
    %114 = vmatprep.subr.mxu0 0.0
    %115 = vmatpush2.msra.mxu0 %v76
    %116 = vmatprep.subr.mxu0 0.0
    %117 = vmatpush2.msra.mxu0 %v75
    %118 = vmatprep.subr.mxu0 0.0
    %119 = vmatpush2.msra.mxu0 %v74
    %120 = vmatprep.subr.mxu0 0.0
    %121 = vmatpush2.msra.mxu0 %v73
    %122 = vmatprep.subr.mxu0 0.0
    %123 = vmatpush2.msra.mxu0 %v72
    %124 = vmatprep.subr.mxu0 0.0
    %125 = vmatpush2.msra.mxu0 %v71
    %126 = vmatprep.subr.mxu0 0.0
    %127 = vmatpush2.msra.mxu0 %v70
    %128 = vmatprep.subr.mxu0 0.0
    %129 = vmatpush2.msra.mxu0 %v69
    %130 = vmatprep.subr.mxu0 0.0
    %131 = vmatpush2.msra.mxu0 %v68
    %132 = vmatprep.subr.mxu0 0.0
    %133 = vmatpush2.msra.mxu0 %v67
    %134 = vmatprep.subr.mxu0 0.0
    %135 = vmatpush2.msra.mxu0 %v66
    %136 = vmatprep.subr.mxu0 0.0
    %137 = vmatpush2.msra.mxu0 %v65
    %138 = vmatprep.subr.mxu0 0.0
    %139 = vmatpush2.msra.mxu0 %v64
    %140 = vmatprep.subr.mxu0 0.0
    %141 = vmatpush2.msra.mxu0 %v63
    %142 = vmatprep.subr.mxu0 0.0
    %143 = vmatpush2.msra.mxu0 %v62
    %144 = vmatprep.mubr.f32.mxu0 %v43
    %145 = vmatmul.mubr.f32.gmra.mxu0 %v42
    %v146 = vpop.f32.mrf.mxu0
    %v147 = vadd.f32 %v78, %v146
    %v148 = vpop.f32.mrf.mxu0
    %149 = vmatprep.mubr.f32.mxu0 %v45
    %150 = vmatmul.mubr.f32.gmra.mxu0 %v44
    %v151 = vpop.f32.mrf.mxu0
    %v152 = vadd.f32 %v79, %v151
    %v153 = vpop.f32.mrf.mxu0
    %154 = vdwg.mxu0
    %v155 = vlaneseq
    %v156 = vand.u32 %v155, 127
    %vm157 = vcmp.lt.s32.totalorder %v156, 5
    %v158 = vsel %vm157, 0.0, -1e+30
    %v159 = vld [vmem:[%s7] sm:$0x3f]
    %vm160 = vcmask 261120
    %v161 = vsel %vm160, %v147, 0.0
    %162 = vadd.xlane.f32.xlu0 %v161
    %v163 = vpop.xlane.xlu0 %162
    %v164 = vsel %vm160, %v152, 0.0
    %165 = vadd.xlane.f32.xlu0 %v164
    %v166 = vpop.xlane.xlu0 %165
    %v167 = vrcp.pop 32.0
    %v168 = vmul.f32 %v163, %v167
    %v169 = vmul.f32 %v166, %v167
    %v170 = vsub.f32 %v147, %v168
    %v171 = vsub.f32 %v152, %v169
    %v172 = vmul.f32 %v170, %v170
    %v173 = vmul.f32 %v171, %v171
    %v174 = vsel %vm160, %v172, 0.0
    %175 = vadd.xlane.f32.xlu0 %v174
    %v176 = vpop.xlane.xlu0 %175
    %v177 = vsel %vm160, %v173, 0.0
    %178 = vadd.xlane.f32.xlu0 %v177
    %v179 = vpop.xlane.xlu0 %178
    %v180 = vmul.f32 %v176, %v167
    %v181 = vmul.f32 %v179, %v167
    %v182 = vadd.f32 %v180, 1e-05
    %v183 = vadd.f32 %v181, 1e-05
    %v184 = vrsqrt.pop %v182
    %v185 = vrsqrt.pop %v183
    %v186 = vmul.f32 %v170, %v184
    %v187 = vmul.f32 %v171, %v185
    %v188 = vlaneseq
    %v189 = vshrl.u32 %v188, 7
    %v190 = vsub.s32 0, %v189
    %v191 = vrot.slane %v159, %v190
    %v192 = vmul.f32 %v186, %v191
    %v193 = vmul.f32 %v187, %v191
    %v194 = vlaneseq
    %v195 = vshrl.u32 %v194, 7
    %v196 = vsub.s32 1, %v195
    %v197 = vrot.slane %v159, %v196
    %v198 = vadd.f32 %v192, %v197
    %v199 = vadd.f32 %v193, %v197
    %v200 = vld [vmem:[%s3] sm:$0xff]
    %v201 = vld [vmem:[%s3 + $0x8] sm:$0xff]
    %v202 = vld [vmem:[%s3 + $0x10] sm:$0xff]
    %v203 = vld [vmem:[%s3 + $0x18] sm:$0xff]
    %v205 = vsel %vm160, %v198, 0
    %v208 = vsel %vm160, %v199, 0
    %210 = vmatprep.subr.mxu0 0.0
    %211 = vmatpush1.msra.mxu0 0.0
    %212 = vmatprep.subr.mxu0 0.0
    %213 = vmatpush1.msra.mxu0 0.0
    %214 = vmatprep.subr.mxu0 0.0
    %215 = vmatpush1.msra.mxu0 0.0
    %216 = vmatprep.subr.mxu0 0.0
    %217 = vmatpush1.msra.mxu0 0.0
    %218 = vmatprep.subr.mxu0 0.0
    %219 = vmatpush1.msra.mxu0 0.0
    %220 = vmatprep.subr.mxu0 0.0
    %221 = vmatpush1.msra.mxu0 0.0
    %222 = vmatprep.subr.mxu0 0.0
    %223 = vmatpush1.msra.mxu0 0.0
    %224 = vmatprep.subr.mxu0 0.0
    %225 = vmatpush1.msra.mxu0 0.0
    %226 = vmatprep.subr.mxu0 0.0
    %227 = vmatpush1.msra.mxu0 0.0
    %228 = vmatprep.subr.mxu0 0.0
    %229 = vmatpush1.msra.mxu0 0.0
    %230 = vmatprep.subr.mxu0 0.0
    %231 = vmatpush1.msra.mxu0 0.0
    %232 = vmatprep.subr.mxu0 0.0
    %233 = vmatpush1.msra.mxu0 0.0
    %234 = vmatprep.subr.mxu0 0.0
    %235 = vmatpush1.msra.mxu0 %v203
    %236 = vmatprep.subr.mxu0 0.0
    %237 = vmatpush1.msra.mxu0 %v202
    %238 = vmatprep.subr.mxu0 0.0
    %239 = vmatpush1.msra.mxu0 %v201
    %240 = vmatprep.subr.mxu0 0.0
    %241 = vmatpush1.msra.mxu0 %v200
    %242 = vmatprep.subr.mxu0 0.0
    %243 = vmatpush2.msra.mxu0 0.0
    %244 = vmatprep.subr.mxu0 0.0
    %245 = vmatpush2.msra.mxu0 0.0
    %246 = vmatprep.subr.mxu0 0.0
    %247 = vmatpush2.msra.mxu0 0.0
    %248 = vmatprep.subr.mxu0 0.0
    %249 = vmatpush2.msra.mxu0 0.0
    %250 = vmatprep.subr.mxu0 0.0
    %251 = vmatpush2.msra.mxu0 0.0
    %252 = vmatprep.subr.mxu0 0.0
    %253 = vmatpush2.msra.mxu0 0.0
    %254 = vmatprep.subr.mxu0 0.0
    %255 = vmatpush2.msra.mxu0 0.0
    %256 = vmatprep.subr.mxu0 0.0
    %257 = vmatpush2.msra.mxu0 0.0
    %258 = vmatprep.subr.mxu0 0.0
    %259 = vmatpush2.msra.mxu0 0.0
    %260 = vmatprep.subr.mxu0 0.0
    %261 = vmatpush2.msra.mxu0 0.0
    %262 = vmatprep.subr.mxu0 0.0
    %263 = vmatpush2.msra.mxu0 0.0
    %264 = vmatprep.subr.mxu0 0.0
    %265 = vmatpush2.msra.mxu0 0.0
    %266 = vmatprep.subr.mxu0 0.0
    %267 = vmatpush2.msra.mxu0 0.0
    %268 = vmatprep.subr.mxu0 0.0
    %269 = vmatpush2.msra.mxu0 0.0
    %270 = vmatprep.subr.mxu0 0.0
    %271 = vmatpush2.msra.mxu0 0.0
    %272 = vmatprep.subr.mxu0 0.0
    %273 = vmatpush2.msra.mxu0 0.0
    %274 = vmatprep.mubr.f32.mxu0 0.0
    %275 = vmatmul.mubr.f32.gmra.mxu0 %v205
    %v276 = vpop.f32.mrf.mxu0
    %v277 = vadd.f32 0.0, %v276
    %v278 = vpop.f32.mrf.mxu0
    %279 = vmatprep.mubr.f32.mxu0 0.0
    %280 = vmatmul.mubr.f32.gmra.mxu0 %v208
    %v281 = vpop.f32.mrf.mxu0
    %v282 = vadd.f32 0.0, %v281
    %v283 = vpop.f32.mrf.mxu0
    %284 = vdwg.mxu0
    %286 = vrot.lane.b32.xlu0 %v277, 96
    %v287 = vpop.permute.xlu0 %286
    %vm288 = vcmask 64512
    %v289 = vsel %vm288, %v277, 0
    %v291 = vsel %vm288, %v287, 0
    %293 = vmatprep.subr.mxu0 0.0
    %294 = vmatpush1.xpose.msra.mxu0 0.0
    %295 = vmatprep.subr.mxu0 0.0
    %296 = vmatpush1.xpose.msra.mxu0 0.0
    %297 = vmatprep.subr.mxu0 0.0
    %298 = vmatpush1.xpose.msra.mxu0 0.0
    %299 = vmatprep.subr.mxu0 0.0
    %300 = vmatpush1.xpose.msra.mxu0 0.0
    %301 = vmatprep.subr.mxu0 0.0
    %302 = vmatpush1.xpose.msra.mxu0 0.0
    %303 = vmatprep.subr.mxu0 0.0
    %304 = vmatpush1.xpose.msra.mxu0 0.0
    %305 = vmatprep.subr.mxu0 0.0
    %306 = vmatpush1.xpose.msra.mxu0 0.0
    %307 = vmatprep.subr.mxu0 0.0
    %308 = vmatpush1.xpose.msra.mxu0 0.0
    %309 = vmatprep.subr.mxu0 0.0
    %310 = vmatpush1.xpose.msra.mxu0 0.0
    %311 = vmatprep.subr.mxu0 0.0
    %312 = vmatpush1.xpose.msra.mxu0 0.0
    %313 = vmatprep.subr.mxu0 0.0
    %314 = vmatpush1.xpose.msra.mxu0 0.0
    %315 = vmatprep.subr.mxu0 0.0
    %316 = vmatpush1.xpose.msra.mxu0 0.0
    %317 = vmatprep.subr.mxu0 0.0
    %318 = vmatpush1.xpose.msra.mxu0 0.0
    %319 = vmatprep.subr.mxu0 0.0
    %320 = vmatpush1.xpose.msra.mxu0 0.0
    %321 = vmatprep.subr.mxu0 0.0
    %322 = vmatpush1.xpose.msra.mxu0 0.0
    %323 = vmatprep.subr.mxu0 0.0
    %324 = vmatpush1.xpose.msra.mxu0 %v291
    %325 = vmatprep.subr.mxu0 0.0
    %326 = vmatpush2.xpose.msra.mxu0 0.0
    %327 = vmatprep.subr.mxu0 0.0
    %328 = vmatpush2.xpose.msra.mxu0 0.0
    %329 = vmatprep.subr.mxu0 0.0
    %330 = vmatpush2.xpose.msra.mxu0 0.0
    %331 = vmatprep.subr.mxu0 0.0
    %332 = vmatpush2.xpose.msra.mxu0 0.0
    %333 = vmatprep.subr.mxu0 0.0
    %334 = vmatpush2.xpose.msra.mxu0 0.0
    %335 = vmatprep.subr.mxu0 0.0
    %336 = vmatpush2.xpose.msra.mxu0 0.0
    %337 = vmatprep.subr.mxu0 0.0
    %338 = vmatpush2.xpose.msra.mxu0 0.0
    %339 = vmatprep.subr.mxu0 0.0
    %340 = vmatpush2.xpose.msra.mxu0 0.0
    %341 = vmatprep.subr.mxu0 0.0
    %342 = vmatpush2.xpose.msra.mxu0 0.0
    %343 = vmatprep.subr.mxu0 0.0
    %344 = vmatpush2.xpose.msra.mxu0 0.0
    %345 = vmatprep.subr.mxu0 0.0
    %346 = vmatpush2.xpose.msra.mxu0 0.0
    %347 = vmatprep.subr.mxu0 0.0
    %348 = vmatpush2.xpose.msra.mxu0 0.0
    %349 = vmatprep.subr.mxu0 0.0
    %350 = vmatpush2.xpose.msra.mxu0 0.0
    %351 = vmatprep.subr.mxu0 0.0
    %352 = vmatpush2.xpose.msra.mxu0 0.0
    %353 = vmatprep.subr.mxu0 0.0
    %354 = vmatpush2.xpose.msra.mxu0 0.0
    %355 = vmatprep.subr.mxu0 0.0
    %356 = vmatpush2.xpose.msra.mxu0 0.0
    %357 = vmatprep.mubr.f32.mxu0 0.0
    %358 = vmatmul.mubr.f32.gmra.mxu0 %v289
    %v359 = vpop.f32.mrf.mxu0
    %v360 = vadd.f32 %v158, %v359
    %v361 = vpop.f32.mrf.mxu0
    %362 = vdwg.mxu0
    %364 = vrot.lane.b32.xlu0 %v282, 96
    %v365 = vpop.permute.xlu0 %364
    %v366 = vsel %vm288, %v282, 0
    %v368 = vsel %vm288, %v365, 0
    %370 = vmatprep.subr.mxu0 0.0
    %371 = vmatpush1.xpose.msra.mxu0 0.0
    %372 = vmatprep.subr.mxu0 0.0
    %373 = vmatpush1.xpose.msra.mxu0 0.0
    %374 = vmatprep.subr.mxu0 0.0
    %375 = vmatpush1.xpose.msra.mxu0 0.0
    %376 = vmatprep.subr.mxu0 0.0
    %377 = vmatpush1.xpose.msra.mxu0 0.0
    %378 = vmatprep.subr.mxu0 0.0
    %379 = vmatpush1.xpose.msra.mxu0 0.0
    %380 = vmatprep.subr.mxu0 0.0
    %381 = vmatpush1.xpose.msra.mxu0 0.0
    %382 = vmatprep.subr.mxu0 0.0
    %383 = vmatpush1.xpose.msra.mxu0 0.0
    %384 = vmatprep.subr.mxu0 0.0
    %385 = vmatpush1.xpose.msra.mxu0 0.0
    %386 = vmatprep.subr.mxu0 0.0
    %387 = vmatpush1.xpose.msra.mxu0 0.0
    %388 = vmatprep.subr.mxu0 0.0
    %389 = vmatpush1.xpose.msra.mxu0 0.0
    %390 = vmatprep.subr.mxu0 0.0
    %391 = vmatpush1.xpose.msra.mxu0 0.0
    %392 = vmatprep.subr.mxu0 0.0
    %393 = vmatpush1.xpose.msra.mxu0 0.0
    %394 = vmatprep.subr.mxu0 0.0
    %395 = vmatpush1.xpose.msra.mxu0 0.0
    %396 = vmatprep.subr.mxu0 0.0
    %397 = vmatpush1.xpose.msra.mxu0 0.0
    %398 = vmatprep.subr.mxu0 0.0
    %399 = vmatpush1.xpose.msra.mxu0 0.0
    %400 = vmatprep.subr.mxu0 0.0
    %401 = vmatpush1.xpose.msra.mxu0 %v368
    %402 = vmatprep.subr.mxu0 0.0
    %403 = vmatpush2.xpose.msra.mxu0 0.0
    %404 = vmatprep.subr.mxu0 0.0
    %405 = vmatpush2.xpose.msra.mxu0 0.0
    %406 = vmatprep.subr.mxu0 0.0
    %407 = vmatpush2.xpose.msra.mxu0 0.0
    %408 = vmatprep.subr.mxu0 0.0
    %409 = vmatpush2.xpose.msra.mxu0 0.0
    %410 = vmatprep.subr.mxu0 0.0
    %411 = vmatpush2.xpose.msra.mxu0 0.0
    %412 = vmatprep.subr.mxu0 0.0
    %413 = vmatpush2.xpose.msra.mxu0 0.0
    %414 = vmatprep.subr.mxu0 0.0
    %415 = vmatpush2.xpose.msra.mxu0 0.0
    %416 = vmatprep.subr.mxu0 0.0
    %417 = vmatpush2.xpose.msra.mxu0 0.0
    %418 = vmatprep.subr.mxu0 0.0
    %419 = vmatpush2.xpose.msra.mxu0 0.0
    %420 = vmatprep.subr.mxu0 0.0
    %421 = vmatpush2.xpose.msra.mxu0 0.0
    %422 = vmatprep.subr.mxu0 0.0
    %423 = vmatpush2.xpose.msra.mxu0 0.0
    %424 = vmatprep.subr.mxu0 0.0
    %425 = vmatpush2.xpose.msra.mxu0 0.0
    %426 = vmatprep.subr.mxu0 0.0
    %427 = vmatpush2.xpose.msra.mxu0 0.0
    %428 = vmatprep.subr.mxu0 0.0
    %429 = vmatpush2.xpose.msra.mxu0 0.0
    %430 = vmatprep.subr.mxu0 0.0
    %431 = vmatpush2.xpose.msra.mxu0 0.0
    %432 = vmatprep.subr.mxu0 0.0
    %433 = vmatpush2.xpose.msra.mxu0 0.0
    %434 = vmatprep.mubr.f32.mxu0 0.0
    %435 = vmatmul.mubr.f32.gmra.mxu0 %v366
    %v436 = vpop.f32.mrf.mxu0
    %v437 = vadd.f32 %v158, %v436
    %v438 = vpop.f32.mrf.mxu0
    %439 = vdwg.mxu0
    %v440 = vsel %vm288, %v360, -inf
    %441 = vmax.xlane.f32.xlu0 %v440
    %v442 = vpop.xlane.xlu0 %441
    %v443 = vsel %vm288, %v437, -inf
    %444 = vmax.xlane.f32.xlu0 %v443
    %v445 = vpop.xlane.xlu0 %444
    %v446 = vsub.f32 %v360, %v442
    %v447 = vsub.f32 %v437, %v445
    %v448 = vmul.f32 %v446, 1.442695
    %v449 = vpow.pop %v448
    %v450 = vmul.f32 %v447, 1.442695
    %v451 = vpow.pop %v450
    %v452 = vsel %vm288, %v449, 0.0
    %453 = vadd.xlane.f32.xlu0 %v452
    %v454 = vpop.xlane.xlu0 %453
    %v455 = vsel %vm288, %v451, 0.0
    %456 = vadd.xlane.f32.xlu0 %v455
    %v457 = vpop.xlane.xlu0 %456
    %v458 = vrcp.pop %v454
    %v459 = vmul.f32 %v449, %v458
    %v460 = vrcp.pop %v457
    %v461 = vmul.f32 %v451, %v460
    %462 = vrot.lane.b32.xlu0 %v277, 64
    %v463 = vpop.permute.xlu0 %462
    %v466 = vsel %vm288, %v459, 0
    %468 = vmatprep.subr.mxu0 0.0
    %469 = vmatpush1.msra.mxu0 0.0
    %470 = vmatprep.subr.mxu0 0.0
    %471 = vmatpush1.msra.mxu0 0.0
    %472 = vmatprep.subr.mxu0 0.0
    %473 = vmatpush1.msra.mxu0 0.0
    %474 = vmatprep.subr.mxu0 0.0
    %475 = vmatpush1.msra.mxu0 0.0
    %476 = vmatprep.subr.mxu0 0.0
    %477 = vmatpush1.msra.mxu0 0.0
    %478 = vmatprep.subr.mxu0 0.0
    %479 = vmatpush1.msra.mxu0 0.0
    %480 = vmatprep.subr.mxu0 0.0
    %481 = vmatpush1.msra.mxu0 0.0
    %482 = vmatprep.subr.mxu0 0.0
    %483 = vmatpush1.msra.mxu0 0.0
    %484 = vmatprep.subr.mxu0 0.0
    %485 = vmatpush1.msra.mxu0 0.0
    %486 = vmatprep.subr.mxu0 0.0
    %487 = vmatpush1.msra.mxu0 0.0
    %488 = vmatprep.subr.mxu0 0.0
    %489 = vmatpush1.msra.mxu0 0.0
    %490 = vmatprep.subr.mxu0 0.0
    %491 = vmatpush1.msra.mxu0 0.0
    %492 = vmatprep.subr.mxu0 0.0
    %493 = vmatpush1.msra.mxu0 0.0
    %494 = vmatprep.subr.mxu0 0.0
    %495 = vmatpush1.msra.mxu0 0.0
    %496 = vmatprep.subr.mxu0 0.0
    %497 = vmatpush1.msra.mxu0 0.0
    %498 = vmatprep.subr.mxu0 0.0
    %499 = vmatpush1.msra.mxu0 %v463
    %500 = vmatprep.subr.mxu0 0.0
    %501 = vmatpush2.msra.mxu0 0.0
    %502 = vmatprep.subr.mxu0 0.0
    %503 = vmatpush2.msra.mxu0 0.0
    %504 = vmatprep.subr.mxu0 0.0
    %505 = vmatpush2.msra.mxu0 0.0
    %506 = vmatprep.subr.mxu0 0.0
    %507 = vmatpush2.msra.mxu0 0.0
    %508 = vmatprep.subr.mxu0 0.0
    %509 = vmatpush2.msra.mxu0 0.0
    %510 = vmatprep.subr.mxu0 0.0
    %511 = vmatpush2.msra.mxu0 0.0
    %512 = vmatprep.subr.mxu0 0.0
    %513 = vmatpush2.msra.mxu0 0.0
    %514 = vmatprep.subr.mxu0 0.0
    %515 = vmatpush2.msra.mxu0 0.0
    %516 = vmatprep.subr.mxu0 0.0
    %517 = vmatpush2.msra.mxu0 0.0
    %518 = vmatprep.subr.mxu0 0.0
    %519 = vmatpush2.msra.mxu0 0.0
    %520 = vmatprep.subr.mxu0 0.0
    %521 = vmatpush2.msra.mxu0 0.0
    %522 = vmatprep.subr.mxu0 0.0
    %523 = vmatpush2.msra.mxu0 0.0
    %524 = vmatprep.subr.mxu0 0.0
    %525 = vmatpush2.msra.mxu0 0.0
    %526 = vmatprep.subr.mxu0 0.0
    %527 = vmatpush2.msra.mxu0 0.0
    %528 = vmatprep.subr.mxu0 0.0
    %529 = vmatpush2.msra.mxu0 0.0
    %530 = vmatprep.subr.mxu0 0.0
    %531 = vmatpush2.msra.mxu0 0.0
    %532 = vmatprep.mubr.f32.mxu0 0.0
    %533 = vmatmul.mubr.f32.gmra.mxu0 %v466
    %v534 = vpop.f32.mrf.mxu0
    %v535 = vadd.f32 0.0, %v534
    %v536 = vpop.f32.mrf.mxu0
    %537 = vdwg.mxu0
    %538 = vrot.lane.b32.xlu0 %v282, 64
    %v539 = vpop.permute.xlu0 %538
    %v542 = vsel %vm288, %v461, 0
    %544 = vmatprep.subr.mxu0 0.0
    %545 = vmatpush1.msra.mxu0 0.0
    %546 = vmatprep.subr.mxu0 0.0
    %547 = vmatpush1.msra.mxu0 0.0
    %548 = vmatprep.subr.mxu0 0.0
    %549 = vmatpush1.msra.mxu0 0.0
    %550 = vmatprep.subr.mxu0 0.0
    %551 = vmatpush1.msra.mxu0 0.0
    %552 = vmatprep.subr.mxu0 0.0
    %553 = vmatpush1.msra.mxu0 0.0
    %554 = vmatprep.subr.mxu0 0.0
    %555 = vmatpush1.msra.mxu0 0.0
    %556 = vmatprep.subr.mxu0 0.0
    %557 = vmatpush1.msra.mxu0 0.0
    %558 = vmatprep.subr.mxu0 0.0
    %559 = vmatpush1.msra.mxu0 0.0
    %560 = vmatprep.subr.mxu0 0.0
    %561 = vmatpush1.msra.mxu0 0.0
    %562 = vmatprep.subr.mxu0 0.0
    %563 = vmatpush1.msra.mxu0 0.0
    %564 = vmatprep.subr.mxu0 0.0
    %565 = vmatpush1.msra.mxu0 0.0
    %566 = vmatprep.subr.mxu0 0.0
    %567 = vmatpush1.msra.mxu0 0.0
    %568 = vmatprep.subr.mxu0 0.0
    %569 = vmatpush1.msra.mxu0 0.0
    %570 = vmatprep.subr.mxu0 0.0
    %571 = vmatpush1.msra.mxu0 0.0
    %572 = vmatprep.subr.mxu0 0.0
    %573 = vmatpush1.msra.mxu0 0.0
    %574 = vmatprep.subr.mxu0 0.0
    %575 = vmatpush1.msra.mxu0 %v539
    %576 = vmatprep.subr.mxu0 0.0
    %577 = vmatpush2.msra.mxu0 0.0
    %578 = vmatprep.subr.mxu0 0.0
    %579 = vmatpush2.msra.mxu0 0.0
    %580 = vmatprep.subr.mxu0 0.0
    %581 = vmatpush2.msra.mxu0 0.0
    %582 = vmatprep.subr.mxu0 0.0
    %583 = vmatpush2.msra.mxu0 0.0
    %584 = vmatprep.subr.mxu0 0.0
    %585 = vmatpush2.msra.mxu0 0.0
    %586 = vmatprep.subr.mxu0 0.0
    %587 = vmatpush2.msra.mxu0 0.0
    %588 = vmatprep.subr.mxu0 0.0
    %589 = vmatpush2.msra.mxu0 0.0
    %590 = vmatprep.subr.mxu0 0.0
    %591 = vmatpush2.msra.mxu0 0.0
    %592 = vmatprep.subr.mxu0 0.0
    %593 = vmatpush2.msra.mxu0 0.0
    %594 = vmatprep.subr.mxu0 0.0
    %595 = vmatpush2.msra.mxu0 0.0
    %596 = vmatprep.subr.mxu0 0.0
    %597 = vmatpush2.msra.mxu0 0.0
    %598 = vmatprep.subr.mxu0 0.0
    %599 = vmatpush2.msra.mxu0 0.0
    %600 = vmatprep.subr.mxu0 0.0
    %601 = vmatpush2.msra.mxu0 0.0
    %602 = vmatprep.subr.mxu0 0.0
    %603 = vmatpush2.msra.mxu0 0.0
    %604 = vmatprep.subr.mxu0 0.0
    %605 = vmatpush2.msra.mxu0 0.0
    %606 = vmatprep.subr.mxu0 0.0
    %607 = vmatpush2.msra.mxu0 0.0
    %608 = vmatprep.mubr.f32.mxu0 0.0
    %609 = vmatmul.mubr.f32.gmra.mxu0 %v542
    %v610 = vpop.f32.mrf.mxu0
    %v611 = vadd.f32 0.0, %v610
    %v612 = vpop.f32.mrf.mxu0
    %613 = vdwg.mxu0
    %614 = vrot.lane.b32.xlu0 %v277, 120
    %v615 = vpop.permute.xlu0 %614
    %616 = vrot.lane.b32.xlu0 %v277, 88
    %v617 = vpop.permute.xlu0 %616
    %v618 = vsel %vm288, %v615, 0
    %v620 = vsel %vm288, %v617, 0
    %622 = vmatprep.subr.mxu0 0.0
    %623 = vmatpush1.xpose.msra.mxu0 0.0
    %624 = vmatprep.subr.mxu0 0.0
    %625 = vmatpush1.xpose.msra.mxu0 0.0
    %626 = vmatprep.subr.mxu0 0.0
    %627 = vmatpush1.xpose.msra.mxu0 0.0
    %628 = vmatprep.subr.mxu0 0.0
    %629 = vmatpush1.xpose.msra.mxu0 0.0
    %630 = vmatprep.subr.mxu0 0.0
    %631 = vmatpush1.xpose.msra.mxu0 0.0
    %632 = vmatprep.subr.mxu0 0.0
    %633 = vmatpush1.xpose.msra.mxu0 0.0
    %634 = vmatprep.subr.mxu0 0.0
    %635 = vmatpush1.xpose.msra.mxu0 0.0
    %636 = vmatprep.subr.mxu0 0.0
    %637 = vmatpush1.xpose.msra.mxu0 0.0
    %638 = vmatprep.subr.mxu0 0.0
    %639 = vmatpush1.xpose.msra.mxu0 0.0
    %640 = vmatprep.subr.mxu0 0.0
    %641 = vmatpush1.xpose.msra.mxu0 0.0
    %642 = vmatprep.subr.mxu0 0.0
    %643 = vmatpush1.xpose.msra.mxu0 0.0
    %644 = vmatprep.subr.mxu0 0.0
    %645 = vmatpush1.xpose.msra.mxu0 0.0
    %646 = vmatprep.subr.mxu0 0.0
    %647 = vmatpush1.xpose.msra.mxu0 0.0
    %648 = vmatprep.subr.mxu0 0.0
    %649 = vmatpush1.xpose.msra.mxu0 0.0
    %650 = vmatprep.subr.mxu0 0.0
    %651 = vmatpush1.xpose.msra.mxu0 0.0
    %652 = vmatprep.subr.mxu0 0.0
    %653 = vmatpush1.xpose.msra.mxu0 %v620
    %654 = vmatprep.subr.mxu0 0.0
    %655 = vmatpush2.xpose.msra.mxu0 0.0
    %656 = vmatprep.subr.mxu0 0.0
    %657 = vmatpush2.xpose.msra.mxu0 0.0
    %658 = vmatprep.subr.mxu0 0.0
    %659 = vmatpush2.xpose.msra.mxu0 0.0
    %660 = vmatprep.subr.mxu0 0.0
    %661 = vmatpush2.xpose.msra.mxu0 0.0
    %662 = vmatprep.subr.mxu0 0.0
    %663 = vmatpush2.xpose.msra.mxu0 0.0
    %664 = vmatprep.subr.mxu0 0.0
    %665 = vmatpush2.xpose.msra.mxu0 0.0
    %666 = vmatprep.subr.mxu0 0.0
    %667 = vmatpush2.xpose.msra.mxu0 0.0
    %668 = vmatprep.subr.mxu0 0.0
    %669 = vmatpush2.xpose.msra.mxu0 0.0
    %670 = vmatprep.subr.mxu0 0.0
    %671 = vmatpush2.xpose.msra.mxu0 0.0
    %672 = vmatprep.subr.mxu0 0.0
    %673 = vmatpush2.xpose.msra.mxu0 0.0
    %674 = vmatprep.subr.mxu0 0.0
    %675 = vmatpush2.xpose.msra.mxu0 0.0
    %676 = vmatprep.subr.mxu0 0.0
    %677 = vmatpush2.xpose.msra.mxu0 0.0
    %678 = vmatprep.subr.mxu0 0.0
    %679 = vmatpush2.xpose.msra.mxu0 0.0
    %680 = vmatprep.subr.mxu0 0.0
    %681 = vmatpush2.xpose.msra.mxu0 0.0
    %682 = vmatprep.subr.mxu0 0.0
    %683 = vmatpush2.xpose.msra.mxu0 0.0
    %684 = vmatprep.subr.mxu0 0.0
    %685 = vmatpush2.xpose.msra.mxu0 0.0
    %686 = vmatprep.mubr.f32.mxu0 0.0
    %687 = vmatmul.mubr.f32.gmra.mxu0 %v618
    %v688 = vpop.f32.mrf.mxu0
    %v689 = vadd.f32 %v158, %v688
    %v690 = vpop.f32.mrf.mxu0
    %691 = vdwg.mxu0
    %692 = vrot.lane.b32.xlu0 %v282, 120
    %v693 = vpop.permute.xlu0 %692
    %694 = vrot.lane.b32.xlu0 %v282, 88
    %v695 = vpop.permute.xlu0 %694
    %v696 = vsel %vm288, %v693, 0
    %v698 = vsel %vm288, %v695, 0
    %700 = vmatprep.subr.mxu0 0.0
    %701 = vmatpush1.xpose.msra.mxu0 0.0
    %702 = vmatprep.subr.mxu0 0.0
    %703 = vmatpush1.xpose.msra.mxu0 0.0
    %704 = vmatprep.subr.mxu0 0.0
    %705 = vmatpush1.xpose.msra.mxu0 0.0
    %706 = vmatprep.subr.mxu0 0.0
    %707 = vmatpush1.xpose.msra.mxu0 0.0
    %708 = vmatprep.subr.mxu0 0.0
    %709 = vmatpush1.xpose.msra.mxu0 0.0
    %710 = vmatprep.subr.mxu0 0.0
    %711 = vmatpush1.xpose.msra.mxu0 0.0
    %712 = vmatprep.subr.mxu0 0.0
    %713 = vmatpush1.xpose.msra.mxu0 0.0
    %714 = vmatprep.subr.mxu0 0.0
    %715 = vmatpush1.xpose.msra.mxu0 0.0
    %716 = vmatprep.subr.mxu0 0.0
    %717 = vmatpush1.xpose.msra.mxu0 0.0
    %718 = vmatprep.subr.mxu0 0.0
    %719 = vmatpush1.xpose.msra.mxu0 0.0
    %720 = vmatprep.subr.mxu0 0.0
    %721 = vmatpush1.xpose.msra.mxu0 0.0
    %722 = vmatprep.subr.mxu0 0.0
    %723 = vmatpush1.xpose.msra.mxu0 0.0
    %724 = vmatprep.subr.mxu0 0.0
    %725 = vmatpush1.xpose.msra.mxu0 0.0
    %726 = vmatprep.subr.mxu0 0.0
    %727 = vmatpush1.xpose.msra.mxu0 0.0
    %728 = vmatprep.subr.mxu0 0.0
    %729 = vmatpush1.xpose.msra.mxu0 0.0
    %730 = vmatprep.subr.mxu0 0.0
    %731 = vmatpush1.xpose.msra.mxu0 %v698
    %732 = vmatprep.subr.mxu0 0.0
    %733 = vmatpush2.xpose.msra.mxu0 0.0
    %734 = vmatprep.subr.mxu0 0.0
    %735 = vmatpush2.xpose.msra.mxu0 0.0
    %736 = vmatprep.subr.mxu0 0.0
    %737 = vmatpush2.xpose.msra.mxu0 0.0
    %738 = vmatprep.subr.mxu0 0.0
    %739 = vmatpush2.xpose.msra.mxu0 0.0
    %740 = vmatprep.subr.mxu0 0.0
    %741 = vmatpush2.xpose.msra.mxu0 0.0
    %742 = vmatprep.subr.mxu0 0.0
    %743 = vmatpush2.xpose.msra.mxu0 0.0
    %744 = vmatprep.subr.mxu0 0.0
    %745 = vmatpush2.xpose.msra.mxu0 0.0
    %746 = vmatprep.subr.mxu0 0.0
    %747 = vmatpush2.xpose.msra.mxu0 0.0
    %748 = vmatprep.subr.mxu0 0.0
    %749 = vmatpush2.xpose.msra.mxu0 0.0
    %750 = vmatprep.subr.mxu0 0.0
    %751 = vmatpush2.xpose.msra.mxu0 0.0
    %752 = vmatprep.subr.mxu0 0.0
    %753 = vmatpush2.xpose.msra.mxu0 0.0
    %754 = vmatprep.subr.mxu0 0.0
    %755 = vmatpush2.xpose.msra.mxu0 0.0
    %756 = vmatprep.subr.mxu0 0.0
    %757 = vmatpush2.xpose.msra.mxu0 0.0
    %758 = vmatprep.subr.mxu0 0.0
    %759 = vmatpush2.xpose.msra.mxu0 0.0
    %760 = vmatprep.subr.mxu0 0.0
    %761 = vmatpush2.xpose.msra.mxu0 0.0
    %762 = vmatprep.subr.mxu0 0.0
    %763 = vmatpush2.xpose.msra.mxu0 0.0
    %764 = vmatprep.mubr.f32.mxu0 0.0
    %765 = vmatmul.mubr.f32.gmra.mxu0 %v696
    %v766 = vpop.f32.mrf.mxu0
    %v767 = vadd.f32 %v158, %v766
    %v768 = vpop.f32.mrf.mxu0
    %769 = vdwg.mxu0
    %v770 = vsel %vm288, %v689, -inf
    %771 = vmax.xlane.f32.xlu0 %v770
    %v772 = vpop.xlane.xlu0 %771
    %v773 = vsel %vm288, %v767, -inf
    %774 = vmax.xlane.f32.xlu0 %v773
    %v775 = vpop.xlane.xlu0 %774
    %v776 = vsub.f32 %v689, %v772
    %v777 = vsub.f32 %v767, %v775
    %v778 = vmul.f32 %v776, 1.442695
    %v779 = vpow.pop %v778
    %v780 = vmul.f32 %v777, 1.442695
    %v781 = vpow.pop %v780
    %v782 = vsel %vm288, %v779, 0.0
    %783 = vadd.xlane.f32.xlu0 %v782
    %v784 = vpop.xlane.xlu0 %783
    %v785 = vsel %vm288, %v781, 0.0
    %786 = vadd.xlane.f32.xlu0 %v785
    %v787 = vpop.xlane.xlu0 %786
    %v788 = vrcp.pop %v784
    %v789 = vmul.f32 %v779, %v788
    %v790 = vrcp.pop %v787
    %v791 = vmul.f32 %v781, %v790
    %792 = vrot.lane.b32.xlu0 %v277, 56
    %v793 = vpop.permute.xlu0 %792
    %v796 = vsel %vm288, %v789, 0
    %798 = vmatprep.subr.mxu0 0.0
    %799 = vmatpush1.msra.mxu0 0.0
    %800 = vmatprep.subr.mxu0 0.0
    %801 = vmatpush1.msra.mxu0 0.0
    %802 = vmatprep.subr.mxu0 0.0
    %803 = vmatpush1.msra.mxu0 0.0
    %804 = vmatprep.subr.mxu0 0.0
    %805 = vmatpush1.msra.mxu0 0.0
    %806 = vmatprep.subr.mxu0 0.0
    %807 = vmatpush1.msra.mxu0 0.0
    %808 = vmatprep.subr.mxu0 0.0
    %809 = vmatpush1.msra.mxu0 0.0
    %810 = vmatprep.subr.mxu0 0.0
    %811 = vmatpush1.msra.mxu0 0.0
    %812 = vmatprep.subr.mxu0 0.0
    %813 = vmatpush1.msra.mxu0 0.0
    %814 = vmatprep.subr.mxu0 0.0
    %815 = vmatpush1.msra.mxu0 0.0
    %816 = vmatprep.subr.mxu0 0.0
    %817 = vmatpush1.msra.mxu0 0.0
    %818 = vmatprep.subr.mxu0 0.0
    %819 = vmatpush1.msra.mxu0 0.0
    %820 = vmatprep.subr.mxu0 0.0
    %821 = vmatpush1.msra.mxu0 0.0
    %822 = vmatprep.subr.mxu0 0.0
    %823 = vmatpush1.msra.mxu0 0.0
    %824 = vmatprep.subr.mxu0 0.0
    %825 = vmatpush1.msra.mxu0 0.0
    %826 = vmatprep.subr.mxu0 0.0
    %827 = vmatpush1.msra.mxu0 0.0
    %828 = vmatprep.subr.mxu0 0.0
    %829 = vmatpush1.msra.mxu0 %v793
    %830 = vmatprep.subr.mxu0 0.0
    %831 = vmatpush2.msra.mxu0 0.0
    %832 = vmatprep.subr.mxu0 0.0
    %833 = vmatpush2.msra.mxu0 0.0
    %834 = vmatprep.subr.mxu0 0.0
    %835 = vmatpush2.msra.mxu0 0.0
    %836 = vmatprep.subr.mxu0 0.0
    %837 = vmatpush2.msra.mxu0 0.0
    %838 = vmatprep.subr.mxu0 0.0
    %839 = vmatpush2.msra.mxu0 0.0
    %840 = vmatprep.subr.mxu0 0.0
    %841 = vmatpush2.msra.mxu0 0.0
    %842 = vmatprep.subr.mxu0 0.0
    %843 = vmatpush2.msra.mxu0 0.0
    %844 = vmatprep.subr.mxu0 0.0
    %845 = vmatpush2.msra.mxu0 0.0
    %846 = vmatprep.subr.mxu0 0.0
    %847 = vmatpush2.msra.mxu0 0.0
    %848 = vmatprep.subr.mxu0 0.0
    %849 = vmatpush2.msra.mxu0 0.0
    %850 = vmatprep.subr.mxu0 0.0
    %851 = vmatpush2.msra.mxu0 0.0
    %852 = vmatprep.subr.mxu0 0.0
    %853 = vmatpush2.msra.mxu0 0.0
    %854 = vmatprep.subr.mxu0 0.0
    %855 = vmatpush2.msra.mxu0 0.0
    %856 = vmatprep.subr.mxu0 0.0
    %857 = vmatpush2.msra.mxu0 0.0
    %858 = vmatprep.subr.mxu0 0.0
    %859 = vmatpush2.msra.mxu0 0.0
    %860 = vmatprep.subr.mxu0 0.0
    %861 = vmatpush2.msra.mxu0 0.0
    %862 = vmatprep.mubr.f32.mxu0 0.0
    %863 = vmatmul.mubr.f32.gmra.mxu0 %v796
    %v864 = vpop.f32.mrf.mxu0
    %v865 = vadd.f32 0.0, %v864
    %v866 = vpop.f32.mrf.mxu0
    %867 = vdwg.mxu0
    %868 = vrot.lane.b32.xlu0 %v282, 56
    %v869 = vpop.permute.xlu0 %868
    %v872 = vsel %vm288, %v791, 0
    %874 = vmatprep.subr.mxu0 0.0
    %875 = vmatpush1.msra.mxu0 0.0
    %876 = vmatprep.subr.mxu0 0.0
    %877 = vmatpush1.msra.mxu0 0.0
    %878 = vmatprep.subr.mxu0 0.0
    %879 = vmatpush1.msra.mxu0 0.0
    %880 = vmatprep.subr.mxu0 0.0
    %881 = vmatpush1.msra.mxu0 0.0
    %882 = vmatprep.subr.mxu0 0.0
    %883 = vmatpush1.msra.mxu0 0.0
    %884 = vmatprep.subr.mxu0 0.0
    %885 = vmatpush1.msra.mxu0 0.0
    %886 = vmatprep.subr.mxu0 0.0
    %887 = vmatpush1.msra.mxu0 0.0
    %888 = vmatprep.subr.mxu0 0.0
    %889 = vmatpush1.msra.mxu0 0.0
    %890 = vmatprep.subr.mxu0 0.0
    %891 = vmatpush1.msra.mxu0 0.0
    %892 = vmatprep.subr.mxu0 0.0
    %893 = vmatpush1.msra.mxu0 0.0
    %894 = vmatprep.subr.mxu0 0.0
    %895 = vmatpush1.msra.mxu0 0.0
    %896 = vmatprep.subr.mxu0 0.0
    %897 = vmatpush1.msra.mxu0 0.0
    %898 = vmatprep.subr.mxu0 0.0
    %899 = vmatpush1.msra.mxu0 0.0
    %900 = vmatprep.subr.mxu0 0.0
    %901 = vmatpush1.msra.mxu0 0.0
    %902 = vmatprep.subr.mxu0 0.0
    %903 = vmatpush1.msra.mxu0 0.0
    %904 = vmatprep.subr.mxu0 0.0
    %905 = vmatpush1.msra.mxu0 %v869
    %906 = vmatprep.subr.mxu0 0.0
    %907 = vmatpush2.msra.mxu0 0.0
    %908 = vmatprep.subr.mxu0 0.0
    %909 = vmatpush2.msra.mxu0 0.0
    %910 = vmatprep.subr.mxu0 0.0
    %911 = vmatpush2.msra.mxu0 0.0
    %912 = vmatprep.subr.mxu0 0.0
    %913 = vmatpush2.msra.mxu0 0.0
    %914 = vmatprep.subr.mxu0 0.0
    %915 = vmatpush2.msra.mxu0 0.0
    %916 = vmatprep.subr.mxu0 0.0
    %917 = vmatpush2.msra.mxu0 0.0
    %918 = vmatprep.subr.mxu0 0.0
    %919 = vmatpush2.msra.mxu0 0.0
    %920 = vmatprep.subr.mxu0 0.0
    %921 = vmatpush2.msra.mxu0 0.0
    %922 = vmatprep.subr.mxu0 0.0
    %923 = vmatpush2.msra.mxu0 0.0
    %924 = vmatprep.subr.mxu0 0.0
    %925 = vmatpush2.msra.mxu0 0.0
    %926 = vmatprep.subr.mxu0 0.0
    %927 = vmatpush2.msra.mxu0 0.0
    %928 = vmatprep.subr.mxu0 0.0
    %929 = vmatpush2.msra.mxu0 0.0
    %930 = vmatprep.subr.mxu0 0.0
    %931 = vmatpush2.msra.mxu0 0.0
    %932 = vmatprep.subr.mxu0 0.0
    %933 = vmatpush2.msra.mxu0 0.0
    %934 = vmatprep.subr.mxu0 0.0
    %935 = vmatpush2.msra.mxu0 0.0
    %936 = vmatprep.subr.mxu0 0.0
    %937 = vmatpush2.msra.mxu0 0.0
    %938 = vmatprep.mubr.f32.mxu0 0.0
    %939 = vmatmul.mubr.f32.gmra.mxu0 %v872
    %v940 = vpop.f32.mrf.mxu0
    %v941 = vadd.f32 0.0, %v940
    %v942 = vpop.f32.mrf.mxu0
    %943 = vdwg.mxu0
    %944 = vrot.lane.b32.xlu0 %v277, 112
    %v945 = vpop.permute.xlu0 %944
    %946 = vrot.lane.b32.xlu0 %v277, 80
    %v947 = vpop.permute.xlu0 %946
    %v948 = vsel %vm288, %v945, 0
    %v950 = vsel %vm288, %v947, 0
    %952 = vmatprep.subr.mxu0 0.0
    %953 = vmatpush1.xpose.msra.mxu0 0.0
    %954 = vmatprep.subr.mxu0 0.0
    %955 = vmatpush1.xpose.msra.mxu0 0.0
    %956 = vmatprep.subr.mxu0 0.0
    %957 = vmatpush1.xpose.msra.mxu0 0.0
    %958 = vmatprep.subr.mxu0 0.0
    %959 = vmatpush1.xpose.msra.mxu0 0.0
    %960 = vmatprep.subr.mxu0 0.0
    %961 = vmatpush1.xpose.msra.mxu0 0.0
    %962 = vmatprep.subr.mxu0 0.0
    %963 = vmatpush1.xpose.msra.mxu0 0.0
    %964 = vmatprep.subr.mxu0 0.0
    %965 = vmatpush1.xpose.msra.mxu0 0.0
    %966 = vmatprep.subr.mxu0 0.0
    %967 = vmatpush1.xpose.msra.mxu0 0.0
    %968 = vmatprep.subr.mxu0 0.0
    %969 = vmatpush1.xpose.msra.mxu0 0.0
    %970 = vmatprep.subr.mxu0 0.0
    %971 = vmatpush1.xpose.msra.mxu0 0.0
    %972 = vmatprep.subr.mxu0 0.0
    %973 = vmatpush1.xpose.msra.mxu0 0.0
    %974 = vmatprep.subr.mxu0 0.0
    %975 = vmatpush1.xpose.msra.mxu0 0.0
    %976 = vmatprep.subr.mxu0 0.0
    %977 = vmatpush1.xpose.msra.mxu0 0.0
    %978 = vmatprep.subr.mxu0 0.0
    %979 = vmatpush1.xpose.msra.mxu0 0.0
    %980 = vmatprep.subr.mxu0 0.0
    %981 = vmatpush1.xpose.msra.mxu0 0.0
    %982 = vmatprep.subr.mxu0 0.0
    %983 = vmatpush1.xpose.msra.mxu0 %v950
    %984 = vmatprep.subr.mxu0 0.0
    %985 = vmatpush2.xpose.msra.mxu0 0.0
    %986 = vmatprep.subr.mxu0 0.0
    %987 = vmatpush2.xpose.msra.mxu0 0.0
    %988 = vmatprep.subr.mxu0 0.0
    %989 = vmatpush2.xpose.msra.mxu0 0.0
    %990 = vmatprep.subr.mxu0 0.0
    %991 = vmatpush2.xpose.msra.mxu0 0.0
    %992 = vmatprep.subr.mxu0 0.0
    %993 = vmatpush2.xpose.msra.mxu0 0.0
    %994 = vmatprep.subr.mxu0 0.0
    %995 = vmatpush2.xpose.msra.mxu0 0.0
    %996 = vmatprep.subr.mxu0 0.0
    %997 = vmatpush2.xpose.msra.mxu0 0.0
    %998 = vmatprep.subr.mxu0 0.0
    %999 = vmatpush2.xpose.msra.mxu0 0.0
    %1000 = vmatprep.subr.mxu0 0.0
    %1001 = vmatpush2.xpose.msra.mxu0 0.0
    %1002 = vmatprep.subr.mxu0 0.0
    %1003 = vmatpush2.xpose.msra.mxu0 0.0
    %1004 = vmatprep.subr.mxu0 0.0
    %1005 = vmatpush2.xpose.msra.mxu0 0.0
    %1006 = vmatprep.subr.mxu0 0.0
    %1007 = vmatpush2.xpose.msra.mxu0 0.0
    %1008 = vmatprep.subr.mxu0 0.0
    %1009 = vmatpush2.xpose.msra.mxu0 0.0
    %1010 = vmatprep.subr.mxu0 0.0
    %1011 = vmatpush2.xpose.msra.mxu0 0.0
    %1012 = vmatprep.subr.mxu0 0.0
    %1013 = vmatpush2.xpose.msra.mxu0 0.0
    %1014 = vmatprep.subr.mxu0 0.0
    %1015 = vmatpush2.xpose.msra.mxu0 0.0
    %1016 = vmatprep.mubr.f32.mxu0 0.0
    %1017 = vmatmul.mubr.f32.gmra.mxu0 %v948
    %v1018 = vpop.f32.mrf.mxu0
    %v1019 = vadd.f32 %v158, %v1018
    %v1020 = vpop.f32.mrf.mxu0
    %1021 = vdwg.mxu0
    %1022 = vrot.lane.b32.xlu0 %v282, 112
    %v1023 = vpop.permute.xlu0 %1022
    %1024 = vrot.lane.b32.xlu0 %v282, 80
    %v1025 = vpop.permute.xlu0 %1024
    %v1026 = vsel %vm288, %v1023, 0
    %v1028 = vsel %vm288, %v1025, 0
    %1030 = vmatprep.subr.mxu0 0.0
    %1031 = vmatpush1.xpose.msra.mxu0 0.0
    %1032 = vmatprep.subr.mxu0 0.0
    %1033 = vmatpush1.xpose.msra.mxu0 0.0
    %1034 = vmatprep.subr.mxu0 0.0
    %1035 = vmatpush1.xpose.msra.mxu0 0.0
    %1036 = vmatprep.subr.mxu0 0.0
    %1037 = vmatpush1.xpose.msra.mxu0 0.0
    %1038 = vmatprep.subr.mxu0 0.0
    %1039 = vmatpush1.xpose.msra.mxu0 0.0
    %1040 = vmatprep.subr.mxu0 0.0
    %1041 = vmatpush1.xpose.msra.mxu0 0.0
    %1042 = vmatprep.subr.mxu0 0.0
    %1043 = vmatpush1.xpose.msra.mxu0 0.0
    %1044 = vmatprep.subr.mxu0 0.0
    %1045 = vmatpush1.xpose.msra.mxu0 0.0
    %1046 = vmatprep.subr.mxu0 0.0
    %1047 = vmatpush1.xpose.msra.mxu0 0.0
    %1048 = vmatprep.subr.mxu0 0.0
    %1049 = vmatpush1.xpose.msra.mxu0 0.0
    %1050 = vmatprep.subr.mxu0 0.0
    %1051 = vmatpush1.xpose.msra.mxu0 0.0
    %1052 = vmatprep.subr.mxu0 0.0
    %1053 = vmatpush1.xpose.msra.mxu0 0.0
    %1054 = vmatprep.subr.mxu0 0.0
    %1055 = vmatpush1.xpose.msra.mxu0 0.0
    %1056 = vmatprep.subr.mxu0 0.0
    %1057 = vmatpush1.xpose.msra.mxu0 0.0
    %1058 = vmatprep.subr.mxu0 0.0
    %1059 = vmatpush1.xpose.msra.mxu0 0.0
    %1060 = vmatprep.subr.mxu0 0.0
    %1061 = vmatpush1.xpose.msra.mxu0 %v1028
    %1062 = vmatprep.subr.mxu0 0.0
    %1063 = vmatpush2.xpose.msra.mxu0 0.0
    %1064 = vmatprep.subr.mxu0 0.0
    %1065 = vmatpush2.xpose.msra.mxu0 0.0
    %1066 = vmatprep.subr.mxu0 0.0
    %1067 = vmatpush2.xpose.msra.mxu0 0.0
    %1068 = vmatprep.subr.mxu0 0.0
    %1069 = vmatpush2.xpose.msra.mxu0 0.0
    %1070 = vmatprep.subr.mxu0 0.0
    %1071 = vmatpush2.xpose.msra.mxu0 0.0
    %1072 = vmatprep.subr.mxu0 0.0
    %1073 = vmatpush2.xpose.msra.mxu0 0.0
    %1074 = vmatprep.subr.mxu0 0.0
    %1075 = vmatpush2.xpose.msra.mxu0 0.0
    %1076 = vmatprep.subr.mxu0 0.0
    %1077 = vmatpush2.xpose.msra.mxu0 0.0
    %1078 = vmatprep.subr.mxu0 0.0
    %1079 = vmatpush2.xpose.msra.mxu0 0.0
    %1080 = vmatprep.subr.mxu0 0.0
    %1081 = vmatpush2.xpose.msra.mxu0 0.0
    %1082 = vmatprep.subr.mxu0 0.0
    %1083 = vmatpush2.xpose.msra.mxu0 0.0
    %1084 = vmatprep.subr.mxu0 0.0
    %1085 = vmatpush2.xpose.msra.mxu0 0.0
    %1086 = vmatprep.subr.mxu0 0.0
    %1087 = vmatpush2.xpose.msra.mxu0 0.0
    %1088 = vmatprep.subr.mxu0 0.0
    %1089 = vmatpush2.xpose.msra.mxu0 0.0
    %1090 = vmatprep.subr.mxu0 0.0
    %1091 = vmatpush2.xpose.msra.mxu0 0.0
    %1092 = vmatprep.subr.mxu0 0.0
    %1093 = vmatpush2.xpose.msra.mxu0 0.0
    %1094 = vmatprep.mubr.f32.mxu0 0.0
    %1095 = vmatmul.mubr.f32.gmra.mxu0 %v1026
    %v1096 = vpop.f32.mrf.mxu0
    %v1097 = vadd.f32 %v158, %v1096
    %v1098 = vpop.f32.mrf.mxu0
    %1099 = vdwg.mxu0
    %v1100 = vsel %vm288, %v1019, -inf
    %1101 = vmax.xlane.f32.xlu0 %v1100
    %v1102 = vpop.xlane.xlu0 %1101
    %v1103 = vsel %vm288, %v1097, -inf
    %1104 = vmax.xlane.f32.xlu0 %v1103
    %v1105 = vpop.xlane.xlu0 %1104
    %v1106 = vsub.f32 %v1019, %v1102
    %v1107 = vsub.f32 %v1097, %v1105
    %v1108 = vmul.f32 %v1106, 1.442695
    %v1109 = vpow.pop %v1108
    %v1110 = vmul.f32 %v1107, 1.442695
    %v1111 = vpow.pop %v1110
    %v1112 = vsel %vm288, %v1109, 0.0
    %1113 = vadd.xlane.f32.xlu0 %v1112
    %v1114 = vpop.xlane.xlu0 %1113
    %v1115 = vsel %vm288, %v1111, 0.0
    %1116 = vadd.xlane.f32.xlu0 %v1115
    %v1117 = vpop.xlane.xlu0 %1116
    %v1118 = vrcp.pop %v1114
    %v1119 = vmul.f32 %v1109, %v1118
    %v1120 = vrcp.pop %v1117
    %v1121 = vmul.f32 %v1111, %v1120
    %1122 = vrot.lane.b32.xlu0 %v277, 48
    %v1123 = vpop.permute.xlu0 %1122
    %v1126 = vsel %vm288, %v1119, 0
    %1128 = vmatprep.subr.mxu0 0.0
    %1129 = vmatpush1.msra.mxu0 0.0
    %1130 = vmatprep.subr.mxu0 0.0
    %1131 = vmatpush1.msra.mxu0 0.0
    %1132 = vmatprep.subr.mxu0 0.0
    %1133 = vmatpush1.msra.mxu0 0.0
    %1134 = vmatprep.subr.mxu0 0.0
    %1135 = vmatpush1.msra.mxu0 0.0
    %1136 = vmatprep.subr.mxu0 0.0
    %1137 = vmatpush1.msra.mxu0 0.0
    %1138 = vmatprep.subr.mxu0 0.0
    %1139 = vmatpush1.msra.mxu0 0.0
    %1140 = vmatprep.subr.mxu0 0.0
    %1141 = vmatpush1.msra.mxu0 0.0
    %1142 = vmatprep.subr.mxu0 0.0
    %1143 = vmatpush1.msra.mxu0 0.0
    %1144 = vmatprep.subr.mxu0 0.0
    %1145 = vmatpush1.msra.mxu0 0.0
    %1146 = vmatprep.subr.mxu0 0.0
    %1147 = vmatpush1.msra.mxu0 0.0
    %1148 = vmatprep.subr.mxu0 0.0
    %1149 = vmatpush1.msra.mxu0 0.0
    %1150 = vmatprep.subr.mxu0 0.0
    %1151 = vmatpush1.msra.mxu0 0.0
    %1152 = vmatprep.subr.mxu0 0.0
    %1153 = vmatpush1.msra.mxu0 0.0
    %1154 = vmatprep.subr.mxu0 0.0
    %1155 = vmatpush1.msra.mxu0 0.0
    %1156 = vmatprep.subr.mxu0 0.0
    %1157 = vmatpush1.msra.mxu0 0.0
    %1158 = vmatprep.subr.mxu0 0.0
    %1159 = vmatpush1.msra.mxu0 %v1123
    %1160 = vmatprep.subr.mxu0 0.0
    %1161 = vmatpush2.msra.mxu0 0.0
    %1162 = vmatprep.subr.mxu0 0.0
    %1163 = vmatpush2.msra.mxu0 0.0
    %1164 = vmatprep.subr.mxu0 0.0
    %1165 = vmatpush2.msra.mxu0 0.0
    %1166 = vmatprep.subr.mxu0 0.0
    %1167 = vmatpush2.msra.mxu0 0.0
    %1168 = vmatprep.subr.mxu0 0.0
    %1169 = vmatpush2.msra.mxu0 0.0
    %1170 = vmatprep.subr.mxu0 0.0
    %1171 = vmatpush2.msra.mxu0 0.0
    %1172 = vmatprep.subr.mxu0 0.0
    %1173 = vmatpush2.msra.mxu0 0.0
    %1174 = vmatprep.subr.mxu0 0.0
    %1175 = vmatpush2.msra.mxu0 0.0
    %1176 = vmatprep.subr.mxu0 0.0
    %1177 = vmatpush2.msra.mxu0 0.0
    %1178 = vmatprep.subr.mxu0 0.0
    %1179 = vmatpush2.msra.mxu0 0.0
    %1180 = vmatprep.subr.mxu0 0.0
    %1181 = vmatpush2.msra.mxu0 0.0
    %1182 = vmatprep.subr.mxu0 0.0
    %1183 = vmatpush2.msra.mxu0 0.0
    %1184 = vmatprep.subr.mxu0 0.0
    %1185 = vmatpush2.msra.mxu0 0.0
    %1186 = vmatprep.subr.mxu0 0.0
    %1187 = vmatpush2.msra.mxu0 0.0
    %1188 = vmatprep.subr.mxu0 0.0
    %1189 = vmatpush2.msra.mxu0 0.0
    %1190 = vmatprep.subr.mxu0 0.0
    %1191 = vmatpush2.msra.mxu0 0.0
    %1192 = vmatprep.mubr.f32.mxu0 0.0
    %1193 = vmatmul.mubr.f32.gmra.mxu0 %v1126
    %v1194 = vpop.f32.mrf.mxu0
    %v1195 = vadd.f32 0.0, %v1194
    %v1196 = vpop.f32.mrf.mxu0
    %1197 = vdwg.mxu0
    %1198 = vrot.lane.b32.xlu0 %v282, 48
    %v1199 = vpop.permute.xlu0 %1198
    %v1202 = vsel %vm288, %v1121, 0
    %1204 = vmatprep.subr.mxu0 0.0
    %1205 = vmatpush1.msra.mxu0 0.0
    %1206 = vmatprep.subr.mxu0 0.0
    %1207 = vmatpush1.msra.mxu0 0.0
    %1208 = vmatprep.subr.mxu0 0.0
    %1209 = vmatpush1.msra.mxu0 0.0
    %1210 = vmatprep.subr.mxu0 0.0
    %1211 = vmatpush1.msra.mxu0 0.0
    %1212 = vmatprep.subr.mxu0 0.0
    %1213 = vmatpush1.msra.mxu0 0.0
    %1214 = vmatprep.subr.mxu0 0.0
    %1215 = vmatpush1.msra.mxu0 0.0
    %1216 = vmatprep.subr.mxu0 0.0
    %1217 = vmatpush1.msra.mxu0 0.0
    %1218 = vmatprep.subr.mxu0 0.0
    %1219 = vmatpush1.msra.mxu0 0.0
    %1220 = vmatprep.subr.mxu0 0.0
    %1221 = vmatpush1.msra.mxu0 0.0
    %1222 = vmatprep.subr.mxu0 0.0
    %1223 = vmatpush1.msra.mxu0 0.0
    %1224 = vmatprep.subr.mxu0 0.0
    %1225 = vmatpush1.msra.mxu0 0.0
    %1226 = vmatprep.subr.mxu0 0.0
    %1227 = vmatpush1.msra.mxu0 0.0
    %1228 = vmatprep.subr.mxu0 0.0
    %1229 = vmatpush1.msra.mxu0 0.0
    %1230 = vmatprep.subr.mxu0 0.0
    %1231 = vmatpush1.msra.mxu0 0.0
    %1232 = vmatprep.subr.mxu0 0.0
    %1233 = vmatpush1.msra.mxu0 0.0
    %1234 = vmatprep.subr.mxu0 0.0
    %1235 = vmatpush1.msra.mxu0 %v1199
    %1236 = vmatprep.subr.mxu0 0.0
    %1237 = vmatpush2.msra.mxu0 0.0
    %1238 = vmatprep.subr.mxu0 0.0
    %1239 = vmatpush2.msra.mxu0 0.0
    %1240 = vmatprep.subr.mxu0 0.0
    %1241 = vmatpush2.msra.mxu0 0.0
    %1242 = vmatprep.subr.mxu0 0.0
    %1243 = vmatpush2.msra.mxu0 0.0
    %1244 = vmatprep.subr.mxu0 0.0
    %1245 = vmatpush2.msra.mxu0 0.0
    %1246 = vmatprep.subr.mxu0 0.0
    %1247 = vmatpush2.msra.mxu0 0.0
    %1248 = vmatprep.subr.mxu0 0.0
    %1249 = vmatpush2.msra.mxu0 0.0
    %1250 = vmatprep.subr.mxu0 0.0
    %1251 = vmatpush2.msra.mxu0 0.0
    %1252 = vmatprep.subr.mxu0 0.0
    %1253 = vmatpush2.msra.mxu0 0.0
    %1254 = vmatprep.subr.mxu0 0.0
    %1255 = vmatpush2.msra.mxu0 0.0
    %1256 = vmatprep.subr.mxu0 0.0
    %1257 = vmatpush2.msra.mxu0 0.0
    %1258 = vmatprep.subr.mxu0 0.0
    %1259 = vmatpush2.msra.mxu0 0.0
    %1260 = vmatprep.subr.mxu0 0.0
    %1261 = vmatpush2.msra.mxu0 0.0
    %1262 = vmatprep.subr.mxu0 0.0
    %1263 = vmatpush2.msra.mxu0 0.0
    %1264 = vmatprep.subr.mxu0 0.0
    %1265 = vmatpush2.msra.mxu0 0.0
    %1266 = vmatprep.subr.mxu0 0.0
    %1267 = vmatpush2.msra.mxu0 0.0
    %1268 = vmatprep.mubr.f32.mxu0 0.0
    %1269 = vmatmul.mubr.f32.gmra.mxu0 %v1202
    %v1270 = vpop.f32.mrf.mxu0
    %v1271 = vadd.f32 0.0, %v1270
    %v1272 = vpop.f32.mrf.mxu0
    %1273 = vdwg.mxu0
    %1274 = vrot.lane.b32.xlu0 %v277, 104
    %v1275 = vpop.permute.xlu0 %1274
    %1276 = vrot.lane.b32.xlu0 %v277, 72
    %v1277 = vpop.permute.xlu0 %1276
    %v1278 = vsel %vm288, %v1275, 0
    %v1280 = vsel %vm288, %v1277, 0
    %1282 = vmatprep.subr.mxu0 0.0
    %1283 = vmatpush1.xpose.msra.mxu0 0.0
    %1284 = vmatprep.subr.mxu0 0.0
    %1285 = vmatpush1.xpose.msra.mxu0 0.0
    %1286 = vmatprep.subr.mxu0 0.0
    %1287 = vmatpush1.xpose.msra.mxu0 0.0
    %1288 = vmatprep.subr.mxu0 0.0
    %1289 = vmatpush1.xpose.msra.mxu0 0.0
    %1290 = vmatprep.subr.mxu0 0.0
    %1291 = vmatpush1.xpose.msra.mxu0 0.0
    %1292 = vmatprep.subr.mxu0 0.0
    %1293 = vmatpush1.xpose.msra.mxu0 0.0
    %1294 = vmatprep.subr.mxu0 0.0
    %1295 = vmatpush1.xpose.msra.mxu0 0.0
    %1296 = vmatprep.subr.mxu0 0.0
    %1297 = vmatpush1.xpose.msra.mxu0 0.0
    %1298 = vmatprep.subr.mxu0 0.0
    %1299 = vmatpush1.xpose.msra.mxu0 0.0
    %1300 = vmatprep.subr.mxu0 0.0
    %1301 = vmatpush1.xpose.msra.mxu0 0.0
    %1302 = vmatprep.subr.mxu0 0.0
    %1303 = vmatpush1.xpose.msra.mxu0 0.0
    %1304 = vmatprep.subr.mxu0 0.0
    %1305 = vmatpush1.xpose.msra.mxu0 0.0
    %1306 = vmatprep.subr.mxu0 0.0
    %1307 = vmatpush1.xpose.msra.mxu0 0.0
    %1308 = vmatprep.subr.mxu0 0.0
    %1309 = vmatpush1.xpose.msra.mxu0 0.0
    %1310 = vmatprep.subr.mxu0 0.0
    %1311 = vmatpush1.xpose.msra.mxu0 0.0
    %1312 = vmatprep.subr.mxu0 0.0
    %1313 = vmatpush1.xpose.msra.mxu0 %v1280
    %1314 = vmatprep.subr.mxu0 0.0
    %1315 = vmatpush2.xpose.msra.mxu0 0.0
    %1316 = vmatprep.subr.mxu0 0.0
    %1317 = vmatpush2.xpose.msra.mxu0 0.0
    %1318 = vmatprep.subr.mxu0 0.0
    %1319 = vmatpush2.xpose.msra.mxu0 0.0
    %1320 = vmatprep.subr.mxu0 0.0
    %1321 = vmatpush2.xpose.msra.mxu0 0.0
    %1322 = vmatprep.subr.mxu0 0.0
    %1323 = vmatpush2.xpose.msra.mxu0 0.0
    %1324 = vmatprep.subr.mxu0 0.0
    %1325 = vmatpush2.xpose.msra.mxu0 0.0
    %1326 = vmatprep.subr.mxu0 0.0
    %1327 = vmatpush2.xpose.msra.mxu0 0.0
    %1328 = vmatprep.subr.mxu0 0.0
    %1329 = vmatpush2.xpose.msra.mxu0 0.0
    %1330 = vmatprep.subr.mxu0 0.0
    %1331 = vmatpush2.xpose.msra.mxu0 0.0
    %1332 = vmatprep.subr.mxu0 0.0
    %1333 = vmatpush2.xpose.msra.mxu0 0.0
    %1334 = vmatprep.subr.mxu0 0.0
    %1335 = vmatpush2.xpose.msra.mxu0 0.0
    %1336 = vmatprep.subr.mxu0 0.0
    %1337 = vmatpush2.xpose.msra.mxu0 0.0
    %1338 = vmatprep.subr.mxu0 0.0
    %1339 = vmatpush2.xpose.msra.mxu0 0.0
    %1340 = vmatprep.subr.mxu0 0.0
    %1341 = vmatpush2.xpose.msra.mxu0 0.0
    %1342 = vmatprep.subr.mxu0 0.0
    %1343 = vmatpush2.xpose.msra.mxu0 0.0
    %1344 = vmatprep.subr.mxu0 0.0
    %1345 = vmatpush2.xpose.msra.mxu0 0.0
    %1346 = vmatprep.mubr.f32.mxu0 0.0
    %1347 = vmatmul.mubr.f32.gmra.mxu0 %v1278
    %v1348 = vpop.f32.mrf.mxu0
    %v1349 = vadd.f32 %v158, %v1348
    %v1350 = vpop.f32.mrf.mxu0
    %1351 = vdwg.mxu0
    %1352 = vrot.lane.b32.xlu0 %v282, 104
    %v1353 = vpop.permute.xlu0 %1352
    %1354 = vrot.lane.b32.xlu0 %v282, 72
    %v1355 = vpop.permute.xlu0 %1354
    %v1356 = vsel %vm288, %v1353, 0
    %v1358 = vsel %vm288, %v1355, 0
    %1360 = vmatprep.subr.mxu0 0.0
    %1361 = vmatpush1.xpose.msra.mxu0 0.0
    %1362 = vmatprep.subr.mxu0 0.0
    %1363 = vmatpush1.xpose.msra.mxu0 0.0
    %1364 = vmatprep.subr.mxu0 0.0
    %1365 = vmatpush1.xpose.msra.mxu0 0.0
    %1366 = vmatprep.subr.mxu0 0.0
    %1367 = vmatpush1.xpose.msra.mxu0 0.0
    %1368 = vmatprep.subr.mxu0 0.0
    %1369 = vmatpush1.xpose.msra.mxu0 0.0
    %1370 = vmatprep.subr.mxu0 0.0
    %1371 = vmatpush1.xpose.msra.mxu0 0.0
    %1372 = vmatprep.subr.mxu0 0.0
    %1373 = vmatpush1.xpose.msra.mxu0 0.0
    %1374 = vmatprep.subr.mxu0 0.0
    %1375 = vmatpush1.xpose.msra.mxu0 0.0
    %1376 = vmatprep.subr.mxu0 0.0
    %1377 = vmatpush1.xpose.msra.mxu0 0.0
    %1378 = vmatprep.subr.mxu0 0.0
    %1379 = vmatpush1.xpose.msra.mxu0 0.0
    %1380 = vmatprep.subr.mxu0 0.0
    %1381 = vmatpush1.xpose.msra.mxu0 0.0
    %1382 = vmatprep.subr.mxu0 0.0
    %1383 = vmatpush1.xpose.msra.mxu0 0.0
    %1384 = vmatprep.subr.mxu0 0.0
    %1385 = vmatpush1.xpose.msra.mxu0 0.0
    %1386 = vmatprep.subr.mxu0 0.0
    %1387 = vmatpush1.xpose.msra.mxu0 0.0
    %1388 = vmatprep.subr.mxu0 0.0
    %1389 = vmatpush1.xpose.msra.mxu0 0.0
    %1390 = vmatprep.subr.mxu0 0.0
    %1391 = vmatpush1.xpose.msra.mxu0 %v1358
    %1392 = vmatprep.subr.mxu0 0.0
    %1393 = vmatpush2.xpose.msra.mxu0 0.0
    %1394 = vmatprep.subr.mxu0 0.0
    %1395 = vmatpush2.xpose.msra.mxu0 0.0
    %1396 = vmatprep.subr.mxu0 0.0
    %1397 = vmatpush2.xpose.msra.mxu0 0.0
    %1398 = vmatprep.subr.mxu0 0.0
    %1399 = vmatpush2.xpose.msra.mxu0 0.0
    %1400 = vmatprep.subr.mxu0 0.0
    %1401 = vmatpush2.xpose.msra.mxu0 0.0
    %1402 = vmatprep.subr.mxu0 0.0
    %1403 = vmatpush2.xpose.msra.mxu0 0.0
    %1404 = vmatprep.subr.mxu0 0.0
    %1405 = vmatpush2.xpose.msra.mxu0 0.0
    %1406 = vmatprep.subr.mxu0 0.0
    %1407 = vmatpush2.xpose.msra.mxu0 0.0
    %1408 = vmatprep.subr.mxu0 0.0
    %1409 = vmatpush2.xpose.msra.mxu0 0.0
    %1410 = vmatprep.subr.mxu0 0.0
    %1411 = vmatpush2.xpose.msra.mxu0 0.0
    %1412 = vmatprep.subr.mxu0 0.0
    %1413 = vmatpush2.xpose.msra.mxu0 0.0
    %1414 = vmatprep.subr.mxu0 0.0
    %1415 = vmatpush2.xpose.msra.mxu0 0.0
    %1416 = vmatprep.subr.mxu0 0.0
    %1417 = vmatpush2.xpose.msra.mxu0 0.0
    %1418 = vmatprep.subr.mxu0 0.0
    %1419 = vmatpush2.xpose.msra.mxu0 0.0
    %1420 = vmatprep.subr.mxu0 0.0
    %1421 = vmatpush2.xpose.msra.mxu0 0.0
    %1422 = vmatprep.subr.mxu0 0.0
    %1423 = vmatpush2.xpose.msra.mxu0 0.0
    %1424 = vmatprep.mubr.f32.mxu0 0.0
    %1425 = vmatmul.mubr.f32.gmra.mxu0 %v1356
    %v1426 = vpop.f32.mrf.mxu0
    %v1427 = vadd.f32 %v158, %v1426
    %v1428 = vpop.f32.mrf.mxu0
    %1429 = vdwg.mxu0
    %v1430 = vsel %vm288, %v1349, -inf
    %1431 = vmax.xlane.f32.xlu0 %v1430
    %v1432 = vpop.xlane.xlu0 %1431
    %v1433 = vsel %vm288, %v1427, -inf
    %1434 = vmax.xlane.f32.xlu0 %v1433
    %v1435 = vpop.xlane.xlu0 %1434
    %v1436 = vsub.f32 %v1349, %v1432
    %v1437 = vsub.f32 %v1427, %v1435
    %v1438 = vmul.f32 %v1436, 1.442695
    %v1439 = vpow.pop %v1438
    %v1440 = vmul.f32 %v1437, 1.442695
    %v1441 = vpow.pop %v1440
    %v1442 = vsel %vm288, %v1439, 0.0
    %1443 = vadd.xlane.f32.xlu0 %v1442
    %v1444 = vpop.xlane.xlu0 %1443
    %v1445 = vsel %vm288, %v1441, 0.0
    %1446 = vadd.xlane.f32.xlu0 %v1445
    %v1447 = vpop.xlane.xlu0 %1446
    %v1448 = vrcp.pop %v1444
    %v1449 = vmul.f32 %v1439, %v1448
    %v1450 = vrcp.pop %v1447
    %v1451 = vmul.f32 %v1441, %v1450
    %1452 = vrot.lane.b32.xlu0 %v277, 40
    %v1453 = vpop.permute.xlu0 %1452
    %v1456 = vsel %vm288, %v1449, 0
    %1458 = vmatprep.subr.mxu0 0.0
    %1459 = vmatpush1.msra.mxu0 0.0
    %1460 = vmatprep.subr.mxu0 0.0
    %1461 = vmatpush1.msra.mxu0 0.0
    %1462 = vmatprep.subr.mxu0 0.0
    %1463 = vmatpush1.msra.mxu0 0.0
    %1464 = vmatprep.subr.mxu0 0.0
    %1465 = vmatpush1.msra.mxu0 0.0
    %1466 = vmatprep.subr.mxu0 0.0
    %1467 = vmatpush1.msra.mxu0 0.0
    %1468 = vmatprep.subr.mxu0 0.0
    %1469 = vmatpush1.msra.mxu0 0.0
    %1470 = vmatprep.subr.mxu0 0.0
    %1471 = vmatpush1.msra.mxu0 0.0
    %1472 = vmatprep.subr.mxu0 0.0
    %1473 = vmatpush1.msra.mxu0 0.0
    %1474 = vmatprep.subr.mxu0 0.0
    %1475 = vmatpush1.msra.mxu0 0.0
    %1476 = vmatprep.subr.mxu0 0.0
    %1477 = vmatpush1.msra.mxu0 0.0
    %1478 = vmatprep.subr.mxu0 0.0
    %1479 = vmatpush1.msra.mxu0 0.0
    %1480 = vmatprep.subr.mxu0 0.0
    %1481 = vmatpush1.msra.mxu0 0.0
    %1482 = vmatprep.subr.mxu0 0.0
    %1483 = vmatpush1.msra.mxu0 0.0
    %1484 = vmatprep.subr.mxu0 0.0
    %1485 = vmatpush1.msra.mxu0 0.0
    %1486 = vmatprep.subr.mxu0 0.0
    %1487 = vmatpush1.msra.mxu0 0.0
    %1488 = vmatprep.subr.mxu0 0.0
    %1489 = vmatpush1.msra.mxu0 %v1453
    %1490 = vmatprep.subr.mxu0 0.0
    %1491 = vmatpush2.msra.mxu0 0.0
    %1492 = vmatprep.subr.mxu0 0.0
    %1493 = vmatpush2.msra.mxu0 0.0
    %1494 = vmatprep.subr.mxu0 0.0
    %1495 = vmatpush2.msra.mxu0 0.0
    %1496 = vmatprep.subr.mxu0 0.0
    %1497 = vmatpush2.msra.mxu0 0.0
    %1498 = vmatprep.subr.mxu0 0.0
    %1499 = vmatpush2.msra.mxu0 0.0
    %1500 = vmatprep.subr.mxu0 0.0
    %1501 = vmatpush2.msra.mxu0 0.0
    %1502 = vmatprep.subr.mxu0 0.0
    %1503 = vmatpush2.msra.mxu0 0.0
    %1504 = vmatprep.subr.mxu0 0.0
    %1505 = vmatpush2.msra.mxu0 0.0
    %1506 = vmatprep.subr.mxu0 0.0
    %1507 = vmatpush2.msra.mxu0 0.0
    %1508 = vmatprep.subr.mxu0 0.0
    %1509 = vmatpush2.msra.mxu0 0.0
    %1510 = vmatprep.subr.mxu0 0.0
    %1511 = vmatpush2.msra.mxu0 0.0
    %1512 = vmatprep.subr.mxu0 0.0
    %1513 = vmatpush2.msra.mxu0 0.0
    %1514 = vmatprep.subr.mxu0 0.0
    %1515 = vmatpush2.msra.mxu0 0.0
    %1516 = vmatprep.subr.mxu0 0.0
    %1517 = vmatpush2.msra.mxu0 0.0
    %1518 = vmatprep.subr.mxu0 0.0
    %1519 = vmatpush2.msra.mxu0 0.0
    %1520 = vmatprep.subr.mxu0 0.0
    %1521 = vmatpush2.msra.mxu0 0.0
    %1522 = vmatprep.mubr.f32.mxu0 0.0
    %1523 = vmatmul.mubr.f32.gmra.mxu0 %v1456
    %v1524 = vpop.f32.mrf.mxu0
    %v1525 = vadd.f32 0.0, %v1524
    %v1526 = vpop.f32.mrf.mxu0
    %1527 = vdwg.mxu0
    %1528 = vrot.lane.b32.xlu0 %v282, 40
    %v1529 = vpop.permute.xlu0 %1528
    %v1532 = vsel %vm288, %v1451, 0
    %1534 = vmatprep.subr.mxu0 0.0
    %1535 = vmatpush1.msra.mxu0 0.0
    %1536 = vmatprep.subr.mxu0 0.0
    %1537 = vmatpush1.msra.mxu0 0.0
    %1538 = vmatprep.subr.mxu0 0.0
    %1539 = vmatpush1.msra.mxu0 0.0
    %1540 = vmatprep.subr.mxu0 0.0
    %1541 = vmatpush1.msra.mxu0 0.0
    %1542 = vmatprep.subr.mxu0 0.0
    %1543 = vmatpush1.msra.mxu0 0.0
    %1544 = vmatprep.subr.mxu0 0.0
    %1545 = vmatpush1.msra.mxu0 0.0
    %1546 = vmatprep.subr.mxu0 0.0
    %1547 = vmatpush1.msra.mxu0 0.0
    %1548 = vmatprep.subr.mxu0 0.0
    %1549 = vmatpush1.msra.mxu0 0.0
    %1550 = vmatprep.subr.mxu0 0.0
    %1551 = vmatpush1.msra.mxu0 0.0
    %1552 = vmatprep.subr.mxu0 0.0
    %1553 = vmatpush1.msra.mxu0 0.0
    %1554 = vmatprep.subr.mxu0 0.0
    %1555 = vmatpush1.msra.mxu0 0.0
    %1556 = vmatprep.subr.mxu0 0.0
    %1557 = vmatpush1.msra.mxu0 0.0
    %1558 = vmatprep.subr.mxu0 0.0
    %1559 = vmatpush1.msra.mxu0 0.0
    %1560 = vmatprep.subr.mxu0 0.0
    %1561 = vmatpush1.msra.mxu0 0.0
    %1562 = vmatprep.subr.mxu0 0.0
    %1563 = vmatpush1.msra.mxu0 0.0
    %1564 = vmatprep.subr.mxu0 0.0
    %1565 = vmatpush1.msra.mxu0 %v1529
    %1566 = vmatprep.subr.mxu0 0.0
    %1567 = vmatpush2.msra.mxu0 0.0
    %1568 = vmatprep.subr.mxu0 0.0
    %1569 = vmatpush2.msra.mxu0 0.0
    %1570 = vmatprep.subr.mxu0 0.0
    %1571 = vmatpush2.msra.mxu0 0.0
    %1572 = vmatprep.subr.mxu0 0.0
    %1573 = vmatpush2.msra.mxu0 0.0
    %1574 = vmatprep.subr.mxu0 0.0
    %1575 = vmatpush2.msra.mxu0 0.0
    %1576 = vmatprep.subr.mxu0 0.0
    %1577 = vmatpush2.msra.mxu0 0.0
    %1578 = vmatprep.subr.mxu0 0.0
    %1579 = vmatpush2.msra.mxu0 0.0
    %1580 = vmatprep.subr.mxu0 0.0
    %1581 = vmatpush2.msra.mxu0 0.0
    %1582 = vmatprep.subr.mxu0 0.0
    %1583 = vmatpush2.msra.mxu0 0.0
    %1584 = vmatprep.subr.mxu0 0.0
    %1585 = vmatpush2.msra.mxu0 0.0
    %1586 = vmatprep.subr.mxu0 0.0
    %1587 = vmatpush2.msra.mxu0 0.0
    %1588 = vmatprep.subr.mxu0 0.0
    %1589 = vmatpush2.msra.mxu0 0.0
    %1590 = vmatprep.subr.mxu0 0.0
    %1591 = vmatpush2.msra.mxu0 0.0
    %1592 = vmatprep.subr.mxu0 0.0
    %1593 = vmatpush2.msra.mxu0 0.0
    %1594 = vmatprep.subr.mxu0 0.0
    %1595 = vmatpush2.msra.mxu0 0.0
    %1596 = vmatprep.subr.mxu0 0.0
    %1597 = vmatpush2.msra.mxu0 0.0
    %1598 = vmatprep.mubr.f32.mxu0 0.0
    %1599 = vmatmul.mubr.f32.gmra.mxu0 %v1532
    %v1600 = vpop.f32.mrf.mxu0
    %v1601 = vadd.f32 0.0, %v1600
    %v1602 = vpop.f32.mrf.mxu0
    %1603 = vdwg.mxu0
    %1606 = vrot.lane.b32.xlu0 %v865, 8
    %v1607 = vpop.permute.xlu0 %1606
    %1608 = vrot.lane.b32.xlu0 %v941, 8
    %v1609 = vpop.permute.xlu0 %1608
    %1614 = vrot.lane.b32.xlu0 %v1195, 16
    %v1615 = vpop.permute.xlu0 %1614
    %1616 = vrot.lane.b32.xlu0 %v1271, 16
    %v1617 = vpop.permute.xlu0 %1616
    %1622 = vrot.lane.b32.xlu0 %v1525, 24
    %v1623 = vpop.permute.xlu0 %1622
    %1624 = vrot.lane.b32.xlu0 %v1601, 24
    %v1625 = vpop.permute.xlu0 %1624
    %v1628 = vsel %vm288, %v535, %v1607
    %v1629 = vsel %vm288, %v611, %v1609
    %vm1630 = vcmask 130048
    %v1631 = vsel %vm1630, %v1628, %v1615
    %v1632 = vsel %vm1630, %v1629, %v1617
    %vm1633 = vcmask 195584
    %v1634 = vsel %vm1633, %v1631, %v1623
    %v1635 = vsel %vm1633, %v1632, %v1625
    %v1636 = vld [vmem:[%s4] sm:$0xff]
    %v1637 = vld [vmem:[%s4 + $0x8] sm:$0xff]
    %v1638 = vld [vmem:[%s4 + $0x10] sm:$0xff]
    %v1639 = vld [vmem:[%s4 + $0x18] sm:$0xff]
    %v1640 = vlaneseq
    %v1641 = vshrl.u32 %v1640, 7
    %v1642 = vsub.s32 2, %v1641
    %v1643 = vrot.slane %v159, %v1642
    %v1645 = vsel %vm160, %v1634, 0
    %v1648 = vsel %vm160, %v1635, 0
    %1650 = vmatprep.subr.mxu0 0.0
    %1651 = vmatpush1.msra.mxu0 0.0
    %1652 = vmatprep.subr.mxu0 0.0
    %1653 = vmatpush1.msra.mxu0 0.0
    %1654 = vmatprep.subr.mxu0 0.0
    %1655 = vmatpush1.msra.mxu0 0.0
    %1656 = vmatprep.subr.mxu0 0.0
    %1657 = vmatpush1.msra.mxu0 0.0
    %1658 = vmatprep.subr.mxu0 0.0
    %1659 = vmatpush1.msra.mxu0 0.0
    %1660 = vmatprep.subr.mxu0 0.0
    %1661 = vmatpush1.msra.mxu0 0.0
    %1662 = vmatprep.subr.mxu0 0.0
    %1663 = vmatpush1.msra.mxu0 0.0
    %1664 = vmatprep.subr.mxu0 0.0
    %1665 = vmatpush1.msra.mxu0 0.0
    %1666 = vmatprep.subr.mxu0 0.0
    %1667 = vmatpush1.msra.mxu0 0.0
    %1668 = vmatprep.subr.mxu0 0.0
    %1669 = vmatpush1.msra.mxu0 0.0
    %1670 = vmatprep.subr.mxu0 0.0
    %1671 = vmatpush1.msra.mxu0 0.0
    %1672 = vmatprep.subr.mxu0 0.0
    %1673 = vmatpush1.msra.mxu0 0.0
    %1674 = vmatprep.subr.mxu0 0.0
    %1675 = vmatpush1.msra.mxu0 %v1639
    %1676 = vmatprep.subr.mxu0 0.0
    %1677 = vmatpush1.msra.mxu0 %v1638
    %1678 = vmatprep.subr.mxu0 0.0
    %1679 = vmatpush1.msra.mxu0 %v1637
    %1680 = vmatprep.subr.mxu0 0.0
    %1681 = vmatpush1.msra.mxu0 %v1636
    %1682 = vmatprep.subr.mxu0 0.0
    %1683 = vmatpush2.msra.mxu0 0.0
    %1684 = vmatprep.subr.mxu0 0.0
    %1685 = vmatpush2.msra.mxu0 0.0
    %1686 = vmatprep.subr.mxu0 0.0
    %1687 = vmatpush2.msra.mxu0 0.0
    %1688 = vmatprep.subr.mxu0 0.0
    %1689 = vmatpush2.msra.mxu0 0.0
    %1690 = vmatprep.subr.mxu0 0.0
    %1691 = vmatpush2.msra.mxu0 0.0
    %1692 = vmatprep.subr.mxu0 0.0
    %1693 = vmatpush2.msra.mxu0 0.0
    %1694 = vmatprep.subr.mxu0 0.0
    %1695 = vmatpush2.msra.mxu0 0.0
    %1696 = vmatprep.subr.mxu0 0.0
    %1697 = vmatpush2.msra.mxu0 0.0
    %1698 = vmatprep.subr.mxu0 0.0
    %1699 = vmatpush2.msra.mxu0 0.0
    %1700 = vmatprep.subr.mxu0 0.0
    %1701 = vmatpush2.msra.mxu0 0.0
    %1702 = vmatprep.subr.mxu0 0.0
    %1703 = vmatpush2.msra.mxu0 0.0
    %1704 = vmatprep.subr.mxu0 0.0
    %1705 = vmatpush2.msra.mxu0 0.0
    %1706 = vmatprep.subr.mxu0 0.0
    %1707 = vmatpush2.msra.mxu0 0.0
    %1708 = vmatprep.subr.mxu0 0.0
    %1709 = vmatpush2.msra.mxu0 0.0
    %1710 = vmatprep.subr.mxu0 0.0
    %1711 = vmatpush2.msra.mxu0 0.0
    %1712 = vmatprep.subr.mxu0 0.0
    %1713 = vmatpush2.msra.mxu0 0.0
    %1714 = vmatprep.mubr.f32.mxu0 0.0
    %1715 = vmatmul.mubr.f32.gmra.mxu0 %v1645
    %v1716 = vpop.f32.mrf.mxu0
    %v1717 = vadd.f32 %v1643, %v1716
    %v1718 = vpop.f32.mrf.mxu0
    %1719 = vmatprep.mubr.f32.mxu0 0.0
    %1720 = vmatmul.mubr.f32.gmra.mxu0 %v1648
    %v1721 = vpop.f32.mrf.mxu0
    %v1722 = vadd.f32 %v1643, %v1721
    %v1723 = vpop.f32.mrf.mxu0
    %1724 = vdwg.mxu0
    %v1725 = vadd.f32 %v147, %v1717
    %v1726 = vadd.f32 %v152, %v1722
    %v1727 = vsel %vm160, %v1725, 0.0
    %1728 = vadd.xlane.f32.xlu0 %v1727
    %v1729 = vpop.xlane.xlu0 %1728
    %v1730 = vsel %vm160, %v1726, 0.0
    %1731 = vadd.xlane.f32.xlu0 %v1730
    %v1732 = vpop.xlane.xlu0 %1731
    %v1733 = vmul.f32 %v1729, %v167
    %v1734 = vmul.f32 %v1732, %v167
    %v1735 = vsub.f32 %v1725, %v1733
    %v1736 = vsub.f32 %v1726, %v1734
    %v1737 = vmul.f32 %v1735, %v1735
    %v1738 = vmul.f32 %v1736, %v1736
    %v1739 = vsel %vm160, %v1737, 0.0
    %1740 = vadd.xlane.f32.xlu0 %v1739
    %v1741 = vpop.xlane.xlu0 %1740
    %v1742 = vsel %vm160, %v1738, 0.0
    %1743 = vadd.xlane.f32.xlu0 %v1742
    %v1744 = vpop.xlane.xlu0 %1743
    %v1745 = vmul.f32 %v1741, %v167
    %v1746 = vmul.f32 %v1744, %v167
    %v1747 = vadd.f32 %v1745, 1e-05
    %v1748 = vadd.f32 %v1746, 1e-05
    %v1749 = vrsqrt.pop %v1747
    %v1750 = vrsqrt.pop %v1748
    %v1751 = vmul.f32 %v1735, %v1749
    %v1752 = vmul.f32 %v1736, %v1750
    %v1753 = vlaneseq
    %v1754 = vshrl.u32 %v1753, 7
    %v1755 = vsub.s32 3, %v1754
    %v1756 = vrot.slane %v159, %v1755
    %v1757 = vmul.f32 %v1751, %v1756
    %v1758 = vmul.f32 %v1752, %v1756
    %v1759 = vlaneseq
    %v1760 = vshrl.u32 %v1759, 7
    %v1761 = vsub.s32 4, %v1760
    %v1762 = vrot.slane %v159, %v1761
    %v1763 = vadd.f32 %v1757, %v1762
    %v1764 = vadd.f32 %v1758, %v1762
    %v1765 = vld [vmem:[%s5] sm:$0xff]
    %v1766 = vld [vmem:[%s5 + $0x8] sm:$0xff]
    %v1767 = vld [vmem:[%s5 + $0x10] sm:$0xff]
    %v1768 = vld [vmem:[%s5 + $0x18] sm:$0xff]
    %v1769 = vld [vmem:[%s8] sm:$0x1]
    %v1771 = vlaneseq
    %v1772 = vshrl.u32 %v1771, 7
    %v1773 = vsub.s32 0, %v1772
    %v1774 = vrot.slane %v1769, %v1773
    %v1777 = vsel %vm160, %v1763, 0
    %v1780 = vsel %vm160, %v1764, 0
    %1782 = vmatprep.subr.mxu0 0.0
    %1783 = vmatpush1.msra.mxu0 0.0
    %1784 = vmatprep.subr.mxu0 0.0
    %1785 = vmatpush1.msra.mxu0 0.0
    %1786 = vmatprep.subr.mxu0 0.0
    %1787 = vmatpush1.msra.mxu0 0.0
    %1788 = vmatprep.subr.mxu0 0.0
    %1789 = vmatpush1.msra.mxu0 0.0
    %1790 = vmatprep.subr.mxu0 0.0
    %1791 = vmatpush1.msra.mxu0 0.0
    %1792 = vmatprep.subr.mxu0 0.0
    %1793 = vmatpush1.msra.mxu0 0.0
    %1794 = vmatprep.subr.mxu0 0.0
    %1795 = vmatpush1.msra.mxu0 0.0
    %1796 = vmatprep.subr.mxu0 0.0
    %1797 = vmatpush1.msra.mxu0 0.0
    %1798 = vmatprep.subr.mxu0 0.0
    %1799 = vmatpush1.msra.mxu0 0.0
    %1800 = vmatprep.subr.mxu0 0.0
    %1801 = vmatpush1.msra.mxu0 0.0
    %1802 = vmatprep.subr.mxu0 0.0
    %1803 = vmatpush1.msra.mxu0 0.0
    %1804 = vmatprep.subr.mxu0 0.0
    %1805 = vmatpush1.msra.mxu0 0.0
    %1806 = vmatprep.subr.mxu0 0.0
    %1807 = vmatpush1.msra.mxu0 %v1768
    %1808 = vmatprep.subr.mxu0 0.0
    %1809 = vmatpush1.msra.mxu0 %v1767
    %1810 = vmatprep.subr.mxu0 0.0
    %1811 = vmatpush1.msra.mxu0 %v1766
    %1812 = vmatprep.subr.mxu0 0.0
    %1813 = vmatpush1.msra.mxu0 %v1765
    %1814 = vmatprep.subr.mxu0 0.0
    %1815 = vmatpush2.msra.mxu0 0.0
    %1816 = vmatprep.subr.mxu0 0.0
    %1817 = vmatpush2.msra.mxu0 0.0
    %1818 = vmatprep.subr.mxu0 0.0
    %1819 = vmatpush2.msra.mxu0 0.0
    %1820 = vmatprep.subr.mxu0 0.0
    %1821 = vmatpush2.msra.mxu0 0.0
    %1822 = vmatprep.subr.mxu0 0.0
    %1823 = vmatpush2.msra.mxu0 0.0
    %1824 = vmatprep.subr.mxu0 0.0
    %1825 = vmatpush2.msra.mxu0 0.0
    %1826 = vmatprep.subr.mxu0 0.0
    %1827 = vmatpush2.msra.mxu0 0.0
    %1828 = vmatprep.subr.mxu0 0.0
    %1829 = vmatpush2.msra.mxu0 0.0
    %1830 = vmatprep.subr.mxu0 0.0
    %1831 = vmatpush2.msra.mxu0 0.0
    %1832 = vmatprep.subr.mxu0 0.0
    %1833 = vmatpush2.msra.mxu0 0.0
    %1834 = vmatprep.subr.mxu0 0.0
    %1835 = vmatpush2.msra.mxu0 0.0
    %1836 = vmatprep.subr.mxu0 0.0
    %1837 = vmatpush2.msra.mxu0 0.0
    %1838 = vmatprep.subr.mxu0 0.0
    %1839 = vmatpush2.msra.mxu0 0.0
    %1840 = vmatprep.subr.mxu0 0.0
    %1841 = vmatpush2.msra.mxu0 0.0
    %1842 = vmatprep.subr.mxu0 0.0
    %1843 = vmatpush2.msra.mxu0 0.0
    %1844 = vmatprep.subr.mxu0 0.0
    %1845 = vmatpush2.msra.mxu0 0.0
    %1846 = vmatprep.mubr.f32.mxu0 0.0
    %1847 = vmatmul.mubr.f32.gmra.mxu0 %v1777
    %v1848 = vpop.f32.mrf.mxu0
    %v1849 = vadd.f32 %v1774, %v1848
    %v1850 = vpop.f32.mrf.mxu0
    %1851 = vmatprep.mubr.f32.mxu0 0.0
    %1852 = vmatmul.mubr.f32.gmra.mxu0 %v1780
    %v1853 = vpop.f32.mrf.mxu0
    %v1854 = vadd.f32 %v1774, %v1853
    %v1855 = vpop.f32.mrf.mxu0
    %1856 = vdwg.mxu0
    %v1857 = vmul.f32 %v1849, 0.5
    %v1858 = vmul.f32 %v1854, 0.5
    %v1859 = vmul.f32 %v1849, 0.70710677
    %v1860 = vmul.f32 %v1854, 0.70710677
    %v1861 = verf.f32.pop %v1859
    %v1862 = verf.f32.pop %v1860
    %v1863 = vadd.f32 %v1861, 1.0
    %v1864 = vadd.f32 %v1862, 1.0
    %v1865 = vmul.f32 %v1857, %v1863
    %v1866 = vmul.f32 %v1858, %v1864
    %v1867 = vld [vmem:[%s6] sm:$0xff]
    %v1868 = vld [vmem:[%s6 + $0x8] sm:$0xff]
    %v1869 = vld [vmem:[%s6 + $0x10] sm:$0xff]
    %v1870 = vld [vmem:[%s6 + $0x18] sm:$0xff]
    %v1871 = vld [vmem:[%s6 + $0x20] sm:$0xff]
    %v1872 = vld [vmem:[%s6 + $0x28] sm:$0xff]
    %v1873 = vld [vmem:[%s6 + $0x30] sm:$0xff]
    %v1874 = vld [vmem:[%s6 + $0x38] sm:$0xff]
    %v1875 = vlaneseq
    %v1876 = vshrl.u32 %v1875, 7
    %v1877 = vsub.s32 5, %v1876
    %v1878 = vrot.slane %v159, %v1877
    %vm1879 = vcmask 523264
    %v1881 = vsel %vm1879, %v1865, 0
    %v1884 = vsel %vm1879, %v1866, 0
    %1886 = vmatprep.subr.mxu0 0.0
    %1887 = vmatpush1.msra.mxu0 0.0
    %1888 = vmatprep.subr.mxu0 0.0
    %1889 = vmatpush1.msra.mxu0 0.0
    %1890 = vmatprep.subr.mxu0 0.0
    %1891 = vmatpush1.msra.mxu0 0.0
    %1892 = vmatprep.subr.mxu0 0.0
    %1893 = vmatpush1.msra.mxu0 0.0
    %1894 = vmatprep.subr.mxu0 0.0
    %1895 = vmatpush1.msra.mxu0 0.0
    %1896 = vmatprep.subr.mxu0 0.0
    %1897 = vmatpush1.msra.mxu0 0.0
    %1898 = vmatprep.subr.mxu0 0.0
    %1899 = vmatpush1.msra.mxu0 0.0
    %1900 = vmatprep.subr.mxu0 0.0
    %1901 = vmatpush1.msra.mxu0 0.0
    %1902 = vmatprep.subr.mxu0 0.0
    %1903 = vmatpush1.msra.mxu0 %v1874
    %1904 = vmatprep.subr.mxu0 0.0
    %1905 = vmatpush1.msra.mxu0 %v1873
    %1906 = vmatprep.subr.mxu0 0.0
    %1907 = vmatpush1.msra.mxu0 %v1872
    %1908 = vmatprep.subr.mxu0 0.0
    %1909 = vmatpush1.msra.mxu0 %v1871
    %1910 = vmatprep.subr.mxu0 0.0
    %1911 = vmatpush1.msra.mxu0 %v1870
    %1912 = vmatprep.subr.mxu0 0.0
    %1913 = vmatpush1.msra.mxu0 %v1869
    %1914 = vmatprep.subr.mxu0 0.0
    %1915 = vmatpush1.msra.mxu0 %v1868
    %1916 = vmatprep.subr.mxu0 0.0
    %1917 = vmatpush1.msra.mxu0 %v1867
    %1918 = vmatprep.subr.mxu0 0.0
    %1919 = vmatpush2.msra.mxu0 0.0
    %1920 = vmatprep.subr.mxu0 0.0
    %1921 = vmatpush2.msra.mxu0 0.0
    %1922 = vmatprep.subr.mxu0 0.0
    %1923 = vmatpush2.msra.mxu0 0.0
    %1924 = vmatprep.subr.mxu0 0.0
    %1925 = vmatpush2.msra.mxu0 0.0
    %1926 = vmatprep.subr.mxu0 0.0
    %1927 = vmatpush2.msra.mxu0 0.0
    %1928 = vmatprep.subr.mxu0 0.0
    %1929 = vmatpush2.msra.mxu0 0.0
    %1930 = vmatprep.subr.mxu0 0.0
    %1931 = vmatpush2.msra.mxu0 0.0
    %1932 = vmatprep.subr.mxu0 0.0
    %1933 = vmatpush2.msra.mxu0 0.0
    %1934 = vmatprep.subr.mxu0 0.0
    %1935 = vmatpush2.msra.mxu0 0.0
    %1936 = vmatprep.subr.mxu0 0.0
    %1937 = vmatpush2.msra.mxu0 0.0
    %1938 = vmatprep.subr.mxu0 0.0
    %1939 = vmatpush2.msra.mxu0 0.0
    %1940 = vmatprep.subr.mxu0 0.0
    %1941 = vmatpush2.msra.mxu0 0.0
    %1942 = vmatprep.subr.mxu0 0.0
    %1943 = vmatpush2.msra.mxu0 0.0
    %1944 = vmatprep.subr.mxu0 0.0
    %1945 = vmatpush2.msra.mxu0 0.0
    %1946 = vmatprep.subr.mxu0 0.0
    %1947 = vmatpush2.msra.mxu0 0.0
    %1948 = vmatprep.subr.mxu0 0.0
    %1949 = vmatpush2.msra.mxu0 0.0
    %1950 = vmatprep.mubr.f32.mxu0 0.0
    %1951 = vmatmul.mubr.f32.gmra.mxu0 %v1881
    %v1952 = vpop.f32.mrf.mxu0
    %v1953 = vadd.f32 %v1878, %v1952
    %v1954 = vpop.f32.mrf.mxu0
    %1955 = vmatprep.mubr.f32.mxu0 0.0
    %1956 = vmatmul.mubr.f32.gmra.mxu0 %v1884
    %v1957 = vpop.f32.mrf.mxu0
    %v1958 = vadd.f32 %v1878, %v1957
    %v1959 = vpop.f32.mrf.mxu0
    %1960 = vdwg.mxu0
    %v1961 = vadd.f32 %v1725, %v1953
    %v1962 = vadd.f32 %v1726, %v1958
    %s1963 = scalar_lea.vmem %s7, 8
    %v1964 = vld [vmem:[%s1963] sm:$0x3f]
    %v1965 = vsel %vm160, %v1961, 0.0
    %1966 = vadd.xlane.f32.xlu0 %v1965
    %v1967 = vpop.xlane.xlu0 %1966
    %v1968 = vsel %vm160, %v1962, 0.0
    %1969 = vadd.xlane.f32.xlu0 %v1968
    %v1970 = vpop.xlane.xlu0 %1969
    %v1971 = vmul.f32 %v1967, %v167
    %v1972 = vmul.f32 %v1970, %v167
    %v1973 = vsub.f32 %v1961, %v1971
    %v1974 = vsub.f32 %v1962, %v1972
    %v1975 = vmul.f32 %v1973, %v1973
    %v1976 = vmul.f32 %v1974, %v1974
    %v1977 = vsel %vm160, %v1975, 0.0
    %1978 = vadd.xlane.f32.xlu0 %v1977
    %v1979 = vpop.xlane.xlu0 %1978
    %v1980 = vsel %vm160, %v1976, 0.0
    %1981 = vadd.xlane.f32.xlu0 %v1980
    %v1982 = vpop.xlane.xlu0 %1981
    %v1983 = vmul.f32 %v1979, %v167
    %v1984 = vmul.f32 %v1982, %v167
    %v1985 = vadd.f32 %v1983, 1e-05
    %v1986 = vadd.f32 %v1984, 1e-05
    %v1987 = vrsqrt.pop %v1985
    %v1988 = vrsqrt.pop %v1986
    %v1989 = vmul.f32 %v1973, %v1987
    %v1990 = vmul.f32 %v1974, %v1988
    %v1991 = vlaneseq
    %v1992 = vshrl.u32 %v1991, 7
    %v1993 = vsub.s32 0, %v1992
    %v1994 = vrot.slane %v1964, %v1993
    %v1995 = vmul.f32 %v1989, %v1994
    %v1996 = vmul.f32 %v1990, %v1994
    %v1997 = vlaneseq
    %v1998 = vshrl.u32 %v1997, 7
    %v1999 = vsub.s32 1, %v1998
    %v2000 = vrot.slane %v1964, %v1999
    %v2001 = vadd.f32 %v1995, %v2000
    %v2002 = vadd.f32 %v1996, %v2000
    %s2003 = scalar_lea.vmem %s3, 32
    %v2004 = vld [vmem:[%s2003] sm:$0xff]
    %v2005 = vld [vmem:[%s2003 + $0x8] sm:$0xff]
    %v2006 = vld [vmem:[%s2003 + $0x10] sm:$0xff]
    %v2007 = vld [vmem:[%s2003 + $0x18] sm:$0xff]
    %v2009 = vsel %vm160, %v2001, 0
    %v2012 = vsel %vm160, %v2002, 0
    %2014 = vmatprep.subr.mxu0 0.0
    %2015 = vmatpush1.msra.mxu0 0.0
    %2016 = vmatprep.subr.mxu0 0.0
    %2017 = vmatpush1.msra.mxu0 0.0
    %2018 = vmatprep.subr.mxu0 0.0
    %2019 = vmatpush1.msra.mxu0 0.0
    %2020 = vmatprep.subr.mxu0 0.0
    %2021 = vmatpush1.msra.mxu0 0.0
    %2022 = vmatprep.subr.mxu0 0.0
    %2023 = vmatpush1.msra.mxu0 0.0
    %2024 = vmatprep.subr.mxu0 0.0
    %2025 = vmatpush1.msra.mxu0 0.0
    %2026 = vmatprep.subr.mxu0 0.0
    %2027 = vmatpush1.msra.mxu0 0.0
    %2028 = vmatprep.subr.mxu0 0.0
    %2029 = vmatpush1.msra.mxu0 0.0
    %2030 = vmatprep.subr.mxu0 0.0
    %2031 = vmatpush1.msra.mxu0 0.0
    %2032 = vmatprep.subr.mxu0 0.0
    %2033 = vmatpush1.msra.mxu0 0.0
    %2034 = vmatprep.subr.mxu0 0.0
    %2035 = vmatpush1.msra.mxu0 0.0
    %2036 = vmatprep.subr.mxu0 0.0
    %2037 = vmatpush1.msra.mxu0 0.0
    %2038 = vmatprep.subr.mxu0 0.0
    %2039 = vmatpush1.msra.mxu0 %v2007
    %2040 = vmatprep.subr.mxu0 0.0
    %2041 = vmatpush1.msra.mxu0 %v2006
    %2042 = vmatprep.subr.mxu0 0.0
    %2043 = vmatpush1.msra.mxu0 %v2005
    %2044 = vmatprep.subr.mxu0 0.0
    %2045 = vmatpush1.msra.mxu0 %v2004
    %2046 = vmatprep.subr.mxu0 0.0
    %2047 = vmatpush2.msra.mxu0 0.0
    %2048 = vmatprep.subr.mxu0 0.0
    %2049 = vmatpush2.msra.mxu0 0.0
    %2050 = vmatprep.subr.mxu0 0.0
    %2051 = vmatpush2.msra.mxu0 0.0
    %2052 = vmatprep.subr.mxu0 0.0
    %2053 = vmatpush2.msra.mxu0 0.0
    %2054 = vmatprep.subr.mxu0 0.0
    %2055 = vmatpush2.msra.mxu0 0.0
    %2056 = vmatprep.subr.mxu0 0.0
    %2057 = vmatpush2.msra.mxu0 0.0
    %2058 = vmatprep.subr.mxu0 0.0
    %2059 = vmatpush2.msra.mxu0 0.0
    %2060 = vmatprep.subr.mxu0 0.0
    %2061 = vmatpush2.msra.mxu0 0.0
    %2062 = vmatprep.subr.mxu0 0.0
    %2063 = vmatpush2.msra.mxu0 0.0
    %2064 = vmatprep.subr.mxu0 0.0
    %2065 = vmatpush2.msra.mxu0 0.0
    %2066 = vmatprep.subr.mxu0 0.0
    %2067 = vmatpush2.msra.mxu0 0.0
    %2068 = vmatprep.subr.mxu0 0.0
    %2069 = vmatpush2.msra.mxu0 0.0
    %2070 = vmatprep.subr.mxu0 0.0
    %2071 = vmatpush2.msra.mxu0 0.0
    %2072 = vmatprep.subr.mxu0 0.0
    %2073 = vmatpush2.msra.mxu0 0.0
    %2074 = vmatprep.subr.mxu0 0.0
    %2075 = vmatpush2.msra.mxu0 0.0
    %2076 = vmatprep.subr.mxu0 0.0
    %2077 = vmatpush2.msra.mxu0 0.0
    %2078 = vmatprep.mubr.f32.mxu0 0.0
    %2079 = vmatmul.mubr.f32.gmra.mxu0 %v2009
    %v2080 = vpop.f32.mrf.mxu0
    %v2081 = vadd.f32 0.0, %v2080
    %v2082 = vpop.f32.mrf.mxu0
    %2083 = vmatprep.mubr.f32.mxu0 0.0
    %2084 = vmatmul.mubr.f32.gmra.mxu0 %v2012
    %v2085 = vpop.f32.mrf.mxu0
    %v2086 = vadd.f32 0.0, %v2085
    %v2087 = vpop.f32.mrf.mxu0
    %2088 = vdwg.mxu0
    %2090 = vrot.lane.b32.xlu0 %v2081, 96
    %v2091 = vpop.permute.xlu0 %2090
    %v2092 = vsel %vm288, %v2081, 0
    %v2094 = vsel %vm288, %v2091, 0
    %2096 = vmatprep.subr.mxu0 0.0
    %2097 = vmatpush1.xpose.msra.mxu0 0.0
    %2098 = vmatprep.subr.mxu0 0.0
    %2099 = vmatpush1.xpose.msra.mxu0 0.0
    %2100 = vmatprep.subr.mxu0 0.0
    %2101 = vmatpush1.xpose.msra.mxu0 0.0
    %2102 = vmatprep.subr.mxu0 0.0
    %2103 = vmatpush1.xpose.msra.mxu0 0.0
    %2104 = vmatprep.subr.mxu0 0.0
    %2105 = vmatpush1.xpose.msra.mxu0 0.0
    %2106 = vmatprep.subr.mxu0 0.0
    %2107 = vmatpush1.xpose.msra.mxu0 0.0
    %2108 = vmatprep.subr.mxu0 0.0
    %2109 = vmatpush1.xpose.msra.mxu0 0.0
    %2110 = vmatprep.subr.mxu0 0.0
    %2111 = vmatpush1.xpose.msra.mxu0 0.0
    %2112 = vmatprep.subr.mxu0 0.0
    %2113 = vmatpush1.xpose.msra.mxu0 0.0
    %2114 = vmatprep.subr.mxu0 0.0
    %2115 = vmatpush1.xpose.msra.mxu0 0.0
    %2116 = vmatprep.subr.mxu0 0.0
    %2117 = vmatpush1.xpose.msra.mxu0 0.0
    %2118 = vmatprep.subr.mxu0 0.0
    %2119 = vmatpush1.xpose.msra.mxu0 0.0
    %2120 = vmatprep.subr.mxu0 0.0
    %2121 = vmatpush1.xpose.msra.mxu0 0.0
    %2122 = vmatprep.subr.mxu0 0.0
    %2123 = vmatpush1.xpose.msra.mxu0 0.0
    %2124 = vmatprep.subr.mxu0 0.0
    %2125 = vmatpush1.xpose.msra.mxu0 0.0
    %2126 = vmatprep.subr.mxu0 0.0
    %2127 = vmatpush1.xpose.msra.mxu0 %v2094
    %2128 = vmatprep.subr.mxu0 0.0
    %2129 = vmatpush2.xpose.msra.mxu0 0.0
    %2130 = vmatprep.subr.mxu0 0.0
    %2131 = vmatpush2.xpose.msra.mxu0 0.0
    %2132 = vmatprep.subr.mxu0 0.0
    %2133 = vmatpush2.xpose.msra.mxu0 0.0
    %2134 = vmatprep.subr.mxu0 0.0
    %2135 = vmatpush2.xpose.msra.mxu0 0.0
    %2136 = vmatprep.subr.mxu0 0.0
    %2137 = vmatpush2.xpose.msra.mxu0 0.0
    %2138 = vmatprep.subr.mxu0 0.0
    %2139 = vmatpush2.xpose.msra.mxu0 0.0
    %2140 = vmatprep.subr.mxu0 0.0
    %2141 = vmatpush2.xpose.msra.mxu0 0.0
    %2142 = vmatprep.subr.mxu0 0.0
    %2143 = vmatpush2.xpose.msra.mxu0 0.0
    %2144 = vmatprep.subr.mxu0 0.0
    %2145 = vmatpush2.xpose.msra.mxu0 0.0
    %2146 = vmatprep.subr.mxu0 0.0
    %2147 = vmatpush2.xpose.msra.mxu0 0.0
    %2148 = vmatprep.subr.mxu0 0.0
    %2149 = vmatpush2.xpose.msra.mxu0 0.0
    %2150 = vmatprep.subr.mxu0 0.0
    %2151 = vmatpush2.xpose.msra.mxu0 0.0
    %2152 = vmatprep.subr.mxu0 0.0
    %2153 = vmatpush2.xpose.msra.mxu0 0.0
    %2154 = vmatprep.subr.mxu0 0.0
    %2155 = vmatpush2.xpose.msra.mxu0 0.0
    %2156 = vmatprep.subr.mxu0 0.0
    %2157 = vmatpush2.xpose.msra.mxu0 0.0
    %2158 = vmatprep.subr.mxu0 0.0
    %2159 = vmatpush2.xpose.msra.mxu0 0.0
    %2160 = vmatprep.mubr.f32.mxu0 0.0
    %2161 = vmatmul.mubr.f32.gmra.mxu0 %v2092
    %v2162 = vpop.f32.mrf.mxu0
    %v2163 = vadd.f32 %v158, %v2162
    %v2164 = vpop.f32.mrf.mxu0
    %2165 = vdwg.mxu0
    %2167 = vrot.lane.b32.xlu0 %v2086, 96
    %v2168 = vpop.permute.xlu0 %2167
    %v2169 = vsel %vm288, %v2086, 0
    %v2171 = vsel %vm288, %v2168, 0
    %2173 = vmatprep.subr.mxu0 0.0
    %2174 = vmatpush1.xpose.msra.mxu0 0.0
    %2175 = vmatprep.subr.mxu0 0.0
    %2176 = vmatpush1.xpose.msra.mxu0 0.0
    %2177 = vmatprep.subr.mxu0 0.0
    %2178 = vmatpush1.xpose.msra.mxu0 0.0
    %2179 = vmatprep.subr.mxu0 0.0
    %2180 = vmatpush1.xpose.msra.mxu0 0.0
    %2181 = vmatprep.subr.mxu0 0.0
    %2182 = vmatpush1.xpose.msra.mxu0 0.0
    %2183 = vmatprep.subr.mxu0 0.0
    %2184 = vmatpush1.xpose.msra.mxu0 0.0
    %2185 = vmatprep.subr.mxu0 0.0
    %2186 = vmatpush1.xpose.msra.mxu0 0.0
    %2187 = vmatprep.subr.mxu0 0.0
    %2188 = vmatpush1.xpose.msra.mxu0 0.0
    %2189 = vmatprep.subr.mxu0 0.0
    %2190 = vmatpush1.xpose.msra.mxu0 0.0
    %2191 = vmatprep.subr.mxu0 0.0
    %2192 = vmatpush1.xpose.msra.mxu0 0.0
    %2193 = vmatprep.subr.mxu0 0.0
    %2194 = vmatpush1.xpose.msra.mxu0 0.0
    %2195 = vmatprep.subr.mxu0 0.0
    %2196 = vmatpush1.xpose.msra.mxu0 0.0
    %2197 = vmatprep.subr.mxu0 0.0
    %2198 = vmatpush1.xpose.msra.mxu0 0.0
    %2199 = vmatprep.subr.mxu0 0.0
    %2200 = vmatpush1.xpose.msra.mxu0 0.0
    %2201 = vmatprep.subr.mxu0 0.0
    %2202 = vmatpush1.xpose.msra.mxu0 0.0
    %2203 = vmatprep.subr.mxu0 0.0
    %2204 = vmatpush1.xpose.msra.mxu0 %v2171
    %2205 = vmatprep.subr.mxu0 0.0
    %2206 = vmatpush2.xpose.msra.mxu0 0.0
    %2207 = vmatprep.subr.mxu0 0.0
    %2208 = vmatpush2.xpose.msra.mxu0 0.0
    %2209 = vmatprep.subr.mxu0 0.0
    %2210 = vmatpush2.xpose.msra.mxu0 0.0
    %2211 = vmatprep.subr.mxu0 0.0
    %2212 = vmatpush2.xpose.msra.mxu0 0.0
    %2213 = vmatprep.subr.mxu0 0.0
    %2214 = vmatpush2.xpose.msra.mxu0 0.0
    %2215 = vmatprep.subr.mxu0 0.0
    %2216 = vmatpush2.xpose.msra.mxu0 0.0
    %2217 = vmatprep.subr.mxu0 0.0
    %2218 = vmatpush2.xpose.msra.mxu0 0.0
    %2219 = vmatprep.subr.mxu0 0.0
    %2220 = vmatpush2.xpose.msra.mxu0 0.0
    %2221 = vmatprep.subr.mxu0 0.0
    %2222 = vmatpush2.xpose.msra.mxu0 0.0
    %2223 = vmatprep.subr.mxu0 0.0
    %2224 = vmatpush2.xpose.msra.mxu0 0.0
    %2225 = vmatprep.subr.mxu0 0.0
    %2226 = vmatpush2.xpose.msra.mxu0 0.0
    %2227 = vmatprep.subr.mxu0 0.0
    %2228 = vmatpush2.xpose.msra.mxu0 0.0
    %2229 = vmatprep.subr.mxu0 0.0
    %2230 = vmatpush2.xpose.msra.mxu0 0.0
    %2231 = vmatprep.subr.mxu0 0.0
    %2232 = vmatpush2.xpose.msra.mxu0 0.0
    %2233 = vmatprep.subr.mxu0 0.0
    %2234 = vmatpush2.xpose.msra.mxu0 0.0
    %2235 = vmatprep.subr.mxu0 0.0
    %2236 = vmatpush2.xpose.msra.mxu0 0.0
    %2237 = vmatprep.mubr.f32.mxu0 0.0
    %2238 = vmatmul.mubr.f32.gmra.mxu0 %v2169
    %v2239 = vpop.f32.mrf.mxu0
    %v2240 = vadd.f32 %v158, %v2239
    %v2241 = vpop.f32.mrf.mxu0
    %2242 = vdwg.mxu0
    %v2243 = vsel %vm288, %v2163, -inf
    %2244 = vmax.xlane.f32.xlu0 %v2243
    %v2245 = vpop.xlane.xlu0 %2244
    %v2246 = vsel %vm288, %v2240, -inf
    %2247 = vmax.xlane.f32.xlu0 %v2246
    %v2248 = vpop.xlane.xlu0 %2247
    %v2249 = vsub.f32 %v2163, %v2245
    %v2250 = vsub.f32 %v2240, %v2248
    %v2251 = vmul.f32 %v2249, 1.442695
    %v2252 = vpow.pop %v2251
    %v2253 = vmul.f32 %v2250, 1.442695
    %v2254 = vpow.pop %v2253
    %v2255 = vsel %vm288, %v2252, 0.0
    %2256 = vadd.xlane.f32.xlu0 %v2255
    %v2257 = vpop.xlane.xlu0 %2256
    %v2258 = vsel %vm288, %v2254, 0.0
    %2259 = vadd.xlane.f32.xlu0 %v2258
    %v2260 = vpop.xlane.xlu0 %2259
    %v2261 = vrcp.pop %v2257
    %v2262 = vmul.f32 %v2252, %v2261
    %v2263 = vrcp.pop %v2260
    %v2264 = vmul.f32 %v2254, %v2263
    %2265 = vrot.lane.b32.xlu0 %v2081, 64
    %v2266 = vpop.permute.xlu0 %2265
    %v2269 = vsel %vm288, %v2262, 0
    %2271 = vmatprep.subr.mxu0 0.0
    %2272 = vmatpush1.msra.mxu0 0.0
    %2273 = vmatprep.subr.mxu0 0.0
    %2274 = vmatpush1.msra.mxu0 0.0
    %2275 = vmatprep.subr.mxu0 0.0
    %2276 = vmatpush1.msra.mxu0 0.0
    %2277 = vmatprep.subr.mxu0 0.0
    %2278 = vmatpush1.msra.mxu0 0.0
    %2279 = vmatprep.subr.mxu0 0.0
    %2280 = vmatpush1.msra.mxu0 0.0
    %2281 = vmatprep.subr.mxu0 0.0
    %2282 = vmatpush1.msra.mxu0 0.0
    %2283 = vmatprep.subr.mxu0 0.0
    %2284 = vmatpush1.msra.mxu0 0.0
    %2285 = vmatprep.subr.mxu0 0.0
    %2286 = vmatpush1.msra.mxu0 0.0
    %2287 = vmatprep.subr.mxu0 0.0
    %2288 = vmatpush1.msra.mxu0 0.0
    %2289 = vmatprep.subr.mxu0 0.0
    %2290 = vmatpush1.msra.mxu0 0.0
    %2291 = vmatprep.subr.mxu0 0.0
    %2292 = vmatpush1.msra.mxu0 0.0
    %2293 = vmatprep.subr.mxu0 0.0
    %2294 = vmatpush1.msra.mxu0 0.0
    %2295 = vmatprep.subr.mxu0 0.0
    %2296 = vmatpush1.msra.mxu0 0.0
    %2297 = vmatprep.subr.mxu0 0.0
    %2298 = vmatpush1.msra.mxu0 0.0
    %2299 = vmatprep.subr.mxu0 0.0
    %2300 = vmatpush1.msra.mxu0 0.0
    %2301 = vmatprep.subr.mxu0 0.0
    %2302 = vmatpush1.msra.mxu0 %v2266
    %2303 = vmatprep.subr.mxu0 0.0
    %2304 = vmatpush2.msra.mxu0 0.0
    %2305 = vmatprep.subr.mxu0 0.0
    %2306 = vmatpush2.msra.mxu0 0.0
    %2307 = vmatprep.subr.mxu0 0.0
    %2308 = vmatpush2.msra.mxu0 0.0
    %2309 = vmatprep.subr.mxu0 0.0
    %2310 = vmatpush2.msra.mxu0 0.0
    %2311 = vmatprep.subr.mxu0 0.0
    %2312 = vmatpush2.msra.mxu0 0.0
    %2313 = vmatprep.subr.mxu0 0.0
    %2314 = vmatpush2.msra.mxu0 0.0
    %2315 = vmatprep.subr.mxu0 0.0
    %2316 = vmatpush2.msra.mxu0 0.0
    %2317 = vmatprep.subr.mxu0 0.0
    %2318 = vmatpush2.msra.mxu0 0.0
    %2319 = vmatprep.subr.mxu0 0.0
    %2320 = vmatpush2.msra.mxu0 0.0
    %2321 = vmatprep.subr.mxu0 0.0
    %2322 = vmatpush2.msra.mxu0 0.0
    %2323 = vmatprep.subr.mxu0 0.0
    %2324 = vmatpush2.msra.mxu0 0.0
    %2325 = vmatprep.subr.mxu0 0.0
    %2326 = vmatpush2.msra.mxu0 0.0
    %2327 = vmatprep.subr.mxu0 0.0
    %2328 = vmatpush2.msra.mxu0 0.0
    %2329 = vmatprep.subr.mxu0 0.0
    %2330 = vmatpush2.msra.mxu0 0.0
    %2331 = vmatprep.subr.mxu0 0.0
    %2332 = vmatpush2.msra.mxu0 0.0
    %2333 = vmatprep.subr.mxu0 0.0
    %2334 = vmatpush2.msra.mxu0 0.0
    %2335 = vmatprep.mubr.f32.mxu0 0.0
    %2336 = vmatmul.mubr.f32.gmra.mxu0 %v2269
    %v2337 = vpop.f32.mrf.mxu0
    %v2338 = vadd.f32 0.0, %v2337
    %v2339 = vpop.f32.mrf.mxu0
    %2340 = vdwg.mxu0
    %2341 = vrot.lane.b32.xlu0 %v2086, 64
    %v2342 = vpop.permute.xlu0 %2341
    %v2345 = vsel %vm288, %v2264, 0
    %2347 = vmatprep.subr.mxu0 0.0
    %2348 = vmatpush1.msra.mxu0 0.0
    %2349 = vmatprep.subr.mxu0 0.0
    %2350 = vmatpush1.msra.mxu0 0.0
    %2351 = vmatprep.subr.mxu0 0.0
    %2352 = vmatpush1.msra.mxu0 0.0
    %2353 = vmatprep.subr.mxu0 0.0
    %2354 = vmatpush1.msra.mxu0 0.0
    %2355 = vmatprep.subr.mxu0 0.0
    %2356 = vmatpush1.msra.mxu0 0.0
    %2357 = vmatprep.subr.mxu0 0.0
    %2358 = vmatpush1.msra.mxu0 0.0
    %2359 = vmatprep.subr.mxu0 0.0
    %2360 = vmatpush1.msra.mxu0 0.0
    %2361 = vmatprep.subr.mxu0 0.0
    %2362 = vmatpush1.msra.mxu0 0.0
    %2363 = vmatprep.subr.mxu0 0.0
    %2364 = vmatpush1.msra.mxu0 0.0
    %2365 = vmatprep.subr.mxu0 0.0
    %2366 = vmatpush1.msra.mxu0 0.0
    %2367 = vmatprep.subr.mxu0 0.0
    %2368 = vmatpush1.msra.mxu0 0.0
    %2369 = vmatprep.subr.mxu0 0.0
    %2370 = vmatpush1.msra.mxu0 0.0
    %2371 = vmatprep.subr.mxu0 0.0
    %2372 = vmatpush1.msra.mxu0 0.0
    %2373 = vmatprep.subr.mxu0 0.0
    %2374 = vmatpush1.msra.mxu0 0.0
    %2375 = vmatprep.subr.mxu0 0.0
    %2376 = vmatpush1.msra.mxu0 0.0
    %2377 = vmatprep.subr.mxu0 0.0
    %2378 = vmatpush1.msra.mxu0 %v2342
    %2379 = vmatprep.subr.mxu0 0.0
    %2380 = vmatpush2.msra.mxu0 0.0
    %2381 = vmatprep.subr.mxu0 0.0
    %2382 = vmatpush2.msra.mxu0 0.0
    %2383 = vmatprep.subr.mxu0 0.0
    %2384 = vmatpush2.msra.mxu0 0.0
    %2385 = vmatprep.subr.mxu0 0.0
    %2386 = vmatpush2.msra.mxu0 0.0
    %2387 = vmatprep.subr.mxu0 0.0
    %2388 = vmatpush2.msra.mxu0 0.0
    %2389 = vmatprep.subr.mxu0 0.0
    %2390 = vmatpush2.msra.mxu0 0.0
    %2391 = vmatprep.subr.mxu0 0.0
    %2392 = vmatpush2.msra.mxu0 0.0
    %2393 = vmatprep.subr.mxu0 0.0
    %2394 = vmatpush2.msra.mxu0 0.0
    %2395 = vmatprep.subr.mxu0 0.0
    %2396 = vmatpush2.msra.mxu0 0.0
    %2397 = vmatprep.subr.mxu0 0.0
    %2398 = vmatpush2.msra.mxu0 0.0
    %2399 = vmatprep.subr.mxu0 0.0
    %2400 = vmatpush2.msra.mxu0 0.0
    %2401 = vmatprep.subr.mxu0 0.0
    %2402 = vmatpush2.msra.mxu0 0.0
    %2403 = vmatprep.subr.mxu0 0.0
    %2404 = vmatpush2.msra.mxu0 0.0
    %2405 = vmatprep.subr.mxu0 0.0
    %2406 = vmatpush2.msra.mxu0 0.0
    %2407 = vmatprep.subr.mxu0 0.0
    %2408 = vmatpush2.msra.mxu0 0.0
    %2409 = vmatprep.subr.mxu0 0.0
    %2410 = vmatpush2.msra.mxu0 0.0
    %2411 = vmatprep.mubr.f32.mxu0 0.0
    %2412 = vmatmul.mubr.f32.gmra.mxu0 %v2345
    %v2413 = vpop.f32.mrf.mxu0
    %v2414 = vadd.f32 0.0, %v2413
    %v2415 = vpop.f32.mrf.mxu0
    %2416 = vdwg.mxu0
    %2417 = vrot.lane.b32.xlu0 %v2081, 120
    %v2418 = vpop.permute.xlu0 %2417
    %2419 = vrot.lane.b32.xlu0 %v2081, 88
    %v2420 = vpop.permute.xlu0 %2419
    %v2421 = vsel %vm288, %v2418, 0
    %v2423 = vsel %vm288, %v2420, 0
    %2425 = vmatprep.subr.mxu0 0.0
    %2426 = vmatpush1.xpose.msra.mxu0 0.0
    %2427 = vmatprep.subr.mxu0 0.0
    %2428 = vmatpush1.xpose.msra.mxu0 0.0
    %2429 = vmatprep.subr.mxu0 0.0
    %2430 = vmatpush1.xpose.msra.mxu0 0.0
    %2431 = vmatprep.subr.mxu0 0.0
    %2432 = vmatpush1.xpose.msra.mxu0 0.0
    %2433 = vmatprep.subr.mxu0 0.0
    %2434 = vmatpush1.xpose.msra.mxu0 0.0
    %2435 = vmatprep.subr.mxu0 0.0
    %2436 = vmatpush1.xpose.msra.mxu0 0.0
    %2437 = vmatprep.subr.mxu0 0.0
    %2438 = vmatpush1.xpose.msra.mxu0 0.0
    %2439 = vmatprep.subr.mxu0 0.0
    %2440 = vmatpush1.xpose.msra.mxu0 0.0
    %2441 = vmatprep.subr.mxu0 0.0
    %2442 = vmatpush1.xpose.msra.mxu0 0.0
    %2443 = vmatprep.subr.mxu0 0.0
    %2444 = vmatpush1.xpose.msra.mxu0 0.0
    %2445 = vmatprep.subr.mxu0 0.0
    %2446 = vmatpush1.xpose.msra.mxu0 0.0
    %2447 = vmatprep.subr.mxu0 0.0
    %2448 = vmatpush1.xpose.msra.mxu0 0.0
    %2449 = vmatprep.subr.mxu0 0.0
    %2450 = vmatpush1.xpose.msra.mxu0 0.0
    %2451 = vmatprep.subr.mxu0 0.0
    %2452 = vmatpush1.xpose.msra.mxu0 0.0
    %2453 = vmatprep.subr.mxu0 0.0
    %2454 = vmatpush1.xpose.msra.mxu0 0.0
    %2455 = vmatprep.subr.mxu0 0.0
    %2456 = vmatpush1.xpose.msra.mxu0 %v2423
    %2457 = vmatprep.subr.mxu0 0.0
    %2458 = vmatpush2.xpose.msra.mxu0 0.0
    %2459 = vmatprep.subr.mxu0 0.0
    %2460 = vmatpush2.xpose.msra.mxu0 0.0
    %2461 = vmatprep.subr.mxu0 0.0
    %2462 = vmatpush2.xpose.msra.mxu0 0.0
    %2463 = vmatprep.subr.mxu0 0.0
    %2464 = vmatpush2.xpose.msra.mxu0 0.0
    %2465 = vmatprep.subr.mxu0 0.0
    %2466 = vmatpush2.xpose.msra.mxu0 0.0
    %2467 = vmatprep.subr.mxu0 0.0
    %2468 = vmatpush2.xpose.msra.mxu0 0.0
    %2469 = vmatprep.subr.mxu0 0.0
    %2470 = vmatpush2.xpose.msra.mxu0 0.0
    %2471 = vmatprep.subr.mxu0 0.0
    %2472 = vmatpush2.xpose.msra.mxu0 0.0
    %2473 = vmatprep.subr.mxu0 0.0
    %2474 = vmatpush2.xpose.msra.mxu0 0.0
    %2475 = vmatprep.subr.mxu0 0.0
    %2476 = vmatpush2.xpose.msra.mxu0 0.0
    %2477 = vmatprep.subr.mxu0 0.0
    %2478 = vmatpush2.xpose.msra.mxu0 0.0
    %2479 = vmatprep.subr.mxu0 0.0
    %2480 = vmatpush2.xpose.msra.mxu0 0.0
    %2481 = vmatprep.subr.mxu0 0.0
    %2482 = vmatpush2.xpose.msra.mxu0 0.0
    %2483 = vmatprep.subr.mxu0 0.0
    %2484 = vmatpush2.xpose.msra.mxu0 0.0
    %2485 = vmatprep.subr.mxu0 0.0
    %2486 = vmatpush2.xpose.msra.mxu0 0.0
    %2487 = vmatprep.subr.mxu0 0.0
    %2488 = vmatpush2.xpose.msra.mxu0 0.0
    %2489 = vmatprep.mubr.f32.mxu0 0.0
    %2490 = vmatmul.mubr.f32.gmra.mxu0 %v2421
    %v2491 = vpop.f32.mrf.mxu0
    %v2492 = vadd.f32 %v158, %v2491
    %v2493 = vpop.f32.mrf.mxu0
    %2494 = vdwg.mxu0
    %2495 = vrot.lane.b32.xlu0 %v2086, 120
    %v2496 = vpop.permute.xlu0 %2495
    %2497 = vrot.lane.b32.xlu0 %v2086, 88
    %v2498 = vpop.permute.xlu0 %2497
    %v2499 = vsel %vm288, %v2496, 0
    %v2501 = vsel %vm288, %v2498, 0
    %2503 = vmatprep.subr.mxu0 0.0
    %2504 = vmatpush1.xpose.msra.mxu0 0.0
    %2505 = vmatprep.subr.mxu0 0.0
    %2506 = vmatpush1.xpose.msra.mxu0 0.0
    %2507 = vmatprep.subr.mxu0 0.0
    %2508 = vmatpush1.xpose.msra.mxu0 0.0
    %2509 = vmatprep.subr.mxu0 0.0
    %2510 = vmatpush1.xpose.msra.mxu0 0.0
    %2511 = vmatprep.subr.mxu0 0.0
    %2512 = vmatpush1.xpose.msra.mxu0 0.0
    %2513 = vmatprep.subr.mxu0 0.0
    %2514 = vmatpush1.xpose.msra.mxu0 0.0
    %2515 = vmatprep.subr.mxu0 0.0
    %2516 = vmatpush1.xpose.msra.mxu0 0.0
    %2517 = vmatprep.subr.mxu0 0.0
    %2518 = vmatpush1.xpose.msra.mxu0 0.0
    %2519 = vmatprep.subr.mxu0 0.0
    %2520 = vmatpush1.xpose.msra.mxu0 0.0
    %2521 = vmatprep.subr.mxu0 0.0
    %2522 = vmatpush1.xpose.msra.mxu0 0.0
    %2523 = vmatprep.subr.mxu0 0.0
    %2524 = vmatpush1.xpose.msra.mxu0 0.0
    %2525 = vmatprep.subr.mxu0 0.0
    %2526 = vmatpush1.xpose.msra.mxu0 0.0
    %2527 = vmatprep.subr.mxu0 0.0
    %2528 = vmatpush1.xpose.msra.mxu0 0.0
    %2529 = vmatprep.subr.mxu0 0.0
    %2530 = vmatpush1.xpose.msra.mxu0 0.0
    %2531 = vmatprep.subr.mxu0 0.0
    %2532 = vmatpush1.xpose.msra.mxu0 0.0
    %2533 = vmatprep.subr.mxu0 0.0
    %2534 = vmatpush1.xpose.msra.mxu0 %v2501
    %2535 = vmatprep.subr.mxu0 0.0
    %2536 = vmatpush2.xpose.msra.mxu0 0.0
    %2537 = vmatprep.subr.mxu0 0.0
    %2538 = vmatpush2.xpose.msra.mxu0 0.0
    %2539 = vmatprep.subr.mxu0 0.0
    %2540 = vmatpush2.xpose.msra.mxu0 0.0
    %2541 = vmatprep.subr.mxu0 0.0
    %2542 = vmatpush2.xpose.msra.mxu0 0.0
    %2543 = vmatprep.subr.mxu0 0.0
    %2544 = vmatpush2.xpose.msra.mxu0 0.0
    %2545 = vmatprep.subr.mxu0 0.0
    %2546 = vmatpush2.xpose.msra.mxu0 0.0
    %2547 = vmatprep.subr.mxu0 0.0
    %2548 = vmatpush2.xpose.msra.mxu0 0.0
    %2549 = vmatprep.subr.mxu0 0.0
    %2550 = vmatpush2.xpose.msra.mxu0 0.0
    %2551 = vmatprep.subr.mxu0 0.0
    %2552 = vmatpush2.xpose.msra.mxu0 0.0
    %2553 = vmatprep.subr.mxu0 0.0
    %2554 = vmatpush2.xpose.msra.mxu0 0.0
    %2555 = vmatprep.subr.mxu0 0.0
    %2556 = vmatpush2.xpose.msra.mxu0 0.0
    %2557 = vmatprep.subr.mxu0 0.0
    %2558 = vmatpush2.xpose.msra.mxu0 0.0
    %2559 = vmatprep.subr.mxu0 0.0
    %2560 = vmatpush2.xpose.msra.mxu0 0.0
    %2561 = vmatprep.subr.mxu0 0.0
    %2562 = vmatpush2.xpose.msra.mxu0 0.0
    %2563 = vmatprep.subr.mxu0 0.0
    %2564 = vmatpush2.xpose.msra.mxu0 0.0
    %2565 = vmatprep.subr.mxu0 0.0
    %2566 = vmatpush2.xpose.msra.mxu0 0.0
    %2567 = vmatprep.mubr.f32.mxu0 0.0
    %2568 = vmatmul.mubr.f32.gmra.mxu0 %v2499
    %v2569 = vpop.f32.mrf.mxu0
    %v2570 = vadd.f32 %v158, %v2569
    %v2571 = vpop.f32.mrf.mxu0
    %2572 = vdwg.mxu0
    %v2573 = vsel %vm288, %v2492, -inf
    %2574 = vmax.xlane.f32.xlu0 %v2573
    %v2575 = vpop.xlane.xlu0 %2574
    %v2576 = vsel %vm288, %v2570, -inf
    %2577 = vmax.xlane.f32.xlu0 %v2576
    %v2578 = vpop.xlane.xlu0 %2577
    %v2579 = vsub.f32 %v2492, %v2575
    %v2580 = vsub.f32 %v2570, %v2578
    %v2581 = vmul.f32 %v2579, 1.442695
    %v2582 = vpow.pop %v2581
    %v2583 = vmul.f32 %v2580, 1.442695
    %v2584 = vpow.pop %v2583
    %v2585 = vsel %vm288, %v2582, 0.0
    %2586 = vadd.xlane.f32.xlu0 %v2585
    %v2587 = vpop.xlane.xlu0 %2586
    %v2588 = vsel %vm288, %v2584, 0.0
    %2589 = vadd.xlane.f32.xlu0 %v2588
    %v2590 = vpop.xlane.xlu0 %2589
    %v2591 = vrcp.pop %v2587
    %v2592 = vmul.f32 %v2582, %v2591
    %v2593 = vrcp.pop %v2590
    %v2594 = vmul.f32 %v2584, %v2593
    %2595 = vrot.lane.b32.xlu0 %v2081, 56
    %v2596 = vpop.permute.xlu0 %2595
    %v2599 = vsel %vm288, %v2592, 0
    %2601 = vmatprep.subr.mxu0 0.0
    %2602 = vmatpush1.msra.mxu0 0.0
    %2603 = vmatprep.subr.mxu0 0.0
    %2604 = vmatpush1.msra.mxu0 0.0
    %2605 = vmatprep.subr.mxu0 0.0
    %2606 = vmatpush1.msra.mxu0 0.0
    %2607 = vmatprep.subr.mxu0 0.0
    %2608 = vmatpush1.msra.mxu0 0.0
    %2609 = vmatprep.subr.mxu0 0.0
    %2610 = vmatpush1.msra.mxu0 0.0
    %2611 = vmatprep.subr.mxu0 0.0
    %2612 = vmatpush1.msra.mxu0 0.0
    %2613 = vmatprep.subr.mxu0 0.0
    %2614 = vmatpush1.msra.mxu0 0.0
    %2615 = vmatprep.subr.mxu0 0.0
    %2616 = vmatpush1.msra.mxu0 0.0
    %2617 = vmatprep.subr.mxu0 0.0
    %2618 = vmatpush1.msra.mxu0 0.0
    %2619 = vmatprep.subr.mxu0 0.0
    %2620 = vmatpush1.msra.mxu0 0.0
    %2621 = vmatprep.subr.mxu0 0.0
    %2622 = vmatpush1.msra.mxu0 0.0
    %2623 = vmatprep.subr.mxu0 0.0
    %2624 = vmatpush1.msra.mxu0 0.0
    %2625 = vmatprep.subr.mxu0 0.0
    %2626 = vmatpush1.msra.mxu0 0.0
    %2627 = vmatprep.subr.mxu0 0.0
    %2628 = vmatpush1.msra.mxu0 0.0
    %2629 = vmatprep.subr.mxu0 0.0
    %2630 = vmatpush1.msra.mxu0 0.0
    %2631 = vmatprep.subr.mxu0 0.0
    %2632 = vmatpush1.msra.mxu0 %v2596
    %2633 = vmatprep.subr.mxu0 0.0
    %2634 = vmatpush2.msra.mxu0 0.0
    %2635 = vmatprep.subr.mxu0 0.0
    %2636 = vmatpush2.msra.mxu0 0.0
    %2637 = vmatprep.subr.mxu0 0.0
    %2638 = vmatpush2.msra.mxu0 0.0
    %2639 = vmatprep.subr.mxu0 0.0
    %2640 = vmatpush2.msra.mxu0 0.0
    %2641 = vmatprep.subr.mxu0 0.0
    %2642 = vmatpush2.msra.mxu0 0.0
    %2643 = vmatprep.subr.mxu0 0.0
    %2644 = vmatpush2.msra.mxu0 0.0
    %2645 = vmatprep.subr.mxu0 0.0
    %2646 = vmatpush2.msra.mxu0 0.0
    %2647 = vmatprep.subr.mxu0 0.0
    %2648 = vmatpush2.msra.mxu0 0.0
    %2649 = vmatprep.subr.mxu0 0.0
    %2650 = vmatpush2.msra.mxu0 0.0
    %2651 = vmatprep.subr.mxu0 0.0
    %2652 = vmatpush2.msra.mxu0 0.0
    %2653 = vmatprep.subr.mxu0 0.0
    %2654 = vmatpush2.msra.mxu0 0.0
    %2655 = vmatprep.subr.mxu0 0.0
    %2656 = vmatpush2.msra.mxu0 0.0
    %2657 = vmatprep.subr.mxu0 0.0
    %2658 = vmatpush2.msra.mxu0 0.0
    %2659 = vmatprep.subr.mxu0 0.0
    %2660 = vmatpush2.msra.mxu0 0.0
    %2661 = vmatprep.subr.mxu0 0.0
    %2662 = vmatpush2.msra.mxu0 0.0
    %2663 = vmatprep.subr.mxu0 0.0
    %2664 = vmatpush2.msra.mxu0 0.0
    %2665 = vmatprep.mubr.f32.mxu0 0.0
    %2666 = vmatmul.mubr.f32.gmra.mxu0 %v2599
    %v2667 = vpop.f32.mrf.mxu0
    %v2668 = vadd.f32 0.0, %v2667
    %v2669 = vpop.f32.mrf.mxu0
    %2670 = vdwg.mxu0
    %2671 = vrot.lane.b32.xlu0 %v2086, 56
    %v2672 = vpop.permute.xlu0 %2671
    %v2675 = vsel %vm288, %v2594, 0
    %2677 = vmatprep.subr.mxu0 0.0
    %2678 = vmatpush1.msra.mxu0 0.0
    %2679 = vmatprep.subr.mxu0 0.0
    %2680 = vmatpush1.msra.mxu0 0.0
    %2681 = vmatprep.subr.mxu0 0.0
    %2682 = vmatpush1.msra.mxu0 0.0
    %2683 = vmatprep.subr.mxu0 0.0
    %2684 = vmatpush1.msra.mxu0 0.0
    %2685 = vmatprep.subr.mxu0 0.0
    %2686 = vmatpush1.msra.mxu0 0.0
    %2687 = vmatprep.subr.mxu0 0.0
    %2688 = vmatpush1.msra.mxu0 0.0
    %2689 = vmatprep.subr.mxu0 0.0
    %2690 = vmatpush1.msra.mxu0 0.0
    %2691 = vmatprep.subr.mxu0 0.0
    %2692 = vmatpush1.msra.mxu0 0.0
    %2693 = vmatprep.subr.mxu0 0.0
    %2694 = vmatpush1.msra.mxu0 0.0
    %2695 = vmatprep.subr.mxu0 0.0
    %2696 = vmatpush1.msra.mxu0 0.0
    %2697 = vmatprep.subr.mxu0 0.0
    %2698 = vmatpush1.msra.mxu0 0.0
    %2699 = vmatprep.subr.mxu0 0.0
    %2700 = vmatpush1.msra.mxu0 0.0
    %2701 = vmatprep.subr.mxu0 0.0
    %2702 = vmatpush1.msra.mxu0 0.0
    %2703 = vmatprep.subr.mxu0 0.0
    %2704 = vmatpush1.msra.mxu0 0.0
    %2705 = vmatprep.subr.mxu0 0.0
    %2706 = vmatpush1.msra.mxu0 0.0
    %2707 = vmatprep.subr.mxu0 0.0
    %2708 = vmatpush1.msra.mxu0 %v2672
    %2709 = vmatprep.subr.mxu0 0.0
    %2710 = vmatpush2.msra.mxu0 0.0
    %2711 = vmatprep.subr.mxu0 0.0
    %2712 = vmatpush2.msra.mxu0 0.0
    %2713 = vmatprep.subr.mxu0 0.0
    %2714 = vmatpush2.msra.mxu0 0.0
    %2715 = vmatprep.subr.mxu0 0.0
    %2716 = vmatpush2.msra.mxu0 0.0
    %2717 = vmatprep.subr.mxu0 0.0
    %2718 = vmatpush2.msra.mxu0 0.0
    %2719 = vmatprep.subr.mxu0 0.0
    %2720 = vmatpush2.msra.mxu0 0.0
    %2721 = vmatprep.subr.mxu0 0.0
    %2722 = vmatpush2.msra.mxu0 0.0
    %2723 = vmatprep.subr.mxu0 0.0
    %2724 = vmatpush2.msra.mxu0 0.0
    %2725 = vmatprep.subr.mxu0 0.0
    %2726 = vmatpush2.msra.mxu0 0.0
    %2727 = vmatprep.subr.mxu0 0.0
    %2728 = vmatpush2.msra.mxu0 0.0
    %2729 = vmatprep.subr.mxu0 0.0
    %2730 = vmatpush2.msra.mxu0 0.0
    %2731 = vmatprep.subr.mxu0 0.0
    %2732 = vmatpush2.msra.mxu0 0.0
    %2733 = vmatprep.subr.mxu0 0.0
    %2734 = vmatpush2.msra.mxu0 0.0
    %2735 = vmatprep.subr.mxu0 0.0
    %2736 = vmatpush2.msra.mxu0 0.0
    %2737 = vmatprep.subr.mxu0 0.0
    %2738 = vmatpush2.msra.mxu0 0.0
    %2739 = vmatprep.subr.mxu0 0.0
    %2740 = vmatpush2.msra.mxu0 0.0
    %2741 = vmatprep.mubr.f32.mxu0 0.0
    %2742 = vmatmul.mubr.f32.gmra.mxu0 %v2675
    %v2743 = vpop.f32.mrf.mxu0
    %v2744 = vadd.f32 0.0, %v2743
    %v2745 = vpop.f32.mrf.mxu0
    %2746 = vdwg.mxu0
    %2747 = vrot.lane.b32.xlu0 %v2081, 112
    %v2748 = vpop.permute.xlu0 %2747
    %2749 = vrot.lane.b32.xlu0 %v2081, 80
    %v2750 = vpop.permute.xlu0 %2749
    %v2751 = vsel %vm288, %v2748, 0
    %v2753 = vsel %vm288, %v2750, 0
    %2755 = vmatprep.subr.mxu0 0.0
    %2756 = vmatpush1.xpose.msra.mxu0 0.0
    %2757 = vmatprep.subr.mxu0 0.0
    %2758 = vmatpush1.xpose.msra.mxu0 0.0
    %2759 = vmatprep.subr.mxu0 0.0
    %2760 = vmatpush1.xpose.msra.mxu0 0.0
    %2761 = vmatprep.subr.mxu0 0.0
    %2762 = vmatpush1.xpose.msra.mxu0 0.0
    %2763 = vmatprep.subr.mxu0 0.0
    %2764 = vmatpush1.xpose.msra.mxu0 0.0
    %2765 = vmatprep.subr.mxu0 0.0
    %2766 = vmatpush1.xpose.msra.mxu0 0.0
    %2767 = vmatprep.subr.mxu0 0.0
    %2768 = vmatpush1.xpose.msra.mxu0 0.0
    %2769 = vmatprep.subr.mxu0 0.0
    %2770 = vmatpush1.xpose.msra.mxu0 0.0
    %2771 = vmatprep.subr.mxu0 0.0
    %2772 = vmatpush1.xpose.msra.mxu0 0.0
    %2773 = vmatprep.subr.mxu0 0.0
    %2774 = vmatpush1.xpose.msra.mxu0 0.0
    %2775 = vmatprep.subr.mxu0 0.0
    %2776 = vmatpush1.xpose.msra.mxu0 0.0
    %2777 = vmatprep.subr.mxu0 0.0
    %2778 = vmatpush1.xpose.msra.mxu0 0.0
    %2779 = vmatprep.subr.mxu0 0.0
    %2780 = vmatpush1.xpose.msra.mxu0 0.0
    %2781 = vmatprep.subr.mxu0 0.0
    %2782 = vmatpush1.xpose.msra.mxu0 0.0
    %2783 = vmatprep.subr.mxu0 0.0
    %2784 = vmatpush1.xpose.msra.mxu0 0.0
    %2785 = vmatprep.subr.mxu0 0.0
    %2786 = vmatpush1.xpose.msra.mxu0 %v2753
    %2787 = vmatprep.subr.mxu0 0.0
    %2788 = vmatpush2.xpose.msra.mxu0 0.0
    %2789 = vmatprep.subr.mxu0 0.0
    %2790 = vmatpush2.xpose.msra.mxu0 0.0
    %2791 = vmatprep.subr.mxu0 0.0
    %2792 = vmatpush2.xpose.msra.mxu0 0.0
    %2793 = vmatprep.subr.mxu0 0.0
    %2794 = vmatpush2.xpose.msra.mxu0 0.0
    %2795 = vmatprep.subr.mxu0 0.0
    %2796 = vmatpush2.xpose.msra.mxu0 0.0
    %2797 = vmatprep.subr.mxu0 0.0
    %2798 = vmatpush2.xpose.msra.mxu0 0.0
    %2799 = vmatprep.subr.mxu0 0.0
    %2800 = vmatpush2.xpose.msra.mxu0 0.0
    %2801 = vmatprep.subr.mxu0 0.0
    %2802 = vmatpush2.xpose.msra.mxu0 0.0
    %2803 = vmatprep.subr.mxu0 0.0
    %2804 = vmatpush2.xpose.msra.mxu0 0.0
    %2805 = vmatprep.subr.mxu0 0.0
    %2806 = vmatpush2.xpose.msra.mxu0 0.0
    %2807 = vmatprep.subr.mxu0 0.0
    %2808 = vmatpush2.xpose.msra.mxu0 0.0
    %2809 = vmatprep.subr.mxu0 0.0
    %2810 = vmatpush2.xpose.msra.mxu0 0.0
    %2811 = vmatprep.subr.mxu0 0.0
    %2812 = vmatpush2.xpose.msra.mxu0 0.0
    %2813 = vmatprep.subr.mxu0 0.0
    %2814 = vmatpush2.xpose.msra.mxu0 0.0
    %2815 = vmatprep.subr.mxu0 0.0
    %2816 = vmatpush2.xpose.msra.mxu0 0.0
    %2817 = vmatprep.subr.mxu0 0.0
    %2818 = vmatpush2.xpose.msra.mxu0 0.0
    %2819 = vmatprep.mubr.f32.mxu0 0.0
    %2820 = vmatmul.mubr.f32.gmra.mxu0 %v2751
    %v2821 = vpop.f32.mrf.mxu0
    %v2822 = vadd.f32 %v158, %v2821
    %v2823 = vpop.f32.mrf.mxu0
    %2824 = vdwg.mxu0
    %2825 = vrot.lane.b32.xlu0 %v2086, 112
    %v2826 = vpop.permute.xlu0 %2825
    %2827 = vrot.lane.b32.xlu0 %v2086, 80
    %v2828 = vpop.permute.xlu0 %2827
    %v2829 = vsel %vm288, %v2826, 0
    %v2831 = vsel %vm288, %v2828, 0
    %2833 = vmatprep.subr.mxu0 0.0
    %2834 = vmatpush1.xpose.msra.mxu0 0.0
    %2835 = vmatprep.subr.mxu0 0.0
    %2836 = vmatpush1.xpose.msra.mxu0 0.0
    %2837 = vmatprep.subr.mxu0 0.0
    %2838 = vmatpush1.xpose.msra.mxu0 0.0
    %2839 = vmatprep.subr.mxu0 0.0
    %2840 = vmatpush1.xpose.msra.mxu0 0.0
    %2841 = vmatprep.subr.mxu0 0.0
    %2842 = vmatpush1.xpose.msra.mxu0 0.0
    %2843 = vmatprep.subr.mxu0 0.0
    %2844 = vmatpush1.xpose.msra.mxu0 0.0
    %2845 = vmatprep.subr.mxu0 0.0
    %2846 = vmatpush1.xpose.msra.mxu0 0.0
    %2847 = vmatprep.subr.mxu0 0.0
    %2848 = vmatpush1.xpose.msra.mxu0 0.0
    %2849 = vmatprep.subr.mxu0 0.0
    %2850 = vmatpush1.xpose.msra.mxu0 0.0
    %2851 = vmatprep.subr.mxu0 0.0
    %2852 = vmatpush1.xpose.msra.mxu0 0.0
    %2853 = vmatprep.subr.mxu0 0.0
    %2854 = vmatpush1.xpose.msra.mxu0 0.0
    %2855 = vmatprep.subr.mxu0 0.0
    %2856 = vmatpush1.xpose.msra.mxu0 0.0
    %2857 = vmatprep.subr.mxu0 0.0
    %2858 = vmatpush1.xpose.msra.mxu0 0.0
    %2859 = vmatprep.subr.mxu0 0.0
    %2860 = vmatpush1.xpose.msra.mxu0 0.0
    %2861 = vmatprep.subr.mxu0 0.0
    %2862 = vmatpush1.xpose.msra.mxu0 0.0
    %2863 = vmatprep.subr.mxu0 0.0
    %2864 = vmatpush1.xpose.msra.mxu0 %v2831
    %2865 = vmatprep.subr.mxu0 0.0
    %2866 = vmatpush2.xpose.msra.mxu0 0.0
    %2867 = vmatprep.subr.mxu0 0.0
    %2868 = vmatpush2.xpose.msra.mxu0 0.0
    %2869 = vmatprep.subr.mxu0 0.0
    %2870 = vmatpush2.xpose.msra.mxu0 0.0
    %2871 = vmatprep.subr.mxu0 0.0
    %2872 = vmatpush2.xpose.msra.mxu0 0.0
    %2873 = vmatprep.subr.mxu0 0.0
    %2874 = vmatpush2.xpose.msra.mxu0 0.0
    %2875 = vmatprep.subr.mxu0 0.0
    %2876 = vmatpush2.xpose.msra.mxu0 0.0
    %2877 = vmatprep.subr.mxu0 0.0
    %2878 = vmatpush2.xpose.msra.mxu0 0.0
    %2879 = vmatprep.subr.mxu0 0.0
    %2880 = vmatpush2.xpose.msra.mxu0 0.0
    %2881 = vmatprep.subr.mxu0 0.0
    %2882 = vmatpush2.xpose.msra.mxu0 0.0
    %2883 = vmatprep.subr.mxu0 0.0
    %2884 = vmatpush2.xpose.msra.mxu0 0.0
    %2885 = vmatprep.subr.mxu0 0.0
    %2886 = vmatpush2.xpose.msra.mxu0 0.0
    %2887 = vmatprep.subr.mxu0 0.0
    %2888 = vmatpush2.xpose.msra.mxu0 0.0
    %2889 = vmatprep.subr.mxu0 0.0
    %2890 = vmatpush2.xpose.msra.mxu0 0.0
    %2891 = vmatprep.subr.mxu0 0.0
    %2892 = vmatpush2.xpose.msra.mxu0 0.0
    %2893 = vmatprep.subr.mxu0 0.0
    %2894 = vmatpush2.xpose.msra.mxu0 0.0
    %2895 = vmatprep.subr.mxu0 0.0
    %2896 = vmatpush2.xpose.msra.mxu0 0.0
    %2897 = vmatprep.mubr.f32.mxu0 0.0
    %2898 = vmatmul.mubr.f32.gmra.mxu0 %v2829
    %v2899 = vpop.f32.mrf.mxu0
    %v2900 = vadd.f32 %v158, %v2899
    %v2901 = vpop.f32.mrf.mxu0
    %2902 = vdwg.mxu0
    %v2903 = vsel %vm288, %v2822, -inf
    %2904 = vmax.xlane.f32.xlu0 %v2903
    %v2905 = vpop.xlane.xlu0 %2904
    %v2906 = vsel %vm288, %v2900, -inf
    %2907 = vmax.xlane.f32.xlu0 %v2906
    %v2908 = vpop.xlane.xlu0 %2907
    %v2909 = vsub.f32 %v2822, %v2905
    %v2910 = vsub.f32 %v2900, %v2908
    %v2911 = vmul.f32 %v2909, 1.442695
    %v2912 = vpow.pop %v2911
    %v2913 = vmul.f32 %v2910, 1.442695
    %v2914 = vpow.pop %v2913
    %v2915 = vsel %vm288, %v2912, 0.0
    %2916 = vadd.xlane.f32.xlu0 %v2915
    %v2917 = vpop.xlane.xlu0 %2916
    %v2918 = vsel %vm288, %v2914, 0.0
    %2919 = vadd.xlane.f32.xlu0 %v2918
    %v2920 = vpop.xlane.xlu0 %2919
    %v2921 = vrcp.pop %v2917
    %v2922 = vmul.f32 %v2912, %v2921
    %v2923 = vrcp.pop %v2920
    %v2924 = vmul.f32 %v2914, %v2923
    %2925 = vrot.lane.b32.xlu0 %v2081, 48
    %v2926 = vpop.permute.xlu0 %2925
    %v2929 = vsel %vm288, %v2922, 0
    %2931 = vmatprep.subr.mxu0 0.0
    %2932 = vmatpush1.msra.mxu0 0.0
    %2933 = vmatprep.subr.mxu0 0.0
    %2934 = vmatpush1.msra.mxu0 0.0
    %2935 = vmatprep.subr.mxu0 0.0
    %2936 = vmatpush1.msra.mxu0 0.0
    %2937 = vmatprep.subr.mxu0 0.0
    %2938 = vmatpush1.msra.mxu0 0.0
    %2939 = vmatprep.subr.mxu0 0.0
    %2940 = vmatpush1.msra.mxu0 0.0
    %2941 = vmatprep.subr.mxu0 0.0
    %2942 = vmatpush1.msra.mxu0 0.0
    %2943 = vmatprep.subr.mxu0 0.0
    %2944 = vmatpush1.msra.mxu0 0.0
    %2945 = vmatprep.subr.mxu0 0.0
    %2946 = vmatpush1.msra.mxu0 0.0
    %2947 = vmatprep.subr.mxu0 0.0
    %2948 = vmatpush1.msra.mxu0 0.0
    %2949 = vmatprep.subr.mxu0 0.0
    %2950 = vmatpush1.msra.mxu0 0.0
    %2951 = vmatprep.subr.mxu0 0.0
    %2952 = vmatpush1.msra.mxu0 0.0
    %2953 = vmatprep.subr.mxu0 0.0
    %2954 = vmatpush1.msra.mxu0 0.0
    %2955 = vmatprep.subr.mxu0 0.0
    %2956 = vmatpush1.msra.mxu0 0.0
    %2957 = vmatprep.subr.mxu0 0.0
    %2958 = vmatpush1.msra.mxu0 0.0
    %2959 = vmatprep.subr.mxu0 0.0
    %2960 = vmatpush1.msra.mxu0 0.0
    %2961 = vmatprep.subr.mxu0 0.0
    %2962 = vmatpush1.msra.mxu0 %v2926
    %2963 = vmatprep.subr.mxu0 0.0
    %2964 = vmatpush2.msra.mxu0 0.0
    %2965 = vmatprep.subr.mxu0 0.0
    %2966 = vmatpush2.msra.mxu0 0.0
    %2967 = vmatprep.subr.mxu0 0.0
    %2968 = vmatpush2.msra.mxu0 0.0
    %2969 = vmatprep.subr.mxu0 0.0
    %2970 = vmatpush2.msra.mxu0 0.0
    %2971 = vmatprep.subr.mxu0 0.0
    %2972 = vmatpush2.msra.mxu0 0.0
    %2973 = vmatprep.subr.mxu0 0.0
    %2974 = vmatpush2.msra.mxu0 0.0
    %2975 = vmatprep.subr.mxu0 0.0
    %2976 = vmatpush2.msra.mxu0 0.0
    %2977 = vmatprep.subr.mxu0 0.0
    %2978 = vmatpush2.msra.mxu0 0.0
    %2979 = vmatprep.subr.mxu0 0.0
    %2980 = vmatpush2.msra.mxu0 0.0
    %2981 = vmatprep.subr.mxu0 0.0
    %2982 = vmatpush2.msra.mxu0 0.0
    %2983 = vmatprep.subr.mxu0 0.0
    %2984 = vmatpush2.msra.mxu0 0.0
    %2985 = vmatprep.subr.mxu0 0.0
    %2986 = vmatpush2.msra.mxu0 0.0
    %2987 = vmatprep.subr.mxu0 0.0
    %2988 = vmatpush2.msra.mxu0 0.0
    %2989 = vmatprep.subr.mxu0 0.0
    %2990 = vmatpush2.msra.mxu0 0.0
    %2991 = vmatprep.subr.mxu0 0.0
    %2992 = vmatpush2.msra.mxu0 0.0
    %2993 = vmatprep.subr.mxu0 0.0
    %2994 = vmatpush2.msra.mxu0 0.0
    %2995 = vmatprep.mubr.f32.mxu0 0.0
    %2996 = vmatmul.mubr.f32.gmra.mxu0 %v2929
    %v2997 = vpop.f32.mrf.mxu0
    %v2998 = vadd.f32 0.0, %v2997
    %v2999 = vpop.f32.mrf.mxu0
    %3000 = vdwg.mxu0
    %3001 = vrot.lane.b32.xlu0 %v2086, 48
    %v3002 = vpop.permute.xlu0 %3001
    %v3005 = vsel %vm288, %v2924, 0
    %3007 = vmatprep.subr.mxu0 0.0
    %3008 = vmatpush1.msra.mxu0 0.0
    %3009 = vmatprep.subr.mxu0 0.0
    %3010 = vmatpush1.msra.mxu0 0.0
    %3011 = vmatprep.subr.mxu0 0.0
    %3012 = vmatpush1.msra.mxu0 0.0
    %3013 = vmatprep.subr.mxu0 0.0
    %3014 = vmatpush1.msra.mxu0 0.0
    %3015 = vmatprep.subr.mxu0 0.0
    %3016 = vmatpush1.msra.mxu0 0.0
    %3017 = vmatprep.subr.mxu0 0.0
    %3018 = vmatpush1.msra.mxu0 0.0
    %3019 = vmatprep.subr.mxu0 0.0
    %3020 = vmatpush1.msra.mxu0 0.0
    %3021 = vmatprep.subr.mxu0 0.0
    %3022 = vmatpush1.msra.mxu0 0.0
    %3023 = vmatprep.subr.mxu0 0.0
    %3024 = vmatpush1.msra.mxu0 0.0
    %3025 = vmatprep.subr.mxu0 0.0
    %3026 = vmatpush1.msra.mxu0 0.0
    %3027 = vmatprep.subr.mxu0 0.0
    %3028 = vmatpush1.msra.mxu0 0.0
    %3029 = vmatprep.subr.mxu0 0.0
    %3030 = vmatpush1.msra.mxu0 0.0
    %3031 = vmatprep.subr.mxu0 0.0
    %3032 = vmatpush1.msra.mxu0 0.0
    %3033 = vmatprep.subr.mxu0 0.0
    %3034 = vmatpush1.msra.mxu0 0.0
    %3035 = vmatprep.subr.mxu0 0.0
    %3036 = vmatpush1.msra.mxu0 0.0
    %3037 = vmatprep.subr.mxu0 0.0
    %3038 = vmatpush1.msra.mxu0 %v3002
    %3039 = vmatprep.subr.mxu0 0.0
    %3040 = vmatpush2.msra.mxu0 0.0
    %3041 = vmatprep.subr.mxu0 0.0
    %3042 = vmatpush2.msra.mxu0 0.0
    %3043 = vmatprep.subr.mxu0 0.0
    %3044 = vmatpush2.msra.mxu0 0.0
    %3045 = vmatprep.subr.mxu0 0.0
    %3046 = vmatpush2.msra.mxu0 0.0
    %3047 = vmatprep.subr.mxu0 0.0
    %3048 = vmatpush2.msra.mxu0 0.0
    %3049 = vmatprep.subr.mxu0 0.0
    %3050 = vmatpush2.msra.mxu0 0.0
    %3051 = vmatprep.subr.mxu0 0.0
    %3052 = vmatpush2.msra.mxu0 0.0
    %3053 = vmatprep.subr.mxu0 0.0
    %3054 = vmatpush2.msra.mxu0 0.0
    %3055 = vmatprep.subr.mxu0 0.0
    %3056 = vmatpush2.msra.mxu0 0.0
    %3057 = vmatprep.subr.mxu0 0.0
    %3058 = vmatpush2.msra.mxu0 0.0
    %3059 = vmatprep.subr.mxu0 0.0
    %3060 = vmatpush2.msra.mxu0 0.0
    %3061 = vmatprep.subr.mxu0 0.0
    %3062 = vmatpush2.msra.mxu0 0.0
    %3063 = vmatprep.subr.mxu0 0.0
    %3064 = vmatpush2.msra.mxu0 0.0
    %3065 = vmatprep.subr.mxu0 0.0
    %3066 = vmatpush2.msra.mxu0 0.0
    %3067 = vmatprep.subr.mxu0 0.0
    %3068 = vmatpush2.msra.mxu0 0.0
    %3069 = vmatprep.subr.mxu0 0.0
    %3070 = vmatpush2.msra.mxu0 0.0
    %3071 = vmatprep.mubr.f32.mxu0 0.0
    %3072 = vmatmul.mubr.f32.gmra.mxu0 %v3005
    %v3073 = vpop.f32.mrf.mxu0
    %v3074 = vadd.f32 0.0, %v3073
    %v3075 = vpop.f32.mrf.mxu0
    %3076 = vdwg.mxu0
    %3077 = vrot.lane.b32.xlu0 %v2081, 104
    %v3078 = vpop.permute.xlu0 %3077
    %3079 = vrot.lane.b32.xlu0 %v2081, 72
    %v3080 = vpop.permute.xlu0 %3079
    %v3081 = vsel %vm288, %v3078, 0
    %v3083 = vsel %vm288, %v3080, 0
    %3085 = vmatprep.subr.mxu0 0.0
    %3086 = vmatpush1.xpose.msra.mxu0 0.0
    %3087 = vmatprep.subr.mxu0 0.0
    %3088 = vmatpush1.xpose.msra.mxu0 0.0
    %3089 = vmatprep.subr.mxu0 0.0
    %3090 = vmatpush1.xpose.msra.mxu0 0.0
    %3091 = vmatprep.subr.mxu0 0.0
    %3092 = vmatpush1.xpose.msra.mxu0 0.0
    %3093 = vmatprep.subr.mxu0 0.0
    %3094 = vmatpush1.xpose.msra.mxu0 0.0
    %3095 = vmatprep.subr.mxu0 0.0
    %3096 = vmatpush1.xpose.msra.mxu0 0.0
    %3097 = vmatprep.subr.mxu0 0.0
    %3098 = vmatpush1.xpose.msra.mxu0 0.0
    %3099 = vmatprep.subr.mxu0 0.0
    %3100 = vmatpush1.xpose.msra.mxu0 0.0
    %3101 = vmatprep.subr.mxu0 0.0
    %3102 = vmatpush1.xpose.msra.mxu0 0.0
    %3103 = vmatprep.subr.mxu0 0.0
    %3104 = vmatpush1.xpose.msra.mxu0 0.0
    %3105 = vmatprep.subr.mxu0 0.0
    %3106 = vmatpush1.xpose.msra.mxu0 0.0
    %3107 = vmatprep.subr.mxu0 0.0
    %3108 = vmatpush1.xpose.msra.mxu0 0.0
    %3109 = vmatprep.subr.mxu0 0.0
    %3110 = vmatpush1.xpose.msra.mxu0 0.0
    %3111 = vmatprep.subr.mxu0 0.0
    %3112 = vmatpush1.xpose.msra.mxu0 0.0
    %3113 = vmatprep.subr.mxu0 0.0
    %3114 = vmatpush1.xpose.msra.mxu0 0.0
    %3115 = vmatprep.subr.mxu0 0.0
    %3116 = vmatpush1.xpose.msra.mxu0 %v3083
    %3117 = vmatprep.subr.mxu0 0.0
    %3118 = vmatpush2.xpose.msra.mxu0 0.0
    %3119 = vmatprep.subr.mxu0 0.0
    %3120 = vmatpush2.xpose.msra.mxu0 0.0
    %3121 = vmatprep.subr.mxu0 0.0
    %3122 = vmatpush2.xpose.msra.mxu0 0.0
    %3123 = vmatprep.subr.mxu0 0.0
    %3124 = vmatpush2.xpose.msra.mxu0 0.0
    %3125 = vmatprep.subr.mxu0 0.0
    %3126 = vmatpush2.xpose.msra.mxu0 0.0
    %3127 = vmatprep.subr.mxu0 0.0
    %3128 = vmatpush2.xpose.msra.mxu0 0.0
    %3129 = vmatprep.subr.mxu0 0.0
    %3130 = vmatpush2.xpose.msra.mxu0 0.0
    %3131 = vmatprep.subr.mxu0 0.0
    %3132 = vmatpush2.xpose.msra.mxu0 0.0
    %3133 = vmatprep.subr.mxu0 0.0
    %3134 = vmatpush2.xpose.msra.mxu0 0.0
    %3135 = vmatprep.subr.mxu0 0.0
    %3136 = vmatpush2.xpose.msra.mxu0 0.0
    %3137 = vmatprep.subr.mxu0 0.0
    %3138 = vmatpush2.xpose.msra.mxu0 0.0
    %3139 = vmatprep.subr.mxu0 0.0
    %3140 = vmatpush2.xpose.msra.mxu0 0.0
    %3141 = vmatprep.subr.mxu0 0.0
    %3142 = vmatpush2.xpose.msra.mxu0 0.0
    %3143 = vmatprep.subr.mxu0 0.0
    %3144 = vmatpush2.xpose.msra.mxu0 0.0
    %3145 = vmatprep.subr.mxu0 0.0
    %3146 = vmatpush2.xpose.msra.mxu0 0.0
    %3147 = vmatprep.subr.mxu0 0.0
    %3148 = vmatpush2.xpose.msra.mxu0 0.0
    %3149 = vmatprep.mubr.f32.mxu0 0.0
    %3150 = vmatmul.mubr.f32.gmra.mxu0 %v3081
    %v3151 = vpop.f32.mrf.mxu0
    %v3152 = vadd.f32 %v158, %v3151
    %v3153 = vpop.f32.mrf.mxu0
    %3154 = vdwg.mxu0
    %3155 = vrot.lane.b32.xlu0 %v2086, 104
    %v3156 = vpop.permute.xlu0 %3155
    %3157 = vrot.lane.b32.xlu0 %v2086, 72
    %v3158 = vpop.permute.xlu0 %3157
    %v3159 = vsel %vm288, %v3156, 0
    %v3161 = vsel %vm288, %v3158, 0
    %3163 = vmatprep.subr.mxu0 0.0
    %3164 = vmatpush1.xpose.msra.mxu0 0.0
    %3165 = vmatprep.subr.mxu0 0.0
    %3166 = vmatpush1.xpose.msra.mxu0 0.0
    %3167 = vmatprep.subr.mxu0 0.0
    %3168 = vmatpush1.xpose.msra.mxu0 0.0
    %3169 = vmatprep.subr.mxu0 0.0
    %3170 = vmatpush1.xpose.msra.mxu0 0.0
    %3171 = vmatprep.subr.mxu0 0.0
    %3172 = vmatpush1.xpose.msra.mxu0 0.0
    %3173 = vmatprep.subr.mxu0 0.0
    %3174 = vmatpush1.xpose.msra.mxu0 0.0
    %3175 = vmatprep.subr.mxu0 0.0
    %3176 = vmatpush1.xpose.msra.mxu0 0.0
    %3177 = vmatprep.subr.mxu0 0.0
    %3178 = vmatpush1.xpose.msra.mxu0 0.0
    %3179 = vmatprep.subr.mxu0 0.0
    %3180 = vmatpush1.xpose.msra.mxu0 0.0
    %3181 = vmatprep.subr.mxu0 0.0
    %3182 = vmatpush1.xpose.msra.mxu0 0.0
    %3183 = vmatprep.subr.mxu0 0.0
    %3184 = vmatpush1.xpose.msra.mxu0 0.0
    %3185 = vmatprep.subr.mxu0 0.0
    %3186 = vmatpush1.xpose.msra.mxu0 0.0
    %3187 = vmatprep.subr.mxu0 0.0
    %3188 = vmatpush1.xpose.msra.mxu0 0.0
    %3189 = vmatprep.subr.mxu0 0.0
    %3190 = vmatpush1.xpose.msra.mxu0 0.0
    %3191 = vmatprep.subr.mxu0 0.0
    %3192 = vmatpush1.xpose.msra.mxu0 0.0
    %3193 = vmatprep.subr.mxu0 0.0
    %3194 = vmatpush1.xpose.msra.mxu0 %v3161
    %3195 = vmatprep.subr.mxu0 0.0
    %3196 = vmatpush2.xpose.msra.mxu0 0.0
    %3197 = vmatprep.subr.mxu0 0.0
    %3198 = vmatpush2.xpose.msra.mxu0 0.0
    %3199 = vmatprep.subr.mxu0 0.0
    %3200 = vmatpush2.xpose.msra.mxu0 0.0
    %3201 = vmatprep.subr.mxu0 0.0
    %3202 = vmatpush2.xpose.msra.mxu0 0.0
    %3203 = vmatprep.subr.mxu0 0.0
    %3204 = vmatpush2.xpose.msra.mxu0 0.0
    %3205 = vmatprep.subr.mxu0 0.0
    %3206 = vmatpush2.xpose.msra.mxu0 0.0
    %3207 = vmatprep.subr.mxu0 0.0
    %3208 = vmatpush2.xpose.msra.mxu0 0.0
    %3209 = vmatprep.subr.mxu0 0.0
    %3210 = vmatpush2.xpose.msra.mxu0 0.0
    %3211 = vmatprep.subr.mxu0 0.0
    %3212 = vmatpush2.xpose.msra.mxu0 0.0
    %3213 = vmatprep.subr.mxu0 0.0
    %3214 = vmatpush2.xpose.msra.mxu0 0.0
    %3215 = vmatprep.subr.mxu0 0.0
    %3216 = vmatpush2.xpose.msra.mxu0 0.0
    %3217 = vmatprep.subr.mxu0 0.0
    %3218 = vmatpush2.xpose.msra.mxu0 0.0
    %3219 = vmatprep.subr.mxu0 0.0
    %3220 = vmatpush2.xpose.msra.mxu0 0.0
    %3221 = vmatprep.subr.mxu0 0.0
    %3222 = vmatpush2.xpose.msra.mxu0 0.0
    %3223 = vmatprep.subr.mxu0 0.0
    %3224 = vmatpush2.xpose.msra.mxu0 0.0
    %3225 = vmatprep.subr.mxu0 0.0
    %3226 = vmatpush2.xpose.msra.mxu0 0.0
    %3227 = vmatprep.mubr.f32.mxu0 0.0
    %3228 = vmatmul.mubr.f32.gmra.mxu0 %v3159
    %v3229 = vpop.f32.mrf.mxu0
    %v3230 = vadd.f32 %v158, %v3229
    %v3231 = vpop.f32.mrf.mxu0
    %3232 = vdwg.mxu0
    %v3233 = vsel %vm288, %v3152, -inf
    %3234 = vmax.xlane.f32.xlu0 %v3233
    %v3235 = vpop.xlane.xlu0 %3234
    %v3236 = vsel %vm288, %v3230, -inf
    %3237 = vmax.xlane.f32.xlu0 %v3236
    %v3238 = vpop.xlane.xlu0 %3237
    %v3239 = vsub.f32 %v3152, %v3235
    %v3240 = vsub.f32 %v3230, %v3238
    %v3241 = vmul.f32 %v3239, 1.442695
    %v3242 = vpow.pop %v3241
    %v3243 = vmul.f32 %v3240, 1.442695
    %v3244 = vpow.pop %v3243
    %v3245 = vsel %vm288, %v3242, 0.0
    %3246 = vadd.xlane.f32.xlu0 %v3245
    %v3247 = vpop.xlane.xlu0 %3246
    %v3248 = vsel %vm288, %v3244, 0.0
    %3249 = vadd.xlane.f32.xlu0 %v3248
    %v3250 = vpop.xlane.xlu0 %3249
    %v3251 = vrcp.pop %v3247
    %v3252 = vmul.f32 %v3242, %v3251
    %v3253 = vrcp.pop %v3250
    %v3254 = vmul.f32 %v3244, %v3253
    %3255 = vrot.lane.b32.xlu0 %v2081, 40
    %v3256 = vpop.permute.xlu0 %3255
    %v3259 = vsel %vm288, %v3252, 0
    %3261 = vmatprep.subr.mxu0 0.0
    %3262 = vmatpush1.msra.mxu0 0.0
    %3263 = vmatprep.subr.mxu0 0.0
    %3264 = vmatpush1.msra.mxu0 0.0
    %3265 = vmatprep.subr.mxu0 0.0
    %3266 = vmatpush1.msra.mxu0 0.0
    %3267 = vmatprep.subr.mxu0 0.0
    %3268 = vmatpush1.msra.mxu0 0.0
    %3269 = vmatprep.subr.mxu0 0.0
    %3270 = vmatpush1.msra.mxu0 0.0
    %3271 = vmatprep.subr.mxu0 0.0
    %3272 = vmatpush1.msra.mxu0 0.0
    %3273 = vmatprep.subr.mxu0 0.0
    %3274 = vmatpush1.msra.mxu0 0.0
    %3275 = vmatprep.subr.mxu0 0.0
    %3276 = vmatpush1.msra.mxu0 0.0
    %3277 = vmatprep.subr.mxu0 0.0
    %3278 = vmatpush1.msra.mxu0 0.0
    %3279 = vmatprep.subr.mxu0 0.0
    %3280 = vmatpush1.msra.mxu0 0.0
    %3281 = vmatprep.subr.mxu0 0.0
    %3282 = vmatpush1.msra.mxu0 0.0
    %3283 = vmatprep.subr.mxu0 0.0
    %3284 = vmatpush1.msra.mxu0 0.0
    %3285 = vmatprep.subr.mxu0 0.0
    %3286 = vmatpush1.msra.mxu0 0.0
    %3287 = vmatprep.subr.mxu0 0.0
    %3288 = vmatpush1.msra.mxu0 0.0
    %3289 = vmatprep.subr.mxu0 0.0
    %3290 = vmatpush1.msra.mxu0 0.0
    %3291 = vmatprep.subr.mxu0 0.0
    %3292 = vmatpush1.msra.mxu0 %v3256
    %3293 = vmatprep.subr.mxu0 0.0
    %3294 = vmatpush2.msra.mxu0 0.0
    %3295 = vmatprep.subr.mxu0 0.0
    %3296 = vmatpush2.msra.mxu0 0.0
    %3297 = vmatprep.subr.mxu0 0.0
    %3298 = vmatpush2.msra.mxu0 0.0
    %3299 = vmatprep.subr.mxu0 0.0
    %3300 = vmatpush2.msra.mxu0 0.0
    %3301 = vmatprep.subr.mxu0 0.0
    %3302 = vmatpush2.msra.mxu0 0.0
    %3303 = vmatprep.subr.mxu0 0.0
    %3304 = vmatpush2.msra.mxu0 0.0
    %3305 = vmatprep.subr.mxu0 0.0
    %3306 = vmatpush2.msra.mxu0 0.0
    %3307 = vmatprep.subr.mxu0 0.0
    %3308 = vmatpush2.msra.mxu0 0.0
    %3309 = vmatprep.subr.mxu0 0.0
    %3310 = vmatpush2.msra.mxu0 0.0
    %3311 = vmatprep.subr.mxu0 0.0
    %3312 = vmatpush2.msra.mxu0 0.0
    %3313 = vmatprep.subr.mxu0 0.0
    %3314 = vmatpush2.msra.mxu0 0.0
    %3315 = vmatprep.subr.mxu0 0.0
    %3316 = vmatpush2.msra.mxu0 0.0
    %3317 = vmatprep.subr.mxu0 0.0
    %3318 = vmatpush2.msra.mxu0 0.0
    %3319 = vmatprep.subr.mxu0 0.0
    %3320 = vmatpush2.msra.mxu0 0.0
    %3321 = vmatprep.subr.mxu0 0.0
    %3322 = vmatpush2.msra.mxu0 0.0
    %3323 = vmatprep.subr.mxu0 0.0
    %3324 = vmatpush2.msra.mxu0 0.0
    %3325 = vmatprep.mubr.f32.mxu0 0.0
    %3326 = vmatmul.mubr.f32.gmra.mxu0 %v3259
    %v3327 = vpop.f32.mrf.mxu0
    %v3328 = vadd.f32 0.0, %v3327
    %v3329 = vpop.f32.mrf.mxu0
    %3330 = vdwg.mxu0
    %3331 = vrot.lane.b32.xlu0 %v2086, 40
    %v3332 = vpop.permute.xlu0 %3331
    %v3335 = vsel %vm288, %v3254, 0
    %3337 = vmatprep.subr.mxu0 0.0
    %3338 = vmatpush1.msra.mxu0 0.0
    %3339 = vmatprep.subr.mxu0 0.0
    %3340 = vmatpush1.msra.mxu0 0.0
    %3341 = vmatprep.subr.mxu0 0.0
    %3342 = vmatpush1.msra.mxu0 0.0
    %3343 = vmatprep.subr.mxu0 0.0
    %3344 = vmatpush1.msra.mxu0 0.0
    %3345 = vmatprep.subr.mxu0 0.0
    %3346 = vmatpush1.msra.mxu0 0.0
    %3347 = vmatprep.subr.mxu0 0.0
    %3348 = vmatpush1.msra.mxu0 0.0
    %3349 = vmatprep.subr.mxu0 0.0
    %3350 = vmatpush1.msra.mxu0 0.0
    %3351 = vmatprep.subr.mxu0 0.0
    %3352 = vmatpush1.msra.mxu0 0.0
    %3353 = vmatprep.subr.mxu0 0.0
    %3354 = vmatpush1.msra.mxu0 0.0
    %3355 = vmatprep.subr.mxu0 0.0
    %3356 = vmatpush1.msra.mxu0 0.0
    %3357 = vmatprep.subr.mxu0 0.0
    %3358 = vmatpush1.msra.mxu0 0.0
    %3359 = vmatprep.subr.mxu0 0.0
    %3360 = vmatpush1.msra.mxu0 0.0
    %3361 = vmatprep.subr.mxu0 0.0
    %3362 = vmatpush1.msra.mxu0 0.0
    %3363 = vmatprep.subr.mxu0 0.0
    %3364 = vmatpush1.msra.mxu0 0.0
    %3365 = vmatprep.subr.mxu0 0.0
    %3366 = vmatpush1.msra.mxu0 0.0
    %3367 = vmatprep.subr.mxu0 0.0
    %3368 = vmatpush1.msra.mxu0 %v3332
    %3369 = vmatprep.subr.mxu0 0.0
    %3370 = vmatpush2.msra.mxu0 0.0
    %3371 = vmatprep.subr.mxu0 0.0
    %3372 = vmatpush2.msra.mxu0 0.0
    %3373 = vmatprep.subr.mxu0 0.0
    %3374 = vmatpush2.msra.mxu0 0.0
    %3375 = vmatprep.subr.mxu0 0.0
    %3376 = vmatpush2.msra.mxu0 0.0
    %3377 = vmatprep.subr.mxu0 0.0
    %3378 = vmatpush2.msra.mxu0 0.0
    %3379 = vmatprep.subr.mxu0 0.0
    %3380 = vmatpush2.msra.mxu0 0.0
    %3381 = vmatprep.subr.mxu0 0.0
    %3382 = vmatpush2.msra.mxu0 0.0
    %3383 = vmatprep.subr.mxu0 0.0
    %3384 = vmatpush2.msra.mxu0 0.0
    %3385 = vmatprep.subr.mxu0 0.0
    %3386 = vmatpush2.msra.mxu0 0.0
    %3387 = vmatprep.subr.mxu0 0.0
    %3388 = vmatpush2.msra.mxu0 0.0
    %3389 = vmatprep.subr.mxu0 0.0
    %3390 = vmatpush2.msra.mxu0 0.0
    %3391 = vmatprep.subr.mxu0 0.0
    %3392 = vmatpush2.msra.mxu0 0.0
    %3393 = vmatprep.subr.mxu0 0.0
    %3394 = vmatpush2.msra.mxu0 0.0
    %3395 = vmatprep.subr.mxu0 0.0
    %3396 = vmatpush2.msra.mxu0 0.0
    %3397 = vmatprep.subr.mxu0 0.0
    %3398 = vmatpush2.msra.mxu0 0.0
    %3399 = vmatprep.subr.mxu0 0.0
    %3400 = vmatpush2.msra.mxu0 0.0
    %3401 = vmatprep.mubr.f32.mxu0 0.0
    %3402 = vmatmul.mubr.f32.gmra.mxu0 %v3335
    %v3403 = vpop.f32.mrf.mxu0
    %v3404 = vadd.f32 0.0, %v3403
    %v3405 = vpop.f32.mrf.mxu0
    %3406 = vdwg.mxu0
    %3409 = vrot.lane.b32.xlu0 %v2668, 8
    %v3410 = vpop.permute.xlu0 %3409
    %3411 = vrot.lane.b32.xlu0 %v2744, 8
    %v3412 = vpop.permute.xlu0 %3411
    %3417 = vrot.lane.b32.xlu0 %v2998, 16
    %v3418 = vpop.permute.xlu0 %3417
    %3419 = vrot.lane.b32.xlu0 %v3074, 16
    %v3420 = vpop.permute.xlu0 %3419
    %3425 = vrot.lane.b32.xlu0 %v3328, 24
    %v3426 = vpop.permute.xlu0 %3425
    %3427 = vrot.lane.b32.xlu0 %v3404, 24
    %v3428 = vpop.permute.xlu0 %3427
    %v3431 = vsel %vm288, %v2338, %v3410
    %v3432 = vsel %vm288, %v2414, %v3412
    %v3433 = vsel %vm1630, %v3431, %v3418
    %v3434 = vsel %vm1630, %v3432, %v3420
    %v3435 = vsel %vm1633, %v3433, %v3426
    %v3436 = vsel %vm1633, %v3434, %v3428
    %s3437 = scalar_lea.vmem %s4, 32
    %v3438 = vld [vmem:[%s3437] sm:$0xff]
    %v3439 = vld [vmem:[%s3437 + $0x8] sm:$0xff]
    %v3440 = vld [vmem:[%s3437 + $0x10] sm:$0xff]
    %v3441 = vld [vmem:[%s3437 + $0x18] sm:$0xff]
    %v3442 = vlaneseq
    %v3443 = vshrl.u32 %v3442, 7
    %v3444 = vsub.s32 2, %v3443
    %v3445 = vrot.slane %v1964, %v3444
    %v3447 = vsel %vm160, %v3435, 0
    %v3450 = vsel %vm160, %v3436, 0
    %3452 = vmatprep.subr.mxu0 0.0
    %3453 = vmatpush1.msra.mxu0 0.0
    %3454 = vmatprep.subr.mxu0 0.0
    %3455 = vmatpush1.msra.mxu0 0.0
    %3456 = vmatprep.subr.mxu0 0.0
    %3457 = vmatpush1.msra.mxu0 0.0
    %3458 = vmatprep.subr.mxu0 0.0
    %3459 = vmatpush1.msra.mxu0 0.0
    %3460 = vmatprep.subr.mxu0 0.0
    %3461 = vmatpush1.msra.mxu0 0.0
    %3462 = vmatprep.subr.mxu0 0.0
    %3463 = vmatpush1.msra.mxu0 0.0
    %3464 = vmatprep.subr.mxu0 0.0
    %3465 = vmatpush1.msra.mxu0 0.0
    %3466 = vmatprep.subr.mxu0 0.0
    %3467 = vmatpush1.msra.mxu0 0.0
    %3468 = vmatprep.subr.mxu0 0.0
    %3469 = vmatpush1.msra.mxu0 0.0
    %3470 = vmatprep.subr.mxu0 0.0
    %3471 = vmatpush1.msra.mxu0 0.0
    %3472 = vmatprep.subr.mxu0 0.0
    %3473 = vmatpush1.msra.mxu0 0.0
    %3474 = vmatprep.subr.mxu0 0.0
    %3475 = vmatpush1.msra.mxu0 0.0
    %3476 = vmatprep.subr.mxu0 0.0
    %3477 = vmatpush1.msra.mxu0 %v3441
    %3478 = vmatprep.subr.mxu0 0.0
    %3479 = vmatpush1.msra.mxu0 %v3440
    %3480 = vmatprep.subr.mxu0 0.0
    %3481 = vmatpush1.msra.mxu0 %v3439
    %3482 = vmatprep.subr.mxu0 0.0
    %3483 = vmatpush1.msra.mxu0 %v3438
    %3484 = vmatprep.subr.mxu0 0.0
    %3485 = vmatpush2.msra.mxu0 0.0
    %3486 = vmatprep.subr.mxu0 0.0
    %3487 = vmatpush2.msra.mxu0 0.0
    %3488 = vmatprep.subr.mxu0 0.0
    %3489 = vmatpush2.msra.mxu0 0.0
    %3490 = vmatprep.subr.mxu0 0.0
    %3491 = vmatpush2.msra.mxu0 0.0
    %3492 = vmatprep.subr.mxu0 0.0
    %3493 = vmatpush2.msra.mxu0 0.0
    %3494 = vmatprep.subr.mxu0 0.0
    %3495 = vmatpush2.msra.mxu0 0.0
    %3496 = vmatprep.subr.mxu0 0.0
    %3497 = vmatpush2.msra.mxu0 0.0
    %3498 = vmatprep.subr.mxu0 0.0
    %3499 = vmatpush2.msra.mxu0 0.0
    %3500 = vmatprep.subr.mxu0 0.0
    %3501 = vmatpush2.msra.mxu0 0.0
    %3502 = vmatprep.subr.mxu0 0.0
    %3503 = vmatpush2.msra.mxu0 0.0
    %3504 = vmatprep.subr.mxu0 0.0
    %3505 = vmatpush2.msra.mxu0 0.0
    %3506 = vmatprep.subr.mxu0 0.0
    %3507 = vmatpush2.msra.mxu0 0.0
    %3508 = vmatprep.subr.mxu0 0.0
    %3509 = vmatpush2.msra.mxu0 0.0
    %3510 = vmatprep.subr.mxu0 0.0
    %3511 = vmatpush2.msra.mxu0 0.0
    %3512 = vmatprep.subr.mxu0 0.0
    %3513 = vmatpush2.msra.mxu0 0.0
    %3514 = vmatprep.subr.mxu0 0.0
    %3515 = vmatpush2.msra.mxu0 0.0
    %3516 = vmatprep.mubr.f32.mxu0 0.0
    %3517 = vmatmul.mubr.f32.gmra.mxu0 %v3447
    %v3518 = vpop.f32.mrf.mxu0
    %v3519 = vadd.f32 %v3445, %v3518
    %v3520 = vpop.f32.mrf.mxu0
    %3521 = vmatprep.mubr.f32.mxu0 0.0
    %3522 = vmatmul.mubr.f32.gmra.mxu0 %v3450
    %v3523 = vpop.f32.mrf.mxu0
    %v3524 = vadd.f32 %v3445, %v3523
    %v3525 = vpop.f32.mrf.mxu0
    %3526 = vdwg.mxu0
    %v3527 = vadd.f32 %v1961, %v3519
    %v3528 = vadd.f32 %v1962, %v3524
    %v3529 = vsel %vm160, %v3527, 0.0
    %3530 = vadd.xlane.f32.xlu0 %v3529
    %v3531 = vpop.xlane.xlu0 %3530
    %v3532 = vsel %vm160, %v3528, 0.0
    %3533 = vadd.xlane.f32.xlu0 %v3532
    %v3534 = vpop.xlane.xlu0 %3533
    %v3535 = vmul.f32 %v3531, %v167
    %v3536 = vmul.f32 %v3534, %v167
    %v3537 = vsub.f32 %v3527, %v3535
    %v3538 = vsub.f32 %v3528, %v3536
    %v3539 = vmul.f32 %v3537, %v3537
    %v3540 = vmul.f32 %v3538, %v3538
    %v3541 = vsel %vm160, %v3539, 0.0
    %3542 = vadd.xlane.f32.xlu0 %v3541
    %v3543 = vpop.xlane.xlu0 %3542
    %v3544 = vsel %vm160, %v3540, 0.0
    %3545 = vadd.xlane.f32.xlu0 %v3544
    %v3546 = vpop.xlane.xlu0 %3545
    %v3547 = vmul.f32 %v3543, %v167
    %v3548 = vmul.f32 %v3546, %v167
    %v3549 = vadd.f32 %v3547, 1e-05
    %v3550 = vadd.f32 %v3548, 1e-05
    %v3551 = vrsqrt.pop %v3549
    %v3552 = vrsqrt.pop %v3550
    %v3553 = vmul.f32 %v3537, %v3551
    %v3554 = vmul.f32 %v3538, %v3552
    %v3555 = vlaneseq
    %v3556 = vshrl.u32 %v3555, 7
    %v3557 = vsub.s32 3, %v3556
    %v3558 = vrot.slane %v1964, %v3557
    %v3559 = vmul.f32 %v3553, %v3558
    %v3560 = vmul.f32 %v3554, %v3558
    %v3561 = vlaneseq
    %v3562 = vshrl.u32 %v3561, 7
    %v3563 = vsub.s32 4, %v3562
    %v3564 = vrot.slane %v1964, %v3563
    %v3565 = vadd.f32 %v3559, %v3564
    %v3566 = vadd.f32 %v3560, %v3564
    %s3567 = scalar_lea.vmem %s5, 32
    %v3568 = vld [vmem:[%s3567] sm:$0xff]
    %v3569 = vld [vmem:[%s3567 + $0x8] sm:$0xff]
    %v3570 = vld [vmem:[%s3567 + $0x10] sm:$0xff]
    %v3571 = vld [vmem:[%s3567 + $0x18] sm:$0xff]
    %s3572 = scalar_lea.vmem %s8, 1
    %v3573 = vld [vmem:[%s3572] sm:$0x1]
    %v3575 = vlaneseq
    %v3576 = vshrl.u32 %v3575, 7
    %v3577 = vsub.s32 0, %v3576
    %v3578 = vrot.slane %v3573, %v3577
    %v3581 = vsel %vm160, %v3565, 0
    %v3584 = vsel %vm160, %v3566, 0
    %3586 = vmatprep.subr.mxu0 0.0
    %3587 = vmatpush1.msra.mxu0 0.0
    %3588 = vmatprep.subr.mxu0 0.0
    %3589 = vmatpush1.msra.mxu0 0.0
    %3590 = vmatprep.subr.mxu0 0.0
    %3591 = vmatpush1.msra.mxu0 0.0
    %3592 = vmatprep.subr.mxu0 0.0
    %3593 = vmatpush1.msra.mxu0 0.0
    %3594 = vmatprep.subr.mxu0 0.0
    %3595 = vmatpush1.msra.mxu0 0.0
    %3596 = vmatprep.subr.mxu0 0.0
    %3597 = vmatpush1.msra.mxu0 0.0
    %3598 = vmatprep.subr.mxu0 0.0
    %3599 = vmatpush1.msra.mxu0 0.0
    %3600 = vmatprep.subr.mxu0 0.0
    %3601 = vmatpush1.msra.mxu0 0.0
    %3602 = vmatprep.subr.mxu0 0.0
    %3603 = vmatpush1.msra.mxu0 0.0
    %3604 = vmatprep.subr.mxu0 0.0
    %3605 = vmatpush1.msra.mxu0 0.0
    %3606 = vmatprep.subr.mxu0 0.0
    %3607 = vmatpush1.msra.mxu0 0.0
    %3608 = vmatprep.subr.mxu0 0.0
    %3609 = vmatpush1.msra.mxu0 0.0
    %3610 = vmatprep.subr.mxu0 0.0
    %3611 = vmatpush1.msra.mxu0 %v3571
    %3612 = vmatprep.subr.mxu0 0.0
    %3613 = vmatpush1.msra.mxu0 %v3570
    %3614 = vmatprep.subr.mxu0 0.0
    %3615 = vmatpush1.msra.mxu0 %v3569
    %3616 = vmatprep.subr.mxu0 0.0
    %3617 = vmatpush1.msra.mxu0 %v3568
    %3618 = vmatprep.subr.mxu0 0.0
    %3619 = vmatpush2.msra.mxu0 0.0
    %3620 = vmatprep.subr.mxu0 0.0
    %3621 = vmatpush2.msra.mxu0 0.0
    %3622 = vmatprep.subr.mxu0 0.0
    %3623 = vmatpush2.msra.mxu0 0.0
    %3624 = vmatprep.subr.mxu0 0.0
    %3625 = vmatpush2.msra.mxu0 0.0
    %3626 = vmatprep.subr.mxu0 0.0
    %3627 = vmatpush2.msra.mxu0 0.0
    %3628 = vmatprep.subr.mxu0 0.0
    %3629 = vmatpush2.msra.mxu0 0.0
    %3630 = vmatprep.subr.mxu0 0.0
    %3631 = vmatpush2.msra.mxu0 0.0
    %3632 = vmatprep.subr.mxu0 0.0
    %3633 = vmatpush2.msra.mxu0 0.0
    %3634 = vmatprep.subr.mxu0 0.0
    %3635 = vmatpush2.msra.mxu0 0.0
    %3636 = vmatprep.subr.mxu0 0.0
    %3637 = vmatpush2.msra.mxu0 0.0
    %3638 = vmatprep.subr.mxu0 0.0
    %3639 = vmatpush2.msra.mxu0 0.0
    %3640 = vmatprep.subr.mxu0 0.0
    %3641 = vmatpush2.msra.mxu0 0.0
    %3642 = vmatprep.subr.mxu0 0.0
    %3643 = vmatpush2.msra.mxu0 0.0
    %3644 = vmatprep.subr.mxu0 0.0
    %3645 = vmatpush2.msra.mxu0 0.0
    %3646 = vmatprep.subr.mxu0 0.0
    %3647 = vmatpush2.msra.mxu0 0.0
    %3648 = vmatprep.subr.mxu0 0.0
    %3649 = vmatpush2.msra.mxu0 0.0
    %3650 = vmatprep.mubr.f32.mxu0 0.0
    %3651 = vmatmul.mubr.f32.gmra.mxu0 %v3581
    %v3652 = vpop.f32.mrf.mxu0
    %v3653 = vadd.f32 %v3578, %v3652
    %v3654 = vpop.f32.mrf.mxu0
    %3655 = vmatprep.mubr.f32.mxu0 0.0
    %3656 = vmatmul.mubr.f32.gmra.mxu0 %v3584
    %v3657 = vpop.f32.mrf.mxu0
    %v3658 = vadd.f32 %v3578, %v3657
    %v3659 = vpop.f32.mrf.mxu0
    %3660 = vdwg.mxu0
    %v3661 = vmul.f32 %v3653, 0.5
    %v3662 = vmul.f32 %v3658, 0.5
    %v3663 = vmul.f32 %v3653, 0.70710677
    %v3664 = vmul.f32 %v3658, 0.70710677
    %v3665 = verf.f32.pop %v3663
    %v3666 = verf.f32.pop %v3664
    %v3667 = vadd.f32 %v3665, 1.0
    %v3668 = vadd.f32 %v3666, 1.0
    %v3669 = vmul.f32 %v3661, %v3667
    %v3670 = vmul.f32 %v3662, %v3668
    %s3671 = scalar_lea.vmem %s6, 64
    %v3672 = vld [vmem:[%s3671] sm:$0xff]
    %v3673 = vld [vmem:[%s3671 + $0x8] sm:$0xff]
    %v3674 = vld [vmem:[%s3671 + $0x10] sm:$0xff]
    %v3675 = vld [vmem:[%s3671 + $0x18] sm:$0xff]
    %v3676 = vld [vmem:[%s3671 + $0x20] sm:$0xff]
    %v3677 = vld [vmem:[%s3671 + $0x28] sm:$0xff]
    %v3678 = vld [vmem:[%s3671 + $0x30] sm:$0xff]
    %v3679 = vld [vmem:[%s3671 + $0x38] sm:$0xff]
    %v3680 = vlaneseq
    %v3681 = vshrl.u32 %v3680, 7
    %v3682 = vsub.s32 5, %v3681
    %v3683 = vrot.slane %v1964, %v3682
    %v3685 = vsel %vm1879, %v3669, 0
    %v3688 = vsel %vm1879, %v3670, 0
    %3690 = vmatprep.subr.mxu0 0.0
    %3691 = vmatpush1.msra.mxu0 0.0
    %3692 = vmatprep.subr.mxu0 0.0
    %3693 = vmatpush1.msra.mxu0 0.0
    %3694 = vmatprep.subr.mxu0 0.0
    %3695 = vmatpush1.msra.mxu0 0.0
    %3696 = vmatprep.subr.mxu0 0.0
    %3697 = vmatpush1.msra.mxu0 0.0
    %3698 = vmatprep.subr.mxu0 0.0
    %3699 = vmatpush1.msra.mxu0 0.0
    %3700 = vmatprep.subr.mxu0 0.0
    %3701 = vmatpush1.msra.mxu0 0.0
    %3702 = vmatprep.subr.mxu0 0.0
    %3703 = vmatpush1.msra.mxu0 0.0
    %3704 = vmatprep.subr.mxu0 0.0
    %3705 = vmatpush1.msra.mxu0 0.0
    %3706 = vmatprep.subr.mxu0 0.0
    %3707 = vmatpush1.msra.mxu0 %v3679
    %3708 = vmatprep.subr.mxu0 0.0
    %3709 = vmatpush1.msra.mxu0 %v3678
    %3710 = vmatprep.subr.mxu0 0.0
    %3711 = vmatpush1.msra.mxu0 %v3677
    %3712 = vmatprep.subr.mxu0 0.0
    %3713 = vmatpush1.msra.mxu0 %v3676
    %3714 = vmatprep.subr.mxu0 0.0
    %3715 = vmatpush1.msra.mxu0 %v3675
    %3716 = vmatprep.subr.mxu0 0.0
    %3717 = vmatpush1.msra.mxu0 %v3674
    %3718 = vmatprep.subr.mxu0 0.0
    %3719 = vmatpush1.msra.mxu0 %v3673
    %3720 = vmatprep.subr.mxu0 0.0
    %3721 = vmatpush1.msra.mxu0 %v3672
    %3722 = vmatprep.subr.mxu0 0.0
    %3723 = vmatpush2.msra.mxu0 0.0
    %3724 = vmatprep.subr.mxu0 0.0
    %3725 = vmatpush2.msra.mxu0 0.0
    %3726 = vmatprep.subr.mxu0 0.0
    %3727 = vmatpush2.msra.mxu0 0.0
    %3728 = vmatprep.subr.mxu0 0.0
    %3729 = vmatpush2.msra.mxu0 0.0
    %3730 = vmatprep.subr.mxu0 0.0
    %3731 = vmatpush2.msra.mxu0 0.0
    %3732 = vmatprep.subr.mxu0 0.0
    %3733 = vmatpush2.msra.mxu0 0.0
    %3734 = vmatprep.subr.mxu0 0.0
    %3735 = vmatpush2.msra.mxu0 0.0
    %3736 = vmatprep.subr.mxu0 0.0
    %3737 = vmatpush2.msra.mxu0 0.0
    %3738 = vmatprep.subr.mxu0 0.0
    %3739 = vmatpush2.msra.mxu0 0.0
    %3740 = vmatprep.subr.mxu0 0.0
    %3741 = vmatpush2.msra.mxu0 0.0
    %3742 = vmatprep.subr.mxu0 0.0
    %3743 = vmatpush2.msra.mxu0 0.0
    %3744 = vmatprep.subr.mxu0 0.0
    %3745 = vmatpush2.msra.mxu0 0.0
    %3746 = vmatprep.subr.mxu0 0.0
    %3747 = vmatpush2.msra.mxu0 0.0
    %3748 = vmatprep.subr.mxu0 0.0
    %3749 = vmatpush2.msra.mxu0 0.0
    %3750 = vmatprep.subr.mxu0 0.0
    %3751 = vmatpush2.msra.mxu0 0.0
    %3752 = vmatprep.subr.mxu0 0.0
    %3753 = vmatpush2.msra.mxu0 0.0
    %3754 = vmatprep.mubr.f32.mxu0 0.0
    %3755 = vmatmul.mubr.f32.gmra.mxu0 %v3685
    %v3756 = vpop.f32.mrf.mxu0
    %v3757 = vadd.f32 %v3683, %v3756
    %v3758 = vpop.f32.mrf.mxu0
    %3759 = vmatprep.mubr.f32.mxu0 0.0
    %3760 = vmatmul.mubr.f32.gmra.mxu0 %v3688
    %v3761 = vpop.f32.mrf.mxu0
    %v3762 = vadd.f32 %v3683, %v3761
    %v3763 = vpop.f32.mrf.mxu0
    %3764 = vdwg.mxu0
    %v3765 = vadd.f32 %v3527, %v3757
    %v3766 = vadd.f32 %v3528, %v3762
    %v3767 = vlaneseq
    %v3768 = vshrl.u32 %v3767, 7
    %v3769 = vmul.u32 %v3768, 8
    %vm3770 = vcmp.eq.s32.totalorder %v156, %v3769
    %v3771 = vsel %vm3770, 1, 0
    %v3772 = vcvt.s32.f32 %v3771
    %v3774 = vsel %vm1630, %v3772, 0
    %3776 = vmatprep.subr.mxu0 0.0
    %3777 = vmatpush1.msra.mxu0 0.0
    %3778 = vmatprep.subr.mxu0 0.0
    %3779 = vmatpush1.msra.mxu0 0.0
    %3780 = vmatprep.subr.mxu0 0.0
    %3781 = vmatpush1.msra.mxu0 0.0
    %3782 = vmatprep.subr.mxu0 0.0
    %3783 = vmatpush1.msra.mxu0 0.0
    %3784 = vmatprep.subr.mxu0 0.0
    %3785 = vmatpush1.msra.mxu0 0.0
    %3786 = vmatprep.subr.mxu0 0.0
    %3787 = vmatpush1.msra.mxu0 0.0
    %3788 = vmatprep.subr.mxu0 0.0
    %3789 = vmatpush1.msra.mxu0 0.0
    %3790 = vmatprep.subr.mxu0 0.0
    %3791 = vmatpush1.msra.mxu0 0.0
    %3792 = vmatprep.subr.mxu0 0.0
    %3793 = vmatpush1.msra.mxu0 0.0
    %3794 = vmatprep.subr.mxu0 0.0
    %3795 = vmatpush1.msra.mxu0 0.0
    %3796 = vmatprep.subr.mxu0 0.0
    %3797 = vmatpush1.msra.mxu0 0.0
    %3798 = vmatprep.subr.mxu0 0.0
    %3799 = vmatpush1.msra.mxu0 0.0
    %3800 = vmatprep.subr.mxu0 0.0
    %3801 = vmatpush1.msra.mxu0 0.0
    %3802 = vmatprep.subr.mxu0 0.0
    %3803 = vmatpush1.msra.mxu0 0.0
    %3804 = vmatprep.subr.mxu0 0.0
    %3805 = vmatpush1.msra.mxu0 %v3766
    %3806 = vmatprep.subr.mxu0 0.0
    %3807 = vmatpush1.msra.mxu0 %v3765
    %3808 = vmatprep.subr.mxu0 0.0
    %3809 = vmatpush2.msra.mxu0 0.0
    %3810 = vmatprep.subr.mxu0 0.0
    %3811 = vmatpush2.msra.mxu0 0.0
    %3812 = vmatprep.subr.mxu0 0.0
    %3813 = vmatpush2.msra.mxu0 0.0
    %3814 = vmatprep.subr.mxu0 0.0
    %3815 = vmatpush2.msra.mxu0 0.0
    %3816 = vmatprep.subr.mxu0 0.0
    %3817 = vmatpush2.msra.mxu0 0.0
    %3818 = vmatprep.subr.mxu0 0.0
    %3819 = vmatpush2.msra.mxu0 0.0
    %3820 = vmatprep.subr.mxu0 0.0
    %3821 = vmatpush2.msra.mxu0 0.0
    %3822 = vmatprep.subr.mxu0 0.0
    %3823 = vmatpush2.msra.mxu0 0.0
    %3824 = vmatprep.subr.mxu0 0.0
    %3825 = vmatpush2.msra.mxu0 0.0
    %3826 = vmatprep.subr.mxu0 0.0
    %3827 = vmatpush2.msra.mxu0 0.0
    %3828 = vmatprep.subr.mxu0 0.0
    %3829 = vmatpush2.msra.mxu0 0.0
    %3830 = vmatprep.subr.mxu0 0.0
    %3831 = vmatpush2.msra.mxu0 0.0
    %3832 = vmatprep.subr.mxu0 0.0
    %3833 = vmatpush2.msra.mxu0 0.0
    %3834 = vmatprep.subr.mxu0 0.0
    %3835 = vmatpush2.msra.mxu0 0.0
    %3836 = vmatprep.subr.mxu0 0.0
    %3837 = vmatpush2.msra.mxu0 0.0
    %3838 = vmatprep.subr.mxu0 0.0
    %3839 = vmatpush2.msra.mxu0 0.0
    %3840 = vmatprep.mubr.f32.mxu0 0.0
    %3841 = vmatmul.mubr.f32.gmra.mxu0 %v3774
    %v3842 = vpop.f32.mrf.mxu0
    %v3843 = vadd.f32 0.0, %v3842
    %v3844 = vpop.f32.mrf.mxu0
    %3845 = vdwg.mxu0
    %v3846 = vld [vmem:[%s9] sm:$0x3]
    %vm3847 = vcmask 254976
    %v3848 = vsel %vm3847, %v3843, 0.0
    %3849 = vadd.xlane.f32.xlu0 %v3848
    %v3850 = vpop.xlane.xlu0 %3849
    %v3851 = vmul.f32 %v3850, %v167
    %v3852 = vsub.f32 %v3843, %v3851
    %v3853 = vmul.f32 %v3852, %v3852
    %v3854 = vsel %vm3847, %v3853, 0.0
    %3855 = vadd.xlane.f32.xlu0 %v3854
    %v3856 = vpop.xlane.xlu0 %3855
    %v3857 = vmul.f32 %v3856, %v167
    %v3858 = vadd.f32 %v3857, 1e-05
    %v3859 = vrsqrt.pop %v3858
    %v3860 = vmul.f32 %v3852, %v3859
    %v3861 = vlaneseq
    %v3862 = vshrl.u32 %v3861, 7
    %v3863 = vsub.s32 0, %v3862
    %v3864 = vrot.slane %v3846, %v3863
    %v3865 = vmul.f32 %v3860, %v3864
    %v3866 = vlaneseq
    %v3867 = vshrl.u32 %v3866, 7
    %v3868 = vsub.s32 1, %v3867
    %v3869 = vrot.slane %v3846, %v3868
    %v3870 = vadd.f32 %v3865, %v3869
    %v3871 = vld [vmem:[%s10] sm:$0xff]
    %v3872 = vld [vmem:[%s10 + $0x8] sm:$0xff]
    %v3873 = vld [vmem:[%s10 + $0x10] sm:$0xff]
    %v3874 = vld [vmem:[%s10 + $0x18] sm:$0xff]
    %v3875 = vld [vmem:[%s11] sm:$0x1]
    %v3877 = vlaneseq
    %v3878 = vshrl.u32 %v3877, 7
    %v3879 = vsub.s32 0, %v3878
    %v3880 = vrot.slane %v3875, %v3879
    %v3883 = vsel %vm160, %v3870, 0
    %3885 = vmatprep.subr.mxu0 0.0
    %3886 = vmatpush1.msra.mxu0 0.0
    %3887 = vmatprep.subr.mxu0 0.0
    %3888 = vmatpush1.msra.mxu0 0.0
    %3889 = vmatprep.subr.mxu0 0.0
    %3890 = vmatpush1.msra.mxu0 0.0
    %3891 = vmatprep.subr.mxu0 0.0
    %3892 = vmatpush1.msra.mxu0 0.0
    %3893 = vmatprep.subr.mxu0 0.0
    %3894 = vmatpush1.msra.mxu0 0.0
    %3895 = vmatprep.subr.mxu0 0.0
    %3896 = vmatpush1.msra.mxu0 0.0
    %3897 = vmatprep.subr.mxu0 0.0
    %3898 = vmatpush1.msra.mxu0 0.0
    %3899 = vmatprep.subr.mxu0 0.0
    %3900 = vmatpush1.msra.mxu0 0.0
    %3901 = vmatprep.subr.mxu0 0.0
    %3902 = vmatpush1.msra.mxu0 0.0
    %3903 = vmatprep.subr.mxu0 0.0
    %3904 = vmatpush1.msra.mxu0 0.0
    %3905 = vmatprep.subr.mxu0 0.0
    %3906 = vmatpush1.msra.mxu0 0.0
    %3907 = vmatprep.subr.mxu0 0.0
    %3908 = vmatpush1.msra.mxu0 0.0
    %3909 = vmatprep.subr.mxu0 0.0
    %3910 = vmatpush1.msra.mxu0 %v3874
    %3911 = vmatprep.subr.mxu0 0.0
    %3912 = vmatpush1.msra.mxu0 %v3873
    %3913 = vmatprep.subr.mxu0 0.0
    %3914 = vmatpush1.msra.mxu0 %v3872
    %3915 = vmatprep.subr.mxu0 0.0
    %3916 = vmatpush1.msra.mxu0 %v3871
    %3917 = vmatprep.subr.mxu0 0.0
    %3918 = vmatpush2.msra.mxu0 0.0
    %3919 = vmatprep.subr.mxu0 0.0
    %3920 = vmatpush2.msra.mxu0 0.0
    %3921 = vmatprep.subr.mxu0 0.0
    %3922 = vmatpush2.msra.mxu0 0.0
    %3923 = vmatprep.subr.mxu0 0.0
    %3924 = vmatpush2.msra.mxu0 0.0
    %3925 = vmatprep.subr.mxu0 0.0
    %3926 = vmatpush2.msra.mxu0 0.0
    %3927 = vmatprep.subr.mxu0 0.0
    %3928 = vmatpush2.msra.mxu0 0.0
    %3929 = vmatprep.subr.mxu0 0.0
    %3930 = vmatpush2.msra.mxu0 0.0
    %3931 = vmatprep.subr.mxu0 0.0
    %3932 = vmatpush2.msra.mxu0 0.0
    %3933 = vmatprep.subr.mxu0 0.0
    %3934 = vmatpush2.msra.mxu0 0.0
    %3935 = vmatprep.subr.mxu0 0.0
    %3936 = vmatpush2.msra.mxu0 0.0
    %3937 = vmatprep.subr.mxu0 0.0
    %3938 = vmatpush2.msra.mxu0 0.0
    %3939 = vmatprep.subr.mxu0 0.0
    %3940 = vmatpush2.msra.mxu0 0.0
    %3941 = vmatprep.subr.mxu0 0.0
    %3942 = vmatpush2.msra.mxu0 0.0
    %3943 = vmatprep.subr.mxu0 0.0
    %3944 = vmatpush2.msra.mxu0 0.0
    %3945 = vmatprep.subr.mxu0 0.0
    %3946 = vmatpush2.msra.mxu0 0.0
    %3947 = vmatprep.subr.mxu0 0.0
    %3948 = vmatpush2.msra.mxu0 0.0
    %3949 = vmatprep.mubr.f32.mxu0 0.0
    %3950 = vmatmul.mubr.f32.gmra.mxu0 %v3883
    %v3951 = vpop.f32.mrf.mxu0
    %v3952 = vadd.f32 %v3880, %v3951
    %v3953 = vpop.f32.mrf.mxu0
    %3954 = vdwg.mxu0
    %3955 = vst [vmem:[#allocation2] sm:$0x3] %v3952
    // Predicated region
    $region50: #{vit_forward.1} parent=1 // pred_check
      _
    $region51: #{vit_forward.1} parent=1 // pred_check_branch
      %3957 = sbr.rel (0) target = $region53
    $region52: #{vit_forward.1} parent=1 // pred_region
      %s3959 = ssub.s32 32, 32
      %3960 = vsyncadd [#allocation3], %s3959
      %s3962 = sshll.u32 [#allocation2], 4
      %s3963 = int_to_ptr.vmem [resolvable:$true] %s3962
      %3965 = dma.vmem_to_hbm [thread:$0]  %s3963, 32, %s12, [#allocation3]
    $region53: #{vit_forward.1} parent=1 // pred_fallthru
      _
    // Predicated region
    $region54: #{vit_forward.1} parent=1 // pred_check
      _
    $region55: #{vit_forward.1} parent=1 // pred_check_branch
      %3967 = sbr.rel (0) target = $region57
    $region56: #{vit_forward.1} parent=1 // pred_region
      %3968 = dma.done [#allocation3], 32
    $region57: #{vit_forward.1} parent=1 // pred_fallthru
      _
    %3969 = vsyncpa [#allocation3], 1

</llo_original>
